<compile_context>
chip_gen: v7x
topology: tpu7x:2x2x1
jax: 0.10.0
libtpu: 0.0.40
codegen_flags: <defaults>
</compile_context>

<pallas_src>
import functools

import jax
import jax.numpy as jnp
from jax import lax
from jax.experimental import pallas as pl
from jax.experimental.pallas import tpu as pltpu


def _layer_norm(v, g, b, eps=1e-5):
    # single-pass variance: E[x^2] - mu^2 (both lane reductions can issue
    # back-to-back on the XLU).
    mu = jnp.mean(v, axis=-1, keepdims=True)
    ms = jnp.mean(v * v, axis=-1, keepdims=True)
    var = jnp.maximum(ms - mu * mu, 0.0)
    return (v - mu) * lax.rsqrt(var + eps) * g + b


def basic_block_kernel(x_ref, madd_ref, keep_ref,
                       wqkv_ref, bqkv_ref, wo_ref, bo_ref,
                       w1_ref, b1_ref, w2_ref, b2_ref,
                       g1_ref, be1_ref, g2_ref, be2_ref,
                       o_ref, *, n_heads, n_layers):
    # One batch element per grid step; the full layer stack runs here so the
    # (L, D) activation never leaves VMEM/vregs between layers.
    x = x_ref[0]              # (L, D) f32
    madd = madd_ref[0]        # (1, L) additive key-padding mask (0 / -1e30)
    keep = keep_ref[0]        # (L, 1) 1.0 = keep, 0.0 = padded
    L, D = x.shape
    dh = D // n_heads

    # Hoisted once: broadcast of the key-padding mask to score shape.
    madd_b = jnp.broadcast_to(madd, (L, L))

    for layer in range(n_layers):            # static, fully unrolled
        # ---- self attention (post-norm encoder layer) ----
        # fused Q/K/V projection; bf16 into the MXU, f32 accumulate.
        qkv = jnp.dot(x.astype(jnp.bfloat16), wqkv_ref[layer],
                      preferred_element_type=jnp.float32) + bqkv_ref[layer]
        # 1/sqrt(dh) is already folded into the Q columns of wqkv.
        q = qkv[:, 0:D].astype(jnp.bfloat16)
        k = qkv[:, D:2 * D].astype(jnp.bfloat16)
        v = qkv[:, 2 * D:3 * D].astype(jnp.bfloat16)

        wo_l = wo_ref[layer]                 # (n_heads, dh, D) bf16
        acc = jnp.zeros((L, D), jnp.float32)  # vreg-resident attn-out @ W_o
        for h in range(n_heads):             # static loop, n_heads is small
            qh = q[:, h * dh:(h + 1) * dh]
            kh = k[:, h * dh:(h + 1) * dh]
            vh = v[:, h * dh:(h + 1) * dh]
            # contract on the last dim of both operands -> no kh.T relayout
            # (verify in the Mosaic dump; if an XLU transpose appears, hoist
            #  a single per-layer k relayout instead).
            s = lax.dot_general(qh, kh, (((1,), (1,)), ((), ())),
                                preferred_element_type=jnp.float32)
            s = s + madd_b                   # (L, L)
            s = s - jnp.max(s, axis=-1, keepdims=True)
            p = jnp.exp(s)
            inv = pl.reciprocal(jnp.sum(p, axis=-1, keepdims=True),
                                approx=True)   # EUP slot; ~1e-4 rel. error
            p = (p * inv).astype(jnp.bfloat16)
            oh = jnp.dot(p, vh, preferred_element_type=jnp.float32)  # (L, dh)
            # fold this head straight through its slice of W_o and accumulate
            # (no dh-wide masked VMEM stores, no slab reload).
            acc = acc + jnp.dot(oh.astype(jnp.bfloat16), wo_l[h],
                                preferred_element_type=jnp.float32)

        attn = acc + bo_ref[layer]
        # TODO(synk): dropout layers are identity (deterministic / eval mode).
        x = _layer_norm(x + attn, g1_ref[layer], be1_ref[layer])

        # ---- feed forward (relu) ----
        h1 = jnp.dot(x.astype(jnp.bfloat16), w1_ref[layer],
                     preferred_element_type=jnp.float32) + b1_ref[layer]
        h1 = jnp.maximum(h1, 0.0)
        ff = jnp.dot(h1.astype(jnp.bfloat16), w2_ref[layer],
                     preferred_element_type=jnp.float32) + b2_ref[layer]
        x = _layer_norm(x + ff, g2_ref[layer], be2_ref[layer])

    # in-kernel masked_fill(mask.unsqueeze(-1), 0): one VPU multiply in vregs.
    o_ref[0] = (x * keep).astype(o_ref.dtype)


def basic_block_forward(x, mask, params, n_heads):
    """x: (B, inst, seq, D) f32, mask: (B, inst, seq) bool (True = padded)."""
    B, inst, seq, D = x.shape
    L = inst * seq
    n_layers = params["wqkv"].shape[0]

    xf = x.reshape(B, L, D).astype(jnp.float32)
    mf = mask.reshape(B, L)
    # additive key-padding mask kept in f32 (-1e30 would overflow bf16)
    madd = jnp.where(mf, -1e30, 0.0).astype(jnp.float32).reshape(B, 1, L)
    # keep-mask for the in-kernel masked_fill (1 = keep, 0 = padded)
    keep = jnp.where(mf, 0.0, 1.0).astype(jnp.float32).reshape(B, L, 1)

    def const_spec(arr):
        nd = arr.ndim
        return pl.BlockSpec(arr.shape, lambda b, _nd=nd: (0,) * _nd)

    weight_order = ["wqkv", "bqkv", "wo", "bo", "w1", "b1", "w2", "b2",
                    "g1", "be1", "g2", "be2"]
    weights = [params[k] for k in weight_order]

    in_specs = [
        pl.BlockSpec((1, L, D), lambda b: (b, 0, 0)),   # x
        pl.BlockSpec((1, 1, L), lambda b: (b, 0, 0)),   # additive mask
        pl.BlockSpec((1, L, 1), lambda b: (b, 0, 0)),   # keep mask
    ] + [const_spec(w) for w in weights]

    out = pl.pallas_call(
        functools.partial(basic_block_kernel, n_heads=n_heads,
                          n_layers=n_layers),
        out_shape=jax.ShapeDtypeStruct((B, L, D), jnp.float32),
        grid_spec=pltpu.PrefetchScalarGridSpec(
            num_scalar_prefetch=0,
            grid=(B,),
            in_specs=in_specs,
            out_specs=pl.BlockSpec((1, L, D), lambda b: (b, 0, 0)),
        ),
        # "parallel" shards the batch across the 2 TCs on v7x; on single-TC
        # v5e/v6e this is a 2-step serial loop (per-step overhead ~0.35 us).
        compiler_params=pltpu.CompilerParams(
            dimension_semantics=("parallel",),
            vmem_limit_bytes=32 * 1024 * 1024),
    )(xf, madd, keep, *weights)

    return out.reshape(B, inst, seq, D)


def init_basic_block_params(key, dim, dim_ff, n_layers):
    """Canonical f32 params in "x @ W" layout, stacked along a layer axis."""
    ks = jax.random.split(key, 6)
    s = 0.05
    f32 = jnp.float32
    return {
        "wqkv": jax.random.normal(ks[0], (n_layers, dim, 3 * dim), f32) * s,
        "bqkv": jnp.zeros((n_layers, 1, 3 * dim), f32),
        "wo":   jax.random.normal(ks[1], (n_layers, dim, dim), f32) * s,
        "bo":   jax.random.normal(ks[2], (n_layers, 1, dim), f32) * s,
        "w1":   jax.random.normal(ks[3], (n_layers, dim, dim_ff), f32) * s,
        "b1":   jnp.zeros((n_layers, 1, dim_ff), f32),
        "w2":   jax.random.normal(ks[4], (n_layers, dim_ff, dim), f32) * s,
        "b2":   jax.random.normal(ks[5], (n_layers, 1, dim), f32) * s,
        "g1":   jnp.ones((n_layers, 1, dim), f32),
        "be1":  jnp.zeros((n_layers, 1, dim), f32),
        "g2":   jnp.ones((n_layers, 1, dim), f32),
        "be2":  jnp.zeros((n_layers, 1, dim), f32),
    }


def prepare_basic_block_params(params, n_heads):
    """One-time weight prep (constant folding on weights, not a per-call op):
       * fold 1/sqrt(dh) attention scale into the Q columns of wqkv,
       * reshape wo into per-head (n_layers, n_heads, dh, D) blocks,
       * cast matmul weights to bf16 (MXU-native rate); biases / LN stay f32."""
    p = dict(params)
    n_layers, dim, _ = p["wqkv"].shape
    dh = dim // n_heads
    scale = 1.0 / jnp.sqrt(jnp.float32(dh))
    wqkv = p["wqkv"].at[:, :, 0:dim].multiply(scale)
    p["wqkv"] = wqkv.astype(jnp.bfloat16)
    p["wo"] = p["wo"].reshape(n_layers, n_heads, dh, dim).astype(jnp.bfloat16)
    p["w1"] = p["w1"].astype(jnp.bfloat16)
    p["w2"] = p["w2"].astype(jnp.bfloat16)
    return p


if __name__ == "__main__":
    dim, dim_ff, n_heads, n_layers = 32, 64, 4, 2
    B, inst, seq = 2, 4, 8

    key = jax.random.PRNGKey(0)
    kx, km, kp = jax.random.split(key, 3)

    x = jax.random.normal(kx, (B, inst, seq, dim), jnp.float32)
    mask = jax.random.bernoulli(km, 0.25, (B, inst, seq))
    # guarantee at least one unmasked key per batch element
    mask = mask.at[:, 0, 0].set(False)

    params = prepare_basic_block_params(
        init_basic_block_params(kp, dim, dim_ff, n_layers), n_heads)

    out = basic_block_forward(x, mask, params, n_heads)
    out = jax.block_until_ready(out)

    assert out.shape == (B, inst, seq, dim)
    assert bool(jnp.all(jnp.isfinite(out)))
    # padded positions must be zeroed by the in-kernel masked_fill
    assert bool(jnp.all(jnp.where(mask[..., None], out, 0.0) == 0.0))
    print("KERNEL_OK")
</pallas_src>

<mosaic_0001>
module attributes {stable_mosaic.version = 11 : i64} {
  func.func @basic_block_kernel(%arg0: i32, %arg1: memref<1x32x32xf32, #tpu.memory_space<vmem>>, %arg2: memref<1x1x32xf32, #tpu.memory_space<vmem>>, %arg3: memref<1x32x1xf32, #tpu.memory_space<vmem>>, %arg4: memref<2x32x96xbf16, #tpu.memory_space<vmem>>, %arg5: memref<2x1x96xf32, #tpu.memory_space<vmem>>, %arg6: memref<2x4x8x32xbf16, #tpu.memory_space<vmem>>, %arg7: memref<2x1x32xf32, #tpu.memory_space<vmem>>, %arg8: memref<2x32x64xbf16, #tpu.memory_space<vmem>>, %arg9: memref<2x1x64xf32, #tpu.memory_space<vmem>>, %arg10: memref<2x64x32xbf16, #tpu.memory_space<vmem>>, %arg11: memref<2x1x32xf32, #tpu.memory_space<vmem>>, %arg12: memref<2x1x32xf32, #tpu.memory_space<vmem>>, %arg13: memref<2x1x32xf32, #tpu.memory_space<vmem>>, %arg14: memref<2x1x32xf32, #tpu.memory_space<vmem>>, %arg15: memref<2x1x32xf32, #tpu.memory_space<vmem>>, %arg16: memref<1x32x32xf32, #tpu.memory_space<vmem>>) attributes {dimension_semantics = [#tpu.dimension_semantics<parallel>], iteration_bounds = array<i64: 2>, scalar_prefetch = 0 : i64, scratch_operands = 0 : i64, tpu.core_type = #tpu.core_type<tc>, window_params = [{transform_indices = @transform_0, window_bounds = array<i64: 1, 32, 32>}, {transform_indices = @transform_1, window_bounds = array<i64: 1, 1, 32>}, {transform_indices = @transform_2, window_bounds = array<i64: 1, 32, 1>}, {pipeline_mode = #tpu.pipeline_mode<synchronous>, transform_indices = @transform_3, window_bounds = array<i64: 2, 32, 96>}, {pipeline_mode = #tpu.pipeline_mode<synchronous>, transform_indices = @transform_4, window_bounds = array<i64: 2, 1, 96>}, {pipeline_mode = #tpu.pipeline_mode<synchronous>, transform_indices = @transform_5, window_bounds = array<i64: 2, 4, 8, 32>}, {pipeline_mode = #tpu.pipeline_mode<synchronous>, transform_indices = @transform_6, window_bounds = array<i64: 2, 1, 32>}, {pipeline_mode = #tpu.pipeline_mode<synchronous>, transform_indices = @transform_7, window_bounds = array<i64: 2, 32, 64>}, {pipeline_mode = #tpu.pipeline_mode<synchronous>, transform_indices = @transform_8, window_bounds = array<i64: 2, 1, 64>}, {pipeline_mode = #tpu.pipeline_mode<synchronous>, transform_indices = @transform_9, window_bounds = array<i64: 2, 64, 32>}, {pipeline_mode = #tpu.pipeline_mode<synchronous>, transform_indices = @transform_10, window_bounds = array<i64: 2, 1, 32>}, {pipeline_mode = #tpu.pipeline_mode<synchronous>, transform_indices = @transform_11, window_bounds = array<i64: 2, 1, 32>}, {pipeline_mode = #tpu.pipeline_mode<synchronous>, transform_indices = @transform_12, window_bounds = array<i64: 2, 1, 32>}, {pipeline_mode = #tpu.pipeline_mode<synchronous>, transform_indices = @transform_13, window_bounds = array<i64: 2, 1, 32>}, {pipeline_mode = #tpu.pipeline_mode<synchronous>, transform_indices = @transform_14, window_bounds = array<i64: 2, 1, 32>}, {transform_indices = @transform_15, window_bounds = array<i64: 1, 32, 32>}]} {
    %c0 = arith.constant 0 : index
    %c0_0 = arith.constant 0 : index
    %c0_1 = arith.constant 0 : index
    %0 = vector.load %arg1[%c0, %c0_0, %c0_1] : memref<1x32x32xf32, #tpu.memory_space<vmem>>, vector<1x32x32xf32>
    %1 = vector.shape_cast %0 : vector<1x32x32xf32> to vector<32x32xf32>
    %c0_2 = arith.constant 0 : index
    %c0_3 = arith.constant 0 : index
    %c0_4 = arith.constant 0 : index
    %2 = vector.load %arg2[%c0_2, %c0_3, %c0_4] : memref<1x1x32xf32, #tpu.memory_space<vmem>>, vector<1x1x32xf32>
    %3 = vector.shape_cast %2 : vector<1x1x32xf32> to vector<1x32xf32>
    %c0_5 = arith.constant 0 : index
    %c0_6 = arith.constant 0 : index
    %c0_7 = arith.constant 0 : index
    %4 = vector.load %arg3[%c0_5, %c0_6, %c0_7] : memref<1x32x1xf32, #tpu.memory_space<vmem>>, vector<1x32x1xf32>
    %5 = vector.shape_cast %4 : vector<1x32x1xf32> to vector<32x1xf32>
    %6 = vector.shape_cast %3 : vector<1x32xf32> to vector<1x32xf32>
    %7 = vector.broadcast %6 : vector<1x32xf32> to vector<32x32xf32>
    %8 = arith.truncf %1 : vector<32x32xf32> to vector<32x32xbf16>
    %c0_8 = arith.constant 0 : index
    %c0_9 = arith.constant 0 : index
    %c0_10 = arith.constant 0 : index
    %9 = vector.load %arg4[%c0_8, %c0_9, %c0_10] : memref<2x32x96xbf16, #tpu.memory_space<vmem>>, vector<1x32x96xbf16>
    %10 = vector.shape_cast %9 : vector<1x32x96xbf16> to vector<32x96xbf16>
    %cst = arith.constant dense<0.000000e+00> : vector<32x96xf32>
    %11 = tpu.matmul %8, %10, %cst {dimension_numbers = #tpu.dot_dimension_numbers<[1], [0], [0], [1], [0, 0, 1, 1], [], []>} : vector<32x32xbf16>, vector<32x96xbf16>, vector<32x96xf32> -> vector<32x96xf32>
    %c0_11 = arith.constant 0 : index
    %c0_12 = arith.constant 0 : index
    %c0_13 = arith.constant 0 : index
    %12 = vector.load %arg5[%c0_11, %c0_12, %c0_13] : memref<2x1x96xf32, #tpu.memory_space<vmem>>, vector<1x1x96xf32>
    %13 = vector.shape_cast %12 : vector<1x1x96xf32> to vector<1x96xf32>
    %14 = vector.broadcast %13 : vector<1x96xf32> to vector<32x96xf32>
    %15 = arith.addf %11, %14 : vector<32x96xf32>
    %16 = vector.extract_strided_slice %15 {offsets = [0, 0], sizes = [32, 32], strides = [1, 1]} : vector<32x96xf32> to vector<32x32xf32>
    %17 = arith.truncf %16 : vector<32x32xf32> to vector<32x32xbf16>
    %18 = vector.extract_strided_slice %15 {offsets = [0, 32], sizes = [32, 32], strides = [1, 1]} : vector<32x96xf32> to vector<32x32xf32>
    %19 = arith.truncf %18 : vector<32x32xf32> to vector<32x32xbf16>
    %20 = vector.extract_strided_slice %15 {offsets = [0, 64], sizes = [32, 32], strides = [1, 1]} : vector<32x96xf32> to vector<32x32xf32>
    %21 = arith.truncf %20 : vector<32x32xf32> to vector<32x32xbf16>
    %c0_14 = arith.constant 0 : index
    %c0_15 = arith.constant 0 : index
    %c0_16 = arith.constant 0 : index
    %c0_17 = arith.constant 0 : index
    %22 = vector.load %arg6[%c0_14, %c0_15, %c0_16, %c0_17] : memref<2x4x8x32xbf16, #tpu.memory_space<vmem>>, vector<1x4x8x32xbf16>
    %23 = vector.shape_cast %22 : vector<1x4x8x32xbf16> to vector<4x8x32xbf16>
    %cst_18 = arith.constant 0.000000e+00 : f32
    %24 = vector.broadcast %cst_18 : f32 to vector<32x32xf32>
    %25 = vector.extract_strided_slice %17 {offsets = [0, 0], sizes = [32, 8], strides = [1, 1]} : vector<32x32xbf16> to vector<32x8xbf16>
    %26 = vector.extract_strided_slice %19 {offsets = [0, 0], sizes = [32, 8], strides = [1, 1]} : vector<32x32xbf16> to vector<32x8xbf16>
    %27 = vector.extract_strided_slice %21 {offsets = [0, 0], sizes = [32, 8], strides = [1, 1]} : vector<32x32xbf16> to vector<32x8xbf16>
    %cst_19 = arith.constant dense<0.000000e+00> : vector<32x32xf32>
    %28 = tpu.matmul %25, %26, %cst_19 {dimension_numbers = #tpu.dot_dimension_numbers<[1], [1], [0], [0], [0, 0, 1, 0], [], []>} : vector<32x8xbf16>, vector<32x8xbf16>, vector<32x32xf32> -> vector<32x32xf32>
    %29 = arith.addf %28, %7 : vector<32x32xf32>
    %cst_20 = arith.constant dense<0xFF800000> : vector<32xf32>
    %30 = vector.multi_reduction <maximumf>, %29, %cst_20 [1] : vector<32x32xf32> to vector<32xf32>
    %31 = vector.shape_cast %30 : vector<32xf32> to vector<32x1xf32>
    %32 = vector.broadcast %31 : vector<32x1xf32> to vector<32x32xf32>
    %33 = arith.subf %29, %32 : vector<32x32xf32>
    %34 = math.exp %33 : vector<32x32xf32>
    %cst_21 = arith.constant dense<0.000000e+00> : vector<32xf32>
    %35 = vector.multi_reduction <add>, %34, %cst_21 [1] : vector<32x32xf32> to vector<32xf32>
    %36 = vector.shape_cast %35 : vector<32xf32> to vector<32x1xf32>
    %37 = tpu.reciprocal %36 {approx = true} : vector<32x1xf32> -> vector<32x1xf32>
    %38 = vector.broadcast %37 : vector<32x1xf32> to vector<32x32xf32>
    %39 = arith.mulf %34, %38 : vector<32x32xf32>
    %40 = arith.truncf %39 : vector<32x32xf32> to vector<32x32xbf16>
    %cst_22 = arith.constant dense<0.000000e+00> : vector<32x8xf32>
    %41 = tpu.matmul %40, %27, %cst_22 {dimension_numbers = #tpu.dot_dimension_numbers<[1], [0], [0], [1], [0, 0, 1, 1], [], []>} : vector<32x32xbf16>, vector<32x8xbf16>, vector<32x8xf32> -> vector<32x8xf32>
    %42 = arith.truncf %41 : vector<32x8xf32> to vector<32x8xbf16>
    %43 = vector.extract_strided_slice %23 {offsets = [0, 0, 0], sizes = [1, 8, 32], strides = [1, 1, 1]} : vector<4x8x32xbf16> to vector<1x8x32xbf16>
    %44 = vector.shape_cast %43 : vector<1x8x32xbf16> to vector<8x32xbf16>
    %cst_23 = arith.constant dense<0.000000e+00> : vector<32x32xf32>
    %45 = tpu.matmul %42, %44, %cst_23 {dimension_numbers = #tpu.dot_dimension_numbers<[1], [0], [0], [1], [0, 0, 1, 1], [], []>} : vector<32x8xbf16>, vector<8x32xbf16>, vector<32x32xf32> -> vector<32x32xf32>
    %46 = arith.addf %24, %45 : vector<32x32xf32>
    %47 = vector.extract_strided_slice %17 {offsets = [0, 8], sizes = [32, 8], strides = [1, 1]} : vector<32x32xbf16> to vector<32x8xbf16>
    %48 = vector.extract_strided_slice %19 {offsets = [0, 8], sizes = [32, 8], strides = [1, 1]} : vector<32x32xbf16> to vector<32x8xbf16>
    %49 = vector.extract_strided_slice %21 {offsets = [0, 8], sizes = [32, 8], strides = [1, 1]} : vector<32x32xbf16> to vector<32x8xbf16>
    %cst_24 = arith.constant dense<0.000000e+00> : vector<32x32xf32>
    %50 = tpu.matmul %47, %48, %cst_24 {dimension_numbers = #tpu.dot_dimension_numbers<[1], [1], [0], [0], [0, 0, 1, 0], [], []>} : vector<32x8xbf16>, vector<32x8xbf16>, vector<32x32xf32> -> vector<32x32xf32>
    %51 = arith.addf %50, %7 : vector<32x32xf32>
    %cst_25 = arith.constant dense<0xFF800000> : vector<32xf32>
    %52 = vector.multi_reduction <maximumf>, %51, %cst_25 [1] : vector<32x32xf32> to vector<32xf32>
    %53 = vector.shape_cast %52 : vector<32xf32> to vector<32x1xf32>
    %54 = vector.broadcast %53 : vector<32x1xf32> to vector<32x32xf32>
    %55 = arith.subf %51, %54 : vector<32x32xf32>
    %56 = math.exp %55 : vector<32x32xf32>
    %cst_26 = arith.constant dense<0.000000e+00> : vector<32xf32>
    %57 = vector.multi_reduction <add>, %56, %cst_26 [1] : vector<32x32xf32> to vector<32xf32>
    %58 = vector.shape_cast %57 : vector<32xf32> to vector<32x1xf32>
    %59 = tpu.reciprocal %58 {approx = true} : vector<32x1xf32> -> vector<32x1xf32>
    %60 = vector.broadcast %59 : vector<32x1xf32> to vector<32x32xf32>
    %61 = arith.mulf %56, %60 : vector<32x32xf32>
    %62 = arith.truncf %61 : vector<32x32xf32> to vector<32x32xbf16>
    %cst_27 = arith.constant dense<0.000000e+00> : vector<32x8xf32>
    %63 = tpu.matmul %62, %49, %cst_27 {dimension_numbers = #tpu.dot_dimension_numbers<[1], [0], [0], [1], [0, 0, 1, 1], [], []>} : vector<32x32xbf16>, vector<32x8xbf16>, vector<32x8xf32> -> vector<32x8xf32>
    %64 = arith.truncf %63 : vector<32x8xf32> to vector<32x8xbf16>
    %65 = vector.extract_strided_slice %23 {offsets = [1, 0, 0], sizes = [1, 8, 32], strides = [1, 1, 1]} : vector<4x8x32xbf16> to vector<1x8x32xbf16>
    %66 = vector.shape_cast %65 : vector<1x8x32xbf16> to vector<8x32xbf16>
    %cst_28 = arith.constant dense<0.000000e+00> : vector<32x32xf32>
    %67 = tpu.matmul %64, %66, %cst_28 {dimension_numbers = #tpu.dot_dimension_numbers<[1], [0], [0], [1], [0, 0, 1, 1], [], []>} : vector<32x8xbf16>, vector<8x32xbf16>, vector<32x32xf32> -> vector<32x32xf32>
    %68 = arith.addf %46, %67 : vector<32x32xf32>
    %69 = vector.extract_strided_slice %17 {offsets = [0, 16], sizes = [32, 8], strides = [1, 1]} : vector<32x32xbf16> to vector<32x8xbf16>
    %70 = vector.extract_strided_slice %19 {offsets = [0, 16], sizes = [32, 8], strides = [1, 1]} : vector<32x32xbf16> to vector<32x8xbf16>
    %71 = vector.extract_strided_slice %21 {offsets = [0, 16], sizes = [32, 8], strides = [1, 1]} : vector<32x32xbf16> to vector<32x8xbf16>
    %cst_29 = arith.constant dense<0.000000e+00> : vector<32x32xf32>
    %72 = tpu.matmul %69, %70, %cst_29 {dimension_numbers = #tpu.dot_dimension_numbers<[1], [1], [0], [0], [0, 0, 1, 0], [], []>} : vector<32x8xbf16>, vector<32x8xbf16>, vector<32x32xf32> -> vector<32x32xf32>
    %73 = arith.addf %72, %7 : vector<32x32xf32>
    %cst_30 = arith.constant dense<0xFF800000> : vector<32xf32>
    %74 = vector.multi_reduction <maximumf>, %73, %cst_30 [1] : vector<32x32xf32> to vector<32xf32>
    %75 = vector.shape_cast %74 : vector<32xf32> to vector<32x1xf32>
    %76 = vector.broadcast %75 : vector<32x1xf32> to vector<32x32xf32>
    %77 = arith.subf %73, %76 : vector<32x32xf32>
    %78 = math.exp %77 : vector<32x32xf32>
    %cst_31 = arith.constant dense<0.000000e+00> : vector<32xf32>
    %79 = vector.multi_reduction <add>, %78, %cst_31 [1] : vector<32x32xf32> to vector<32xf32>
    %80 = vector.shape_cast %79 : vector<32xf32> to vector<32x1xf32>
    %81 = tpu.reciprocal %80 {approx = true} : vector<32x1xf32> -> vector<32x1xf32>
    %82 = vector.broadcast %81 : vector<32x1xf32> to vector<32x32xf32>
    %83 = arith.mulf %78, %82 : vector<32x32xf32>
    %84 = arith.truncf %83 : vector<32x32xf32> to vector<32x32xbf16>
    %cst_32 = arith.constant dense<0.000000e+00> : vector<32x8xf32>
    %85 = tpu.matmul %84, %71, %cst_32 {dimension_numbers = #tpu.dot_dimension_numbers<[1], [0], [0], [1], [0, 0, 1, 1], [], []>} : vector<32x32xbf16>, vector<32x8xbf16>, vector<32x8xf32> -> vector<32x8xf32>
    %86 = arith.truncf %85 : vector<32x8xf32> to vector<32x8xbf16>
    %87 = vector.extract_strided_slice %23 {offsets = [2, 0, 0], sizes = [1, 8, 32], strides = [1, 1, 1]} : vector<4x8x32xbf16> to vector<1x8x32xbf16>
    %88 = vector.shape_cast %87 : vector<1x8x32xbf16> to vector<8x32xbf16>
    %cst_33 = arith.constant dense<0.000000e+00> : vector<32x32xf32>
    %89 = tpu.matmul %86, %88, %cst_33 {dimension_numbers = #tpu.dot_dimension_numbers<[1], [0], [0], [1], [0, 0, 1, 1], [], []>} : vector<32x8xbf16>, vector<8x32xbf16>, vector<32x32xf32> -> vector<32x32xf32>
    %90 = arith.addf %68, %89 : vector<32x32xf32>
    %91 = vector.extract_strided_slice %17 {offsets = [0, 24], sizes = [32, 8], strides = [1, 1]} : vector<32x32xbf16> to vector<32x8xbf16>
    %92 = vector.extract_strided_slice %19 {offsets = [0, 24], sizes = [32, 8], strides = [1, 1]} : vector<32x32xbf16> to vector<32x8xbf16>
    %93 = vector.extract_strided_slice %21 {offsets = [0, 24], sizes = [32, 8], strides = [1, 1]} : vector<32x32xbf16> to vector<32x8xbf16>
    %cst_34 = arith.constant dense<0.000000e+00> : vector<32x32xf32>
    %94 = tpu.matmul %91, %92, %cst_34 {dimension_numbers = #tpu.dot_dimension_numbers<[1], [1], [0], [0], [0, 0, 1, 0], [], []>} : vector<32x8xbf16>, vector<32x8xbf16>, vector<32x32xf32> -> vector<32x32xf32>
    %95 = arith.addf %94, %7 : vector<32x32xf32>
    %cst_35 = arith.constant dense<0xFF800000> : vector<32xf32>
    %96 = vector.multi_reduction <maximumf>, %95, %cst_35 [1] : vector<32x32xf32> to vector<32xf32>
    %97 = vector.shape_cast %96 : vector<32xf32> to vector<32x1xf32>
    %98 = vector.broadcast %97 : vector<32x1xf32> to vector<32x32xf32>
    %99 = arith.subf %95, %98 : vector<32x32xf32>
    %100 = math.exp %99 : vector<32x32xf32>
    %cst_36 = arith.constant dense<0.000000e+00> : vector<32xf32>
    %101 = vector.multi_reduction <add>, %100, %cst_36 [1] : vector<32x32xf32> to vector<32xf32>
    %102 = vector.shape_cast %101 : vector<32xf32> to vector<32x1xf32>
    %103 = tpu.reciprocal %102 {approx = true} : vector<32x1xf32> -> vector<32x1xf32>
    %104 = vector.broadcast %103 : vector<32x1xf32> to vector<32x32xf32>
    %105 = arith.mulf %100, %104 : vector<32x32xf32>
    %106 = arith.truncf %105 : vector<32x32xf32> to vector<32x32xbf16>
    %cst_37 = arith.constant dense<0.000000e+00> : vector<32x8xf32>
    %107 = tpu.matmul %106, %93, %cst_37 {dimension_numbers = #tpu.dot_dimension_numbers<[1], [0], [0], [1], [0, 0, 1, 1], [], []>} : vector<32x32xbf16>, vector<32x8xbf16>, vector<32x8xf32> -> vector<32x8xf32>
    %108 = arith.truncf %107 : vector<32x8xf32> to vector<32x8xbf16>
    %109 = vector.extract_strided_slice %23 {offsets = [3, 0, 0], sizes = [1, 8, 32], strides = [1, 1, 1]} : vector<4x8x32xbf16> to vector<1x8x32xbf16>
    %110 = vector.shape_cast %109 : vector<1x8x32xbf16> to vector<8x32xbf16>
    %cst_38 = arith.constant dense<0.000000e+00> : vector<32x32xf32>
    %111 = tpu.matmul %108, %110, %cst_38 {dimension_numbers = #tpu.dot_dimension_numbers<[1], [0], [0], [1], [0, 0, 1, 1], [], []>} : vector<32x8xbf16>, vector<8x32xbf16>, vector<32x32xf32> -> vector<32x32xf32>
    %112 = arith.addf %90, %111 : vector<32x32xf32>
    %c0_39 = arith.constant 0 : index
    %c0_40 = arith.constant 0 : index
    %c0_41 = arith.constant 0 : index
    %113 = vector.load %arg7[%c0_39, %c0_40, %c0_41] : memref<2x1x32xf32, #tpu.memory_space<vmem>>, vector<1x1x32xf32>
    %114 = vector.shape_cast %113 : vector<1x1x32xf32> to vector<1x32xf32>
    %115 = vector.broadcast %114 : vector<1x32xf32> to vector<32x32xf32>
    %116 = arith.addf %112, %115 : vector<32x32xf32>
    %117 = arith.addf %1, %116 : vector<32x32xf32>
    %c0_42 = arith.constant 0 : index
    %c0_43 = arith.constant 0 : index
    %c0_44 = arith.constant 0 : index
    %118 = vector.load %arg12[%c0_42, %c0_43, %c0_44] : memref<2x1x32xf32, #tpu.memory_space<vmem>>, vector<1x1x32xf32>
    %119 = vector.shape_cast %118 : vector<1x1x32xf32> to vector<1x32xf32>
    %c0_45 = arith.constant 0 : index
    %c0_46 = arith.constant 0 : index
    %c0_47 = arith.constant 0 : index
    %120 = vector.load %arg13[%c0_45, %c0_46, %c0_47] : memref<2x1x32xf32, #tpu.memory_space<vmem>>, vector<1x1x32xf32>
    %121 = vector.shape_cast %120 : vector<1x1x32xf32> to vector<1x32xf32>
    %cst_48 = arith.constant dense<0.000000e+00> : vector<32xf32>
    %122 = vector.multi_reduction <add>, %117, %cst_48 [1] : vector<32x32xf32> to vector<32xf32>
    %123 = vector.shape_cast %122 : vector<32xf32> to vector<32x1xf32>
    %cst_49 = arith.constant 3.200000e+01 : f32
    %124 = vector.broadcast %cst_49 : f32 to vector<32x1xf32>
    %125 = arith.divf %123, %124 : vector<32x1xf32>
    %126 = arith.mulf %117, %117 : vector<32x32xf32>
    %cst_50 = arith.constant dense<0.000000e+00> : vector<32xf32>
    %127 = vector.multi_reduction <add>, %126, %cst_50 [1] : vector<32x32xf32> to vector<32xf32>
    %128 = vector.shape_cast %127 : vector<32xf32> to vector<32x1xf32>
    %cst_51 = arith.constant 3.200000e+01 : f32
    %129 = vector.broadcast %cst_51 : f32 to vector<32x1xf32>
    %130 = arith.divf %128, %129 : vector<32x1xf32>
    %131 = arith.mulf %125, %125 : vector<32x1xf32>
    %132 = arith.subf %130, %131 : vector<32x1xf32>
    %cst_52 = arith.constant 0.000000e+00 : f32
    %133 = vector.broadcast %cst_52 : f32 to vector<32x1xf32>
    %134 = arith.maximumf %132, %133 : vector<32x1xf32>
    %135 = vector.broadcast %125 : vector<32x1xf32> to vector<32x32xf32>
    %136 = arith.subf %117, %135 : vector<32x32xf32>
    %cst_53 = arith.constant 9.99999974E-6 : f32
    %137 = vector.broadcast %cst_53 : f32 to vector<32x1xf32>
    %138 = arith.addf %134, %137 : vector<32x1xf32>
    %139 = math.rsqrt %138 : vector<32x1xf32>
    %140 = vector.broadcast %139 : vector<32x1xf32> to vector<32x32xf32>
    %141 = arith.mulf %136, %140 : vector<32x32xf32>
    %142 = vector.broadcast %119 : vector<1x32xf32> to vector<32x32xf32>
    %143 = arith.mulf %141, %142 : vector<32x32xf32>
    %144 = vector.broadcast %121 : vector<1x32xf32> to vector<32x32xf32>
    %145 = arith.addf %143, %144 : vector<32x32xf32>
    %146 = arith.truncf %145 : vector<32x32xf32> to vector<32x32xbf16>
    %c0_54 = arith.constant 0 : index
    %c0_55 = arith.constant 0 : index
    %c0_56 = arith.constant 0 : index
    %147 = vector.load %arg8[%c0_54, %c0_55, %c0_56] : memref<2x32x64xbf16, #tpu.memory_space<vmem>>, vector<1x32x64xbf16>
    %148 = vector.shape_cast %147 : vector<1x32x64xbf16> to vector<32x64xbf16>
    %cst_57 = arith.constant dense<0.000000e+00> : vector<32x64xf32>
    %149 = tpu.matmul %146, %148, %cst_57 {dimension_numbers = #tpu.dot_dimension_numbers<[1], [0], [0], [1], [0, 0, 1, 1], [], []>} : vector<32x32xbf16>, vector<32x64xbf16>, vector<32x64xf32> -> vector<32x64xf32>
    %c0_58 = arith.constant 0 : index
    %c0_59 = arith.constant 0 : index
    %c0_60 = arith.constant 0 : index
    %150 = vector.load %arg9[%c0_58, %c0_59, %c0_60] : memref<2x1x64xf32, #tpu.memory_space<vmem>>, vector<1x1x64xf32>
    %151 = vector.shape_cast %150 : vector<1x1x64xf32> to vector<1x64xf32>
    %152 = vector.broadcast %151 : vector<1x64xf32> to vector<32x64xf32>
    %153 = arith.addf %149, %152 : vector<32x64xf32>
    %cst_61 = arith.constant 0.000000e+00 : f32
    %154 = vector.broadcast %cst_61 : f32 to vector<32x64xf32>
    %155 = arith.maximumf %153, %154 : vector<32x64xf32>
    %156 = arith.truncf %155 : vector<32x64xf32> to vector<32x64xbf16>
    %c0_62 = arith.constant 0 : index
    %c0_63 = arith.constant 0 : index
    %c0_64 = arith.constant 0 : index
    %157 = vector.load %arg10[%c0_62, %c0_63, %c0_64] : memref<2x64x32xbf16, #tpu.memory_space<vmem>>, vector<1x64x32xbf16>
    %158 = vector.shape_cast %157 : vector<1x64x32xbf16> to vector<64x32xbf16>
    %cst_65 = arith.constant dense<0.000000e+00> : vector<32x32xf32>
    %159 = tpu.matmul %156, %158, %cst_65 {dimension_numbers = #tpu.dot_dimension_numbers<[1], [0], [0], [1], [0, 0, 1, 1], [], []>} : vector<32x64xbf16>, vector<64x32xbf16>, vector<32x32xf32> -> vector<32x32xf32>
    %c0_66 = arith.constant 0 : index
    %c0_67 = arith.constant 0 : index
    %c0_68 = arith.constant 0 : index
    %160 = vector.load %arg11[%c0_66, %c0_67, %c0_68] : memref<2x1x32xf32, #tpu.memory_space<vmem>>, vector<1x1x32xf32>
    %161 = vector.shape_cast %160 : vector<1x1x32xf32> to vector<1x32xf32>
    %162 = vector.broadcast %161 : vector<1x32xf32> to vector<32x32xf32>
    %163 = arith.addf %159, %162 : vector<32x32xf32>
    %164 = arith.addf %145, %163 : vector<32x32xf32>
    %c0_69 = arith.constant 0 : index
    %c0_70 = arith.constant 0 : index
    %c0_71 = arith.constant 0 : index
    %165 = vector.load %arg14[%c0_69, %c0_70, %c0_71] : memref<2x1x32xf32, #tpu.memory_space<vmem>>, vector<1x1x32xf32>
    %166 = vector.shape_cast %165 : vector<1x1x32xf32> to vector<1x32xf32>
    %c0_72 = arith.constant 0 : index
    %c0_73 = arith.constant 0 : index
    %c0_74 = arith.constant 0 : index
    %167 = vector.load %arg15[%c0_72, %c0_73, %c0_74] : memref<2x1x32xf32, #tpu.memory_space<vmem>>, vector<1x1x32xf32>
    %168 = vector.shape_cast %167 : vector<1x1x32xf32> to vector<1x32xf32>
    %cst_75 = arith.constant dense<0.000000e+00> : vector<32xf32>
    %169 = vector.multi_reduction <add>, %164, %cst_75 [1] : vector<32x32xf32> to vector<32xf32>
    %170 = vector.shape_cast %169 : vector<32xf32> to vector<32x1xf32>
    %cst_76 = arith.constant 3.200000e+01 : f32
    %171 = vector.broadcast %cst_76 : f32 to vector<32x1xf32>
    %172 = arith.divf %170, %171 : vector<32x1xf32>
    %173 = arith.mulf %164, %164 : vector<32x32xf32>
    %cst_77 = arith.constant dense<0.000000e+00> : vector<32xf32>
    %174 = vector.multi_reduction <add>, %173, %cst_77 [1] : vector<32x32xf32> to vector<32xf32>
    %175 = vector.shape_cast %174 : vector<32xf32> to vector<32x1xf32>
    %cst_78 = arith.constant 3.200000e+01 : f32
    %176 = vector.broadcast %cst_78 : f32 to vector<32x1xf32>
    %177 = arith.divf %175, %176 : vector<32x1xf32>
    %178 = arith.mulf %172, %172 : vector<32x1xf32>
    %179 = arith.subf %177, %178 : vector<32x1xf32>
    %cst_79 = arith.constant 0.000000e+00 : f32
    %180 = vector.broadcast %cst_79 : f32 to vector<32x1xf32>
    %181 = arith.maximumf %179, %180 : vector<32x1xf32>
    %182 = vector.broadcast %172 : vector<32x1xf32> to vector<32x32xf32>
    %183 = arith.subf %164, %182 : vector<32x32xf32>
    %cst_80 = arith.constant 9.99999974E-6 : f32
    %184 = vector.broadcast %cst_80 : f32 to vector<32x1xf32>
    %185 = arith.addf %181, %184 : vector<32x1xf32>
    %186 = math.rsqrt %185 : vector<32x1xf32>
    %187 = vector.broadcast %186 : vector<32x1xf32> to vector<32x32xf32>
    %188 = arith.mulf %183, %187 : vector<32x32xf32>
    %189 = vector.broadcast %166 : vector<1x32xf32> to vector<32x32xf32>
    %190 = arith.mulf %188, %189 : vector<32x32xf32>
    %191 = vector.broadcast %168 : vector<1x32xf32> to vector<32x32xf32>
    %192 = arith.addf %190, %191 : vector<32x32xf32>
    %193 = arith.truncf %192 : vector<32x32xf32> to vector<32x32xbf16>
    %c1 = arith.constant 1 : index
    %c0_81 = arith.constant 0 : index
    %c0_82 = arith.constant 0 : index
    %194 = vector.load %arg4[%c1, %c0_81, %c0_82] : memref<2x32x96xbf16, #tpu.memory_space<vmem>>, vector<1x32x96xbf16>
    %195 = vector.shape_cast %194 : vector<1x32x96xbf16> to vector<32x96xbf16>
    %cst_83 = arith.constant dense<0.000000e+00> : vector<32x96xf32>
    %196 = tpu.matmul %193, %195, %cst_83 {dimension_numbers = #tpu.dot_dimension_numbers<[1], [0], [0], [1], [0, 0, 1, 1], [], []>} : vector<32x32xbf16>, vector<32x96xbf16>, vector<32x96xf32> -> vector<32x96xf32>
    %c1_84 = arith.constant 1 : index
    %c0_85 = arith.constant 0 : index
    %c0_86 = arith.constant 0 : index
    %197 = vector.load %arg5[%c1_84, %c0_85, %c0_86] : memref<2x1x96xf32, #tpu.memory_space<vmem>>, vector<1x1x96xf32>
    %198 = vector.shape_cast %197 : vector<1x1x96xf32> to vector<1x96xf32>
    %199 = vector.broadcast %198 : vector<1x96xf32> to vector<32x96xf32>
    %200 = arith.addf %196, %199 : vector<32x96xf32>
    %201 = vector.extract_strided_slice %200 {offsets = [0, 0], sizes = [32, 32], strides = [1, 1]} : vector<32x96xf32> to vector<32x32xf32>
    %202 = arith.truncf %201 : vector<32x32xf32> to vector<32x32xbf16>
    %203 = vector.extract_strided_slice %200 {offsets = [0, 32], sizes = [32, 32], strides = [1, 1]} : vector<32x96xf32> to vector<32x32xf32>
    %204 = arith.truncf %203 : vector<32x32xf32> to vector<32x32xbf16>
    %205 = vector.extract_strided_slice %200 {offsets = [0, 64], sizes = [32, 32], strides = [1, 1]} : vector<32x96xf32> to vector<32x32xf32>
    %206 = arith.truncf %205 : vector<32x32xf32> to vector<32x32xbf16>
    %c1_87 = arith.constant 1 : index
    %c0_88 = arith.constant 0 : index
    %c0_89 = arith.constant 0 : index
    %c0_90 = arith.constant 0 : index
    %207 = vector.load %arg6[%c1_87, %c0_88, %c0_89, %c0_90] : memref<2x4x8x32xbf16, #tpu.memory_space<vmem>>, vector<1x4x8x32xbf16>
    %208 = vector.shape_cast %207 : vector<1x4x8x32xbf16> to vector<4x8x32xbf16>
    %cst_91 = arith.constant 0.000000e+00 : f32
    %209 = vector.broadcast %cst_91 : f32 to vector<32x32xf32>
    %210 = vector.extract_strided_slice %202 {offsets = [0, 0], sizes = [32, 8], strides = [1, 1]} : vector<32x32xbf16> to vector<32x8xbf16>
    %211 = vector.extract_strided_slice %204 {offsets = [0, 0], sizes = [32, 8], strides = [1, 1]} : vector<32x32xbf16> to vector<32x8xbf16>
    %212 = vector.extract_strided_slice %206 {offsets = [0, 0], sizes = [32, 8], strides = [1, 1]} : vector<32x32xbf16> to vector<32x8xbf16>
    %cst_92 = arith.constant dense<0.000000e+00> : vector<32x32xf32>
    %213 = tpu.matmul %210, %211, %cst_92 {dimension_numbers = #tpu.dot_dimension_numbers<[1], [1], [0], [0], [0, 0, 1, 0], [], []>} : vector<32x8xbf16>, vector<32x8xbf16>, vector<32x32xf32> -> vector<32x32xf32>
    %214 = arith.addf %213, %7 : vector<32x32xf32>
    %cst_93 = arith.constant dense<0xFF800000> : vector<32xf32>
    %215 = vector.multi_reduction <maximumf>, %214, %cst_93 [1] : vector<32x32xf32> to vector<32xf32>
    %216 = vector.shape_cast %215 : vector<32xf32> to vector<32x1xf32>
    %217 = vector.broadcast %216 : vector<32x1xf32> to vector<32x32xf32>
    %218 = arith.subf %214, %217 : vector<32x32xf32>
    %219 = math.exp %218 : vector<32x32xf32>
    %cst_94 = arith.constant dense<0.000000e+00> : vector<32xf32>
    %220 = vector.multi_reduction <add>, %219, %cst_94 [1] : vector<32x32xf32> to vector<32xf32>
    %221 = vector.shape_cast %220 : vector<32xf32> to vector<32x1xf32>
    %222 = tpu.reciprocal %221 {approx = true} : vector<32x1xf32> -> vector<32x1xf32>
    %223 = vector.broadcast %222 : vector<32x1xf32> to vector<32x32xf32>
    %224 = arith.mulf %219, %223 : vector<32x32xf32>
    %225 = arith.truncf %224 : vector<32x32xf32> to vector<32x32xbf16>
    %cst_95 = arith.constant dense<0.000000e+00> : vector<32x8xf32>
    %226 = tpu.matmul %225, %212, %cst_95 {dimension_numbers = #tpu.dot_dimension_numbers<[1], [0], [0], [1], [0, 0, 1, 1], [], []>} : vector<32x32xbf16>, vector<32x8xbf16>, vector<32x8xf32> -> vector<32x8xf32>
    %227 = arith.truncf %226 : vector<32x8xf32> to vector<32x8xbf16>
    %228 = vector.extract_strided_slice %208 {offsets = [0, 0, 0], sizes = [1, 8, 32], strides = [1, 1, 1]} : vector<4x8x32xbf16> to vector<1x8x32xbf16>
    %229 = vector.shape_cast %228 : vector<1x8x32xbf16> to vector<8x32xbf16>
    %cst_96 = arith.constant dense<0.000000e+00> : vector<32x32xf32>
    %230 = tpu.matmul %227, %229, %cst_96 {dimension_numbers = #tpu.dot_dimension_numbers<[1], [0], [0], [1], [0, 0, 1, 1], [], []>} : vector<32x8xbf16>, vector<8x32xbf16>, vector<32x32xf32> -> vector<32x32xf32>
    %231 = arith.addf %209, %230 : vector<32x32xf32>
    %232 = vector.extract_strided_slice %202 {offsets = [0, 8], sizes = [32, 8], strides = [1, 1]} : vector<32x32xbf16> to vector<32x8xbf16>
    %233 = vector.extract_strided_slice %204 {offsets = [0, 8], sizes = [32, 8], strides = [1, 1]} : vector<32x32xbf16> to vector<32x8xbf16>
    %234 = vector.extract_strided_slice %206 {offsets = [0, 8], sizes = [32, 8], strides = [1, 1]} : vector<32x32xbf16> to vector<32x8xbf16>
    %cst_97 = arith.constant dense<0.000000e+00> : vector<32x32xf32>
    %235 = tpu.matmul %232, %233, %cst_97 {dimension_numbers = #tpu.dot_dimension_numbers<[1], [1], [0], [0], [0, 0, 1, 0], [], []>} : vector<32x8xbf16>, vector<32x8xbf16>, vector<32x32xf32> -> vector<32x32xf32>
    %236 = arith.addf %235, %7 : vector<32x32xf32>
    %cst_98 = arith.constant dense<0xFF800000> : vector<32xf32>
    %237 = vector.multi_reduction <maximumf>, %236, %cst_98 [1] : vector<32x32xf32> to vector<32xf32>
    %238 = vector.shape_cast %237 : vector<32xf32> to vector<32x1xf32>
    %239 = vector.broadcast %238 : vector<32x1xf32> to vector<32x32xf32>
    %240 = arith.subf %236, %239 : vector<32x32xf32>
    %241 = math.exp %240 : vector<32x32xf32>
    %cst_99 = arith.constant dense<0.000000e+00> : vector<32xf32>
    %242 = vector.multi_reduction <add>, %241, %cst_99 [1] : vector<32x32xf32> to vector<32xf32>
    %243 = vector.shape_cast %242 : vector<32xf32> to vector<32x1xf32>
    %244 = tpu.reciprocal %243 {approx = true} : vector<32x1xf32> -> vector<32x1xf32>
    %245 = vector.broadcast %244 : vector<32x1xf32> to vector<32x32xf32>
    %246 = arith.mulf %241, %245 : vector<32x32xf32>
    %247 = arith.truncf %246 : vector<32x32xf32> to vector<32x32xbf16>
    %cst_100 = arith.constant dense<0.000000e+00> : vector<32x8xf32>
    %248 = tpu.matmul %247, %234, %cst_100 {dimension_numbers = #tpu.dot_dimension_numbers<[1], [0], [0], [1], [0, 0, 1, 1], [], []>} : vector<32x32xbf16>, vector<32x8xbf16>, vector<32x8xf32> -> vector<32x8xf32>
    %249 = arith.truncf %248 : vector<32x8xf32> to vector<32x8xbf16>
    %250 = vector.extract_strided_slice %208 {offsets = [1, 0, 0], sizes = [1, 8, 32], strides = [1, 1, 1]} : vector<4x8x32xbf16> to vector<1x8x32xbf16>
    %251 = vector.shape_cast %250 : vector<1x8x32xbf16> to vector<8x32xbf16>
    %cst_101 = arith.constant dense<0.000000e+00> : vector<32x32xf32>
    %252 = tpu.matmul %249, %251, %cst_101 {dimension_numbers = #tpu.dot_dimension_numbers<[1], [0], [0], [1], [0, 0, 1, 1], [], []>} : vector<32x8xbf16>, vector<8x32xbf16>, vector<32x32xf32> -> vector<32x32xf32>
    %253 = arith.addf %231, %252 : vector<32x32xf32>
    %254 = vector.extract_strided_slice %202 {offsets = [0, 16], sizes = [32, 8], strides = [1, 1]} : vector<32x32xbf16> to vector<32x8xbf16>
    %255 = vector.extract_strided_slice %204 {offsets = [0, 16], sizes = [32, 8], strides = [1, 1]} : vector<32x32xbf16> to vector<32x8xbf16>
    %256 = vector.extract_strided_slice %206 {offsets = [0, 16], sizes = [32, 8], strides = [1, 1]} : vector<32x32xbf16> to vector<32x8xbf16>
    %cst_102 = arith.constant dense<0.000000e+00> : vector<32x32xf32>
    %257 = tpu.matmul %254, %255, %cst_102 {dimension_numbers = #tpu.dot_dimension_numbers<[1], [1], [0], [0], [0, 0, 1, 0], [], []>} : vector<32x8xbf16>, vector<32x8xbf16>, vector<32x32xf32> -> vector<32x32xf32>
    %258 = arith.addf %257, %7 : vector<32x32xf32>
    %cst_103 = arith.constant dense<0xFF800000> : vector<32xf32>
    %259 = vector.multi_reduction <maximumf>, %258, %cst_103 [1] : vector<32x32xf32> to vector<32xf32>
    %260 = vector.shape_cast %259 : vector<32xf32> to vector<32x1xf32>
    %261 = vector.broadcast %260 : vector<32x1xf32> to vector<32x32xf32>
    %262 = arith.subf %258, %261 : vector<32x32xf32>
    %263 = math.exp %262 : vector<32x32xf32>
    %cst_104 = arith.constant dense<0.000000e+00> : vector<32xf32>
    %264 = vector.multi_reduction <add>, %263, %cst_104 [1] : vector<32x32xf32> to vector<32xf32>
    %265 = vector.shape_cast %264 : vector<32xf32> to vector<32x1xf32>
    %266 = tpu.reciprocal %265 {approx = true} : vector<32x1xf32> -> vector<32x1xf32>
    %267 = vector.broadcast %266 : vector<32x1xf32> to vector<32x32xf32>
    %268 = arith.mulf %263, %267 : vector<32x32xf32>
    %269 = arith.truncf %268 : vector<32x32xf32> to vector<32x32xbf16>
    %cst_105 = arith.constant dense<0.000000e+00> : vector<32x8xf32>
    %270 = tpu.matmul %269, %256, %cst_105 {dimension_numbers = #tpu.dot_dimension_numbers<[1], [0], [0], [1], [0, 0, 1, 1], [], []>} : vector<32x32xbf16>, vector<32x8xbf16>, vector<32x8xf32> -> vector<32x8xf32>
    %271 = arith.truncf %270 : vector<32x8xf32> to vector<32x8xbf16>
    %272 = vector.extract_strided_slice %208 {offsets = [2, 0, 0], sizes = [1, 8, 32], strides = [1, 1, 1]} : vector<4x8x32xbf16> to vector<1x8x32xbf16>
    %273 = vector.shape_cast %272 : vector<1x8x32xbf16> to vector<8x32xbf16>
    %cst_106 = arith.constant dense<0.000000e+00> : vector<32x32xf32>
    %274 = tpu.matmul %271, %273, %cst_106 {dimension_numbers = #tpu.dot_dimension_numbers<[1], [0], [0], [1], [0, 0, 1, 1], [], []>} : vector<32x8xbf16>, vector<8x32xbf16>, vector<32x32xf32> -> vector<32x32xf32>
    %275 = arith.addf %253, %274 : vector<32x32xf32>
    %276 = vector.extract_strided_slice %202 {offsets = [0, 24], sizes = [32, 8], strides = [1, 1]} : vector<32x32xbf16> to vector<32x8xbf16>
    %277 = vector.extract_strided_slice %204 {offsets = [0, 24], sizes = [32, 8], strides = [1, 1]} : vector<32x32xbf16> to vector<32x8xbf16>
    %278 = vector.extract_strided_slice %206 {offsets = [0, 24], sizes = [32, 8], strides = [1, 1]} : vector<32x32xbf16> to vector<32x8xbf16>
    %cst_107 = arith.constant dense<0.000000e+00> : vector<32x32xf32>
    %279 = tpu.matmul %276, %277, %cst_107 {dimension_numbers = #tpu.dot_dimension_numbers<[1], [1], [0], [0], [0, 0, 1, 0], [], []>} : vector<32x8xbf16>, vector<32x8xbf16>, vector<32x32xf32> -> vector<32x32xf32>
    %280 = arith.addf %279, %7 : vector<32x32xf32>
    %cst_108 = arith.constant dense<0xFF800000> : vector<32xf32>
    %281 = vector.multi_reduction <maximumf>, %280, %cst_108 [1] : vector<32x32xf32> to vector<32xf32>
    %282 = vector.shape_cast %281 : vector<32xf32> to vector<32x1xf32>
    %283 = vector.broadcast %282 : vector<32x1xf32> to vector<32x32xf32>
    %284 = arith.subf %280, %283 : vector<32x32xf32>
    %285 = math.exp %284 : vector<32x32xf32>
    %cst_109 = arith.constant dense<0.000000e+00> : vector<32xf32>
    %286 = vector.multi_reduction <add>, %285, %cst_109 [1] : vector<32x32xf32> to vector<32xf32>
    %287 = vector.shape_cast %286 : vector<32xf32> to vector<32x1xf32>
    %288 = tpu.reciprocal %287 {approx = true} : vector<32x1xf32> -> vector<32x1xf32>
    %289 = vector.broadcast %288 : vector<32x1xf32> to vector<32x32xf32>
    %290 = arith.mulf %285, %289 : vector<32x32xf32>
    %291 = arith.truncf %290 : vector<32x32xf32> to vector<32x32xbf16>
    %cst_110 = arith.constant dense<0.000000e+00> : vector<32x8xf32>
    %292 = tpu.matmul %291, %278, %cst_110 {dimension_numbers = #tpu.dot_dimension_numbers<[1], [0], [0], [1], [0, 0, 1, 1], [], []>} : vector<32x32xbf16>, vector<32x8xbf16>, vector<32x8xf32> -> vector<32x8xf32>
    %293 = arith.truncf %292 : vector<32x8xf32> to vector<32x8xbf16>
    %294 = vector.extract_strided_slice %208 {offsets = [3, 0, 0], sizes = [1, 8, 32], strides = [1, 1, 1]} : vector<4x8x32xbf16> to vector<1x8x32xbf16>
    %295 = vector.shape_cast %294 : vector<1x8x32xbf16> to vector<8x32xbf16>
    %cst_111 = arith.constant dense<0.000000e+00> : vector<32x32xf32>
    %296 = tpu.matmul %293, %295, %cst_111 {dimension_numbers = #tpu.dot_dimension_numbers<[1], [0], [0], [1], [0, 0, 1, 1], [], []>} : vector<32x8xbf16>, vector<8x32xbf16>, vector<32x32xf32> -> vector<32x32xf32>
    %297 = arith.addf %275, %296 : vector<32x32xf32>
    %c1_112 = arith.constant 1 : index
    %c0_113 = arith.constant 0 : index
    %c0_114 = arith.constant 0 : index
    %298 = vector.load %arg7[%c1_112, %c0_113, %c0_114] : memref<2x1x32xf32, #tpu.memory_space<vmem>>, vector<1x1x32xf32>
    %299 = vector.shape_cast %298 : vector<1x1x32xf32> to vector<1x32xf32>
    %300 = vector.broadcast %299 : vector<1x32xf32> to vector<32x32xf32>
    %301 = arith.addf %297, %300 : vector<32x32xf32>
    %302 = arith.addf %192, %301 : vector<32x32xf32>
    %c1_115 = arith.constant 1 : index
    %c0_116 = arith.constant 0 : index
    %c0_117 = arith.constant 0 : index
    %303 = vector.load %arg12[%c1_115, %c0_116, %c0_117] : memref<2x1x32xf32, #tpu.memory_space<vmem>>, vector<1x1x32xf32>
    %304 = vector.shape_cast %303 : vector<1x1x32xf32> to vector<1x32xf32>
    %c1_118 = arith.constant 1 : index
    %c0_119 = arith.constant 0 : index
    %c0_120 = arith.constant 0 : index
    %305 = vector.load %arg13[%c1_118, %c0_119, %c0_120] : memref<2x1x32xf32, #tpu.memory_space<vmem>>, vector<1x1x32xf32>
    %306 = vector.shape_cast %305 : vector<1x1x32xf32> to vector<1x32xf32>
    %cst_121 = arith.constant dense<0.000000e+00> : vector<32xf32>
    %307 = vector.multi_reduction <add>, %302, %cst_121 [1] : vector<32x32xf32> to vector<32xf32>
    %308 = vector.shape_cast %307 : vector<32xf32> to vector<32x1xf32>
    %cst_122 = arith.constant 3.200000e+01 : f32
    %309 = vector.broadcast %cst_122 : f32 to vector<32x1xf32>
    %310 = arith.divf %308, %309 : vector<32x1xf32>
    %311 = arith.mulf %302, %302 : vector<32x32xf32>
    %cst_123 = arith.constant dense<0.000000e+00> : vector<32xf32>
    %312 = vector.multi_reduction <add>, %311, %cst_123 [1] : vector<32x32xf32> to vector<32xf32>
    %313 = vector.shape_cast %312 : vector<32xf32> to vector<32x1xf32>
    %cst_124 = arith.constant 3.200000e+01 : f32
    %314 = vector.broadcast %cst_124 : f32 to vector<32x1xf32>
    %315 = arith.divf %313, %314 : vector<32x1xf32>
    %316 = arith.mulf %310, %310 : vector<32x1xf32>
    %317 = arith.subf %315, %316 : vector<32x1xf32>
    %cst_125 = arith.constant 0.000000e+00 : f32
    %318 = vector.broadcast %cst_125 : f32 to vector<32x1xf32>
    %319 = arith.maximumf %317, %318 : vector<32x1xf32>
    %320 = vector.broadcast %310 : vector<32x1xf32> to vector<32x32xf32>
    %321 = arith.subf %302, %320 : vector<32x32xf32>
    %cst_126 = arith.constant 9.99999974E-6 : f32
    %322 = vector.broadcast %cst_126 : f32 to vector<32x1xf32>
    %323 = arith.addf %319, %322 : vector<32x1xf32>
    %324 = math.rsqrt %323 : vector<32x1xf32>
    %325 = vector.broadcast %324 : vector<32x1xf32> to vector<32x32xf32>
    %326 = arith.mulf %321, %325 : vector<32x32xf32>
    %327 = vector.broadcast %304 : vector<1x32xf32> to vector<32x32xf32>
    %328 = arith.mulf %326, %327 : vector<32x32xf32>
    %329 = vector.broadcast %306 : vector<1x32xf32> to vector<32x32xf32>
    %330 = arith.addf %328, %329 : vector<32x32xf32>
    %331 = arith.truncf %330 : vector<32x32xf32> to vector<32x32xbf16>
    %c1_127 = arith.constant 1 : index
    %c0_128 = arith.constant 0 : index
    %c0_129 = arith.constant 0 : index
    %332 = vector.load %arg8[%c1_127, %c0_128, %c0_129] : memref<2x32x64xbf16, #tpu.memory_space<vmem>>, vector<1x32x64xbf16>
    %333 = vector.shape_cast %332 : vector<1x32x64xbf16> to vector<32x64xbf16>
    %cst_130 = arith.constant dense<0.000000e+00> : vector<32x64xf32>
    %334 = tpu.matmul %331, %333, %cst_130 {dimension_numbers = #tpu.dot_dimension_numbers<[1], [0], [0], [1], [0, 0, 1, 1], [], []>} : vector<32x32xbf16>, vector<32x64xbf16>, vector<32x64xf32> -> vector<32x64xf32>
    %c1_131 = arith.constant 1 : index
    %c0_132 = arith.constant 0 : index
    %c0_133 = arith.constant 0 : index
    %335 = vector.load %arg9[%c1_131, %c0_132, %c0_133] : memref<2x1x64xf32, #tpu.memory_space<vmem>>, vector<1x1x64xf32>
    %336 = vector.shape_cast %335 : vector<1x1x64xf32> to vector<1x64xf32>
    %337 = vector.broadcast %336 : vector<1x64xf32> to vector<32x64xf32>
    %338 = arith.addf %334, %337 : vector<32x64xf32>
    %cst_134 = arith.constant 0.000000e+00 : f32
    %339 = vector.broadcast %cst_134 : f32 to vector<32x64xf32>
    %340 = arith.maximumf %338, %339 : vector<32x64xf32>
    %341 = arith.truncf %340 : vector<32x64xf32> to vector<32x64xbf16>
    %c1_135 = arith.constant 1 : index
    %c0_136 = arith.constant 0 : index
    %c0_137 = arith.constant 0 : index
    %342 = vector.load %arg10[%c1_135, %c0_136, %c0_137] : memref<2x64x32xbf16, #tpu.memory_space<vmem>>, vector<1x64x32xbf16>
    %343 = vector.shape_cast %342 : vector<1x64x32xbf16> to vector<64x32xbf16>
    %cst_138 = arith.constant dense<0.000000e+00> : vector<32x32xf32>
    %344 = tpu.matmul %341, %343, %cst_138 {dimension_numbers = #tpu.dot_dimension_numbers<[1], [0], [0], [1], [0, 0, 1, 1], [], []>} : vector<32x64xbf16>, vector<64x32xbf16>, vector<32x32xf32> -> vector<32x32xf32>
    %c1_139 = arith.constant 1 : index
    %c0_140 = arith.constant 0 : index
    %c0_141 = arith.constant 0 : index
    %345 = vector.load %arg11[%c1_139, %c0_140, %c0_141] : memref<2x1x32xf32, #tpu.memory_space<vmem>>, vector<1x1x32xf32>
    %346 = vector.shape_cast %345 : vector<1x1x32xf32> to vector<1x32xf32>
    %347 = vector.broadcast %346 : vector<1x32xf32> to vector<32x32xf32>
    %348 = arith.addf %344, %347 : vector<32x32xf32>
    %349 = arith.addf %330, %348 : vector<32x32xf32>
    %c1_142 = arith.constant 1 : index
    %c0_143 = arith.constant 0 : index
    %c0_144 = arith.constant 0 : index
    %350 = vector.load %arg14[%c1_142, %c0_143, %c0_144] : memref<2x1x32xf32, #tpu.memory_space<vmem>>, vector<1x1x32xf32>
    %351 = vector.shape_cast %350 : vector<1x1x32xf32> to vector<1x32xf32>
    %c1_145 = arith.constant 1 : index
    %c0_146 = arith.constant 0 : index
    %c0_147 = arith.constant 0 : index
    %352 = vector.load %arg15[%c1_145, %c0_146, %c0_147] : memref<2x1x32xf32, #tpu.memory_space<vmem>>, vector<1x1x32xf32>
    %353 = vector.shape_cast %352 : vector<1x1x32xf32> to vector<1x32xf32>
    %cst_148 = arith.constant dense<0.000000e+00> : vector<32xf32>
    %354 = vector.multi_reduction <add>, %349, %cst_148 [1] : vector<32x32xf32> to vector<32xf32>
    %355 = vector.shape_cast %354 : vector<32xf32> to vector<32x1xf32>
    %cst_149 = arith.constant 3.200000e+01 : f32
    %356 = vector.broadcast %cst_149 : f32 to vector<32x1xf32>
    %357 = arith.divf %355, %356 : vector<32x1xf32>
    %358 = arith.mulf %349, %349 : vector<32x32xf32>
    %cst_150 = arith.constant dense<0.000000e+00> : vector<32xf32>
    %359 = vector.multi_reduction <add>, %358, %cst_150 [1] : vector<32x32xf32> to vector<32xf32>
    %360 = vector.shape_cast %359 : vector<32xf32> to vector<32x1xf32>
    %cst_151 = arith.constant 3.200000e+01 : f32
    %361 = vector.broadcast %cst_151 : f32 to vector<32x1xf32>
    %362 = arith.divf %360, %361 : vector<32x1xf32>
    %363 = arith.mulf %357, %357 : vector<32x1xf32>
    %364 = arith.subf %362, %363 : vector<32x1xf32>
    %cst_152 = arith.constant 0.000000e+00 : f32
    %365 = vector.broadcast %cst_152 : f32 to vector<32x1xf32>
    %366 = arith.maximumf %364, %365 : vector<32x1xf32>
    %367 = vector.broadcast %357 : vector<32x1xf32> to vector<32x32xf32>
    %368 = arith.subf %349, %367 : vector<32x32xf32>
    %cst_153 = arith.constant 9.99999974E-6 : f32
    %369 = vector.broadcast %cst_153 : f32 to vector<32x1xf32>
    %370 = arith.addf %366, %369 : vector<32x1xf32>
    %371 = math.rsqrt %370 : vector<32x1xf32>
    %372 = vector.broadcast %371 : vector<32x1xf32> to vector<32x32xf32>
    %373 = arith.mulf %368, %372 : vector<32x32xf32>
    %374 = vector.broadcast %351 : vector<1x32xf32> to vector<32x32xf32>
    %375 = arith.mulf %373, %374 : vector<32x32xf32>
    %376 = vector.broadcast %353 : vector<1x32xf32> to vector<32x32xf32>
    %377 = arith.addf %375, %376 : vector<32x32xf32>
    %378 = vector.broadcast %5 : vector<32x1xf32> to vector<32x32xf32>
    %379 = arith.mulf %377, %378 : vector<32x32xf32>
    %c0_154 = arith.constant 0 : index
    %c0_155 = arith.constant 0 : index
    %c0_156 = arith.constant 0 : index
    %380 = vector.load %arg16[%c0_154, %c0_155, %c0_156] : memref<1x32x32xf32, #tpu.memory_space<vmem>>, vector<1x32x32xf32>
    %381 = vector.shape_cast %380 : vector<1x32x32xf32> to vector<32x32xf32>
    %382 = vector.shape_cast %379 : vector<32x32xf32> to vector<1x32x32xf32>
    tpu.vector_store %arg16[%c0_154, %c0_155, %c0_156], %382 {strides = array<i32>} : memref<1x32x32xf32, #tpu.memory_space<vmem>>, vector<1x32x32xf32>,
    return
  }
  func.func @transform_0(%arg0: i32) -> (i32, i32, i32) {
    %c0_i32 = arith.constant 0 : i32
    %c0_i32_0 = arith.constant 0 : i32
    %c0_i32_1 = arith.constant 0 : i32
    return %arg0, %c0_i32, %c0_i32_0 : i32, i32, i32
  }
  func.func @transform_1(%arg0: i32) -> (i32, i32, i32) {
    %c0_i32 = arith.constant 0 : i32
    %c0_i32_0 = arith.constant 0 : i32
    %c0_i32_1 = arith.constant 0 : i32
    return %arg0, %c0_i32, %c0_i32_0 : i32, i32, i32
  }
  func.func @transform_2(%arg0: i32) -> (i32, i32, i32) {
    %c0_i32 = arith.constant 0 : i32
    %c0_i32_0 = arith.constant 0 : i32
    %c0_i32_1 = arith.constant 0 : i32
    return %arg0, %c0_i32, %c0_i32_0 : i32, i32, i32
  }
  func.func @transform_3(%arg0: i32) -> (i32, i32, i32) {
    %c0_i32 = arith.constant 0 : i32
    %c0_i32_0 = arith.constant 0 : i32
    %c0_i32_1 = arith.constant 0 : i32
    %c0_i32_2 = arith.constant 0 : i32
    return %c0_i32, %c0_i32_0, %c0_i32_1 : i32, i32, i32
  }
  func.func @transform_4(%arg0: i32) -> (i32, i32, i32) {
    %c0_i32 = arith.constant 0 : i32
    %c0_i32_0 = arith.constant 0 : i32
    %c0_i32_1 = arith.constant 0 : i32
    %c0_i32_2 = arith.constant 0 : i32
    return %c0_i32, %c0_i32_0, %c0_i32_1 : i32, i32, i32
  }
  func.func @transform_5(%arg0: i32) -> (i32, i32, i32, i32) {
    %c0_i32 = arith.constant 0 : i32
    %c0_i32_0 = arith.constant 0 : i32
    %c0_i32_1 = arith.constant 0 : i32
    %c0_i32_2 = arith.constant 0 : i32
    %c0_i32_3 = arith.constant 0 : i32
    return %c0_i32, %c0_i32_0, %c0_i32_1, %c0_i32_2 : i32, i32, i32, i32
  }
  func.func @transform_6(%arg0: i32) -> (i32, i32, i32) {
    %c0_i32 = arith.constant 0 : i32
    %c0_i32_0 = arith.constant 0 : i32
    %c0_i32_1 = arith.constant 0 : i32
    %c0_i32_2 = arith.constant 0 : i32
    return %c0_i32, %c0_i32_0, %c0_i32_1 : i32, i32, i32
  }
  func.func @transform_7(%arg0: i32) -> (i32, i32, i32) {
    %c0_i32 = arith.constant 0 : i32
    %c0_i32_0 = arith.constant 0 : i32
    %c0_i32_1 = arith.constant 0 : i32
    %c0_i32_2 = arith.constant 0 : i32
    return %c0_i32, %c0_i32_0, %c0_i32_1 : i32, i32, i32
  }
  func.func @transform_8(%arg0: i32) -> (i32, i32, i32) {
    %c0_i32 = arith.constant 0 : i32
    %c0_i32_0 = arith.constant 0 : i32
    %c0_i32_1 = arith.constant 0 : i32
    %c0_i32_2 = arith.constant 0 : i32
    return %c0_i32, %c0_i32_0, %c0_i32_1 : i32, i32, i32
  }
  func.func @transform_9(%arg0: i32) -> (i32, i32, i32) {
    %c0_i32 = arith.constant 0 : i32
    %c0_i32_0 = arith.constant 0 : i32
    %c0_i32_1 = arith.constant 0 : i32
    %c0_i32_2 = arith.constant 0 : i32
    return %c0_i32, %c0_i32_0, %c0_i32_1 : i32, i32, i32
  }
  func.func @transform_10(%arg0: i32) -> (i32, i32, i32) {
    %c0_i32 = arith.constant 0 : i32
    %c0_i32_0 = arith.constant 0 : i32
    %c0_i32_1 = arith.constant 0 : i32
    %c0_i32_2 = arith.constant 0 : i32
    return %c0_i32, %c0_i32_0, %c0_i32_1 : i32, i32, i32
  }
  func.func @transform_11(%arg0: i32) -> (i32, i32, i32) {
    %c0_i32 = arith.constant 0 : i32
    %c0_i32_0 = arith.constant 0 : i32
    %c0_i32_1 = arith.constant 0 : i32
    %c0_i32_2 = arith.constant 0 : i32
    return %c0_i32, %c0_i32_0, %c0_i32_1 : i32, i32, i32
  }
  func.func @transform_12(%arg0: i32) -> (i32, i32, i32) {
    %c0_i32 = arith.constant 0 : i32
    %c0_i32_0 = arith.constant 0 : i32
    %c0_i32_1 = arith.constant 0 : i32
    %c0_i32_2 = arith.constant 0 : i32
    return %c0_i32, %c0_i32_0, %c0_i32_1 : i32, i32, i32
  }
  func.func @transform_13(%arg0: i32) -> (i32, i32, i32) {
    %c0_i32 = arith.constant 0 : i32
    %c0_i32_0 = arith.constant 0 : i32
    %c0_i32_1 = arith.constant 0 : i32
    %c0_i32_2 = arith.constant 0 : i32
    return %c0_i32, %c0_i32_0, %c0_i32_1 : i32, i32, i32
  }
  func.func @transform_14(%arg0: i32) -> (i32, i32, i32) {
    %c0_i32 = arith.constant 0 : i32
    %c0_i32_0 = arith.constant 0 : i32
    %c0_i32_1 = arith.constant 0 : i32
    %c0_i32_2 = arith.constant 0 : i32
    return %c0_i32, %c0_i32_0, %c0_i32_1 : i32, i32, i32
  }
  func.func @transform_15(%arg0: i32) -> (i32, i32, i32) {
    %c0_i32 = arith.constant 0 : i32
    %c0_i32_0 = arith.constant 0 : i32
    %c0_i32_1 = arith.constant 0 : i32
    return %arg0, %c0_i32, %c0_i32_0 : i32, i32, i32
  }
}

</mosaic_0001>

<llo_original>
// kernel: tpu_custom_call.1
$region0: #{tpu_custom_call.1}
  #allocation0 [shape = 'u32[]', space=smem, size = 0x4, offset = 0x4, fixed_abs, tag = 'smem constant byte address 0x4 - core index']
  #allocation1 [shape = 'u32[144,128]{1,0:T(1,128)}', space=vmem, size = 0x12000, scoped, tag = 'internal scratch']
  %s0 = inlined_call_operand.vmem [shape: f32[2,32,32], index: 0, kind: input, shape index: {}]
  %s1 = inlined_call_operand.vmem [shape: f32[2,1,32], index: 1, kind: input, shape index: {}]
  %s2 = inlined_call_operand.vmem [shape: f32[2,32,1], index: 2, kind: input, shape index: {}]
  %s3 = inlined_call_operand.vmem [shape: bf16[2,32,96], index: 3, kind: input, shape index: {}]
  %s4 = inlined_call_operand.vmem [shape: f32[2,1,96], index: 4, kind: input, shape index: {}]
  %s5 = inlined_call_operand.vmem [shape: bf16[2,4,8,32], index: 5, kind: input, shape index: {}]
  %s6 = inlined_call_operand.vmem [shape: f32[2,1,32], index: 6, kind: input, shape index: {}]
  %s7 = inlined_call_operand.hbm [shape: bf16[2,32,64], index: 7, kind: input, shape index: {}]
  %s8 = inlined_call_operand.vmem [shape: f32[2,1,64], index: 8, kind: input, shape index: {}]
  %s9 = inlined_call_operand.vmem [shape: bf16[2,64,32], index: 9, kind: input, shape index: {}]
  %s10 = inlined_call_operand.vmem [shape: f32[2,1,32], index: 10, kind: input, shape index: {}]
  %s11 = inlined_call_operand.vmem [shape: f32[2,1,32], index: 11, kind: input, shape index: {}]
  %s12 = inlined_call_operand.vmem [shape: f32[2,1,32], index: 12, kind: input, shape index: {}]
  %s13 = inlined_call_operand.vmem [shape: f32[2,1,32], index: 13, kind: input, shape index: {}]
  %s14 = inlined_call_operand.vmem [shape: f32[2,1,32], index: 14, kind: input, shape index: {}]
  %s15 = inlined_call_operand.hbm [shape: f32[2,32,32], index: 15, kind: output, shape index: {}]
  %s16 = sld [smem:[#allocation0]]
  $region97: #{tpu_custom_call.1} parent=0
    _
  %s18 = ssub.s32 1, %s16
  %s19 = scalar_select 0, %s18, %s16
  $region1: #{tpu_custom_call.1} parent=0
    #allocation2 [shape = 'u8[16384]{0}', space=vmem, size = 0x4000, scoped, tag = 'input window, operand 7, single buffered']
    #allocation3 [shape = 's32[2]{0}', space=sflag, size = 0x8, scoped, tag = 'scoped memory for tpu_custom_call.1']
    #allocation4 [shape = 's32[2]{0}', space=sflag, size = 0x8, scoped, tag = 'scoped memory for tpu_custom_call.1']
    #allocation5 [shape = 'u8[32768]{0}', space=vmem, size = 0x8000, scoped, tag = 'output window, operand 0']
    %20 = vsyncpa [#allocation3], 0
    %21 = vsyncpa [#allocation4], 0
    %s22 = scalar_lea.sflag [#allocation4], 1
    %23 = vsyncpa %s22, 0
    loop: start=0, step=1, limit=4
    $region2: #{tpu_custom_call.1} parent=1 // loop_pre_header
      _
    $region3: #{tpu_custom_call.1} parent=1 // loop_header
      %s25 = sphi 0, %s29
      %p26 = scmp.ge.s32.totalorder %s25, 4
      %s35 = sphi 0, %s37
      %s38 = sphi 0, %s35
      %s39 = sphi 0, %s38
      %s55 = sphi 0, %s39
      %s61 = sphi 0, %s63
      %s64 = sphi 0, %s61
      %s65 = sphi 0, %s64
      %s81 = sphi 0, %s65
      %s87 = sphi 0, %s89
      %s90 = sphi 0, %s87
      %s91 = sphi 0, %s90
      %s107 = sphi 0, %s91
      %s111 = sphi 0, %s111
      %s113 = sphi 0, %s111
      %s114 = sphi 0, %s113
      %s128 = sphi 0, %s114
      %s132 = sphi 0, %s132
      %s134 = sphi 0, %s132
      %s135 = sphi 0, %s134
      %s149 = sphi 0, %s135
      %s153 = sphi 0, %s153
      %s155 = sphi 0, %s153
      %s156 = sphi 0, %s155
      %s170 = sphi 0, %s156
      %s174 = sphi 0, %s174
      %s176 = sphi 0, %s174
      %s177 = sphi 0, %s176
      %s191 = sphi 0, %s177
      %s195 = sphi 0, %s195
      %s197 = sphi 0, %s195
      %s198 = sphi 0, %s197
      %s212 = sphi 0, %s198
      %s216 = sphi 0, %s216
      %s218 = sphi 0, %s216
      %s219 = sphi 0, %s218
      %s233 = sphi 0, %s219
      %s237 = sphi 0, %s237
      %s239 = sphi 0, %s237
      %s240 = sphi 0, %s239
      %s254 = sphi 0, %s240
      %s258 = sphi 0, %s258
      %s260 = sphi 0, %s258
      %s261 = sphi 0, %s260
      %s275 = sphi 0, %s261
      %s279 = sphi 0, %s279
      %s281 = sphi 0, %s279
      %s282 = sphi 0, %s281
      %s296 = sphi 0, %s282
      %s300 = sphi 0, %s300
      %s302 = sphi 0, %s300
      %s303 = sphi 0, %s302
      %s317 = sphi 0, %s303
      %s321 = sphi 0, %s321
      %s323 = sphi 0, %s321
      %s324 = sphi 0, %s323
      %s338 = sphi 0, %s324
      %s342 = sphi 0, %s342
      %s344 = sphi 0, %s342
      %s345 = sphi 0, %s344
      %s359 = sphi 0, %s345
      %s365 = sphi 0, %s367
      %s368 = sphi 0, %s365
      %s369 = sphi 0, %s368
      %s385 = sphi 0, %s369
    $region4: #{tpu_custom_call.1} parent=1 // loop_header_branch
      %28 = sbr.rel (%p26) target = $region8
    $region5: #{tpu_custom_call.1} parent=1 // loop_body
      %s30 = ssub.s32 %s25, 1
      %s31 = ssub.s32 %s25, 2
      %s32 = sadd.s32 %s25, 1
      %s33 = ssub.s32 %s25, %s32
      %p34 = scmp.eq.s32.totalorder %s33, 0
      %s36 = sadd.s32 %s35, 1
      %s37 = scalar_select %p34, %s35, %s36
      %p40 = pneg %p34
      %p41 = scmp.eq.s32.totalorder %s25, 1
      %p42 = por %p40, %p41
      %p43 = scmp.ne.s32.totalorder %s35, %s38
      %p44 = scmp.eq.s32.totalorder %s25, 0
      %p45 = por %p43, %p44
      %p46 = scmp.ne.s32.totalorder %s35, %s38
      %p47 = scmp.eq.s32.totalorder %s30, 1
      %p48 = por %p46, %p47
      %p49 = scmp.ne.s32.totalorder %s38, %s39
      %p50 = scmp.eq.s32.totalorder %s30, 0
      %p51 = por %p49, %p50
      %p52 = scmp.ne.s32.totalorder %s38, %s39
      %p53 = scmp.eq.s32.totalorder %s31, 1
      %p54 = por %p52, %p53
      %p56 = scmp.ne.s32.totalorder %s39, %s55
      %p57 = scmp.eq.s32.totalorder %s31, 0
      %p58 = por %p56, %p57
      %s59 = ssub.s32 %s25, %s32
      %p60 = scmp.eq.s32.totalorder %s59, 0
      %s62 = sadd.s32 %s61, 1
      %s63 = scalar_select %p60, %s61, %s62
      %p66 = pneg %p60
      %p67 = scmp.eq.s32.totalorder %s25, 1
      %p68 = por %p66, %p67
      %p69 = scmp.ne.s32.totalorder %s61, %s64
      %p70 = scmp.eq.s32.totalorder %s25, 0
      %p71 = por %p69, %p70
      %p72 = scmp.ne.s32.totalorder %s61, %s64
      %p73 = scmp.eq.s32.totalorder %s30, 1
      %p74 = por %p72, %p73
      %p75 = scmp.ne.s32.totalorder %s64, %s65
      %p76 = scmp.eq.s32.totalorder %s30, 0
      %p77 = por %p75, %p76
      %p78 = scmp.ne.s32.totalorder %s64, %s65
      %p79 = scmp.eq.s32.totalorder %s31, 1
      %p80 = por %p78, %p79
      %p82 = scmp.ne.s32.totalorder %s65, %s81
      %p83 = scmp.eq.s32.totalorder %s31, 0
      %p84 = por %p82, %p83
      %s85 = ssub.s32 %s25, %s32
      %p86 = scmp.eq.s32.totalorder %s85, 0
      %s88 = sadd.s32 %s87, 1
      %s89 = scalar_select %p86, %s87, %s88
      %p92 = pneg %p86
      %p93 = scmp.eq.s32.totalorder %s25, 1
      %p94 = por %p92, %p93
      %p95 = scmp.ne.s32.totalorder %s87, %s90
      %p96 = scmp.eq.s32.totalorder %s25, 0
      %p97 = por %p95, %p96
      %p98 = scmp.ne.s32.totalorder %s87, %s90
      %p99 = scmp.eq.s32.totalorder %s30, 1
      %p100 = por %p98, %p99
      %p101 = scmp.ne.s32.totalorder %s90, %s91
      %p102 = scmp.eq.s32.totalorder %s30, 0
      %p103 = por %p101, %p102
      %p104 = scmp.ne.s32.totalorder %s90, %s91
      %p105 = scmp.eq.s32.totalorder %s31, 1
      %p106 = por %p104, %p105
      %p108 = scmp.ne.s32.totalorder %s91, %s107
      %p109 = scmp.eq.s32.totalorder %s31, 0
      %p110 = por %p108, %p109
      %s112 = sadd.s32 %s111, 1
      %p115 = scmp.eq.s32.totalorder %s25, 1
      %p116 = scmp.ne.s32.totalorder %s111, %s113
      %p117 = scmp.eq.s32.totalorder %s25, 0
      %p118 = por %p116, %p117
      %p119 = scmp.ne.s32.totalorder %s111, %s113
      %p120 = scmp.eq.s32.totalorder %s30, 1
      %p121 = por %p119, %p120
      %p122 = scmp.ne.s32.totalorder %s113, %s114
      %p123 = scmp.eq.s32.totalorder %s30, 0
      %p124 = por %p122, %p123
      %p125 = scmp.ne.s32.totalorder %s113, %s114
      %p126 = scmp.eq.s32.totalorder %s31, 1
      %p127 = por %p125, %p126
      %p129 = scmp.ne.s32.totalorder %s114, %s128
      %p130 = scmp.eq.s32.totalorder %s31, 0
      %p131 = por %p129, %p130
      %s133 = sadd.s32 %s132, 1
      %p136 = scmp.eq.s32.totalorder %s25, 1
      %p137 = scmp.ne.s32.totalorder %s132, %s134
      %p138 = scmp.eq.s32.totalorder %s25, 0
      %p139 = por %p137, %p138
      %p140 = scmp.ne.s32.totalorder %s132, %s134
      %p141 = scmp.eq.s32.totalorder %s30, 1
      %p142 = por %p140, %p141
      %p143 = scmp.ne.s32.totalorder %s134, %s135
      %p144 = scmp.eq.s32.totalorder %s30, 0
      %p145 = por %p143, %p144
      %p146 = scmp.ne.s32.totalorder %s134, %s135
      %p147 = scmp.eq.s32.totalorder %s31, 1
      %p148 = por %p146, %p147
      %p150 = scmp.ne.s32.totalorder %s135, %s149
      %p151 = scmp.eq.s32.totalorder %s31, 0
      %p152 = por %p150, %p151
      %s154 = sadd.s32 %s153, 1
      %p157 = scmp.eq.s32.totalorder %s25, 1
      %p158 = scmp.ne.s32.totalorder %s153, %s155
      %p159 = scmp.eq.s32.totalorder %s25, 0
      %p160 = por %p158, %p159
      %p161 = scmp.ne.s32.totalorder %s153, %s155
      %p162 = scmp.eq.s32.totalorder %s30, 1
      %p163 = por %p161, %p162
      %p164 = scmp.ne.s32.totalorder %s155, %s156
      %p165 = scmp.eq.s32.totalorder %s30, 0
      %p166 = por %p164, %p165
      %p167 = scmp.ne.s32.totalorder %s155, %s156
      %p168 = scmp.eq.s32.totalorder %s31, 1
      %p169 = por %p167, %p168
      %p171 = scmp.ne.s32.totalorder %s156, %s170
      %p172 = scmp.eq.s32.totalorder %s31, 0
      %p173 = por %p171, %p172
      %s175 = sadd.s32 %s174, 1
      %p178 = scmp.eq.s32.totalorder %s25, 1
      %p179 = scmp.ne.s32.totalorder %s174, %s176
      %p180 = scmp.eq.s32.totalorder %s25, 0
      %p181 = por %p179, %p180
      %p182 = scmp.ne.s32.totalorder %s174, %s176
      %p183 = scmp.eq.s32.totalorder %s30, 1
      %p184 = por %p182, %p183
      %p185 = scmp.ne.s32.totalorder %s176, %s177
      %p186 = scmp.eq.s32.totalorder %s30, 0
      %p187 = por %p185, %p186
      %p188 = scmp.ne.s32.totalorder %s176, %s177
      %p189 = scmp.eq.s32.totalorder %s31, 1
      %p190 = por %p188, %p189
      %p192 = scmp.ne.s32.totalorder %s177, %s191
      %p193 = scmp.eq.s32.totalorder %s31, 0
      %p194 = por %p192, %p193
      %s196 = sadd.s32 %s195, 1
      %p199 = scmp.eq.s32.totalorder %s25, 1
      %p200 = scmp.ne.s32.totalorder %s195, %s197
      %p201 = scmp.eq.s32.totalorder %s25, 0
      %p202 = por %p200, %p201
      %p203 = scmp.ne.s32.totalorder %s195, %s197
      %p204 = scmp.eq.s32.totalorder %s30, 1
      %p205 = por %p203, %p204
      %p206 = scmp.ne.s32.totalorder %s197, %s198
      %p207 = scmp.eq.s32.totalorder %s30, 0
      %p208 = por %p206, %p207
      %p209 = scmp.ne.s32.totalorder %s197, %s198
      %p210 = scmp.eq.s32.totalorder %s31, 1
      %p211 = por %p209, %p210
      %p213 = scmp.ne.s32.totalorder %s198, %s212
      %p214 = scmp.eq.s32.totalorder %s31, 0
      %p215 = por %p213, %p214
      %s217 = sadd.s32 %s216, 1
      %p220 = scmp.eq.s32.totalorder %s25, 1
      %p221 = scmp.ne.s32.totalorder %s216, %s218
      %p222 = scmp.eq.s32.totalorder %s25, 0
      %p223 = por %p221, %p222
      %p224 = scmp.ne.s32.totalorder %s216, %s218
      %p225 = scmp.eq.s32.totalorder %s30, 1
      %p226 = por %p224, %p225
      %p227 = scmp.ne.s32.totalorder %s218, %s219
      %p228 = scmp.eq.s32.totalorder %s30, 0
      %p229 = por %p227, %p228
      %p230 = scmp.ne.s32.totalorder %s218, %s219
      %p231 = scmp.eq.s32.totalorder %s31, 1
      %p232 = por %p230, %p231
      %p234 = scmp.ne.s32.totalorder %s219, %s233
      %p235 = scmp.eq.s32.totalorder %s31, 0
      %p236 = por %p234, %p235
      %s238 = sadd.s32 %s237, 1
      %p241 = scmp.eq.s32.totalorder %s25, 1
      %p242 = scmp.ne.s32.totalorder %s237, %s239
      %p243 = scmp.eq.s32.totalorder %s25, 0
      %p244 = por %p242, %p243
      %p245 = scmp.ne.s32.totalorder %s237, %s239
      %p246 = scmp.eq.s32.totalorder %s30, 1
      %p247 = por %p245, %p246
      %p248 = scmp.ne.s32.totalorder %s239, %s240
      %p249 = scmp.eq.s32.totalorder %s30, 0
      %p250 = por %p248, %p249
      %p251 = scmp.ne.s32.totalorder %s239, %s240
      %p252 = scmp.eq.s32.totalorder %s31, 1
      %p253 = por %p251, %p252
      %p255 = scmp.ne.s32.totalorder %s240, %s254
      %p256 = scmp.eq.s32.totalorder %s31, 0
      %p257 = por %p255, %p256
      %s259 = sadd.s32 %s258, 1
      %p262 = scmp.eq.s32.totalorder %s25, 1
      %p263 = scmp.ne.s32.totalorder %s258, %s260
      %p264 = scmp.eq.s32.totalorder %s25, 0
      %p265 = por %p263, %p264
      %p266 = scmp.ne.s32.totalorder %s258, %s260
      %p267 = scmp.eq.s32.totalorder %s30, 1
      %p268 = por %p266, %p267
      %p269 = scmp.ne.s32.totalorder %s260, %s261
      %p270 = scmp.eq.s32.totalorder %s30, 0
      %p271 = por %p269, %p270
      %p272 = scmp.ne.s32.totalorder %s260, %s261
      %p273 = scmp.eq.s32.totalorder %s31, 1
      %p274 = por %p272, %p273
      %p276 = scmp.ne.s32.totalorder %s261, %s275
      %p277 = scmp.eq.s32.totalorder %s31, 0
      %p278 = por %p276, %p277
      %s280 = sadd.s32 %s279, 1
      %p283 = scmp.eq.s32.totalorder %s25, 1
      %p284 = scmp.ne.s32.totalorder %s279, %s281
      %p285 = scmp.eq.s32.totalorder %s25, 0
      %p286 = por %p284, %p285
      %p287 = scmp.ne.s32.totalorder %s279, %s281
      %p288 = scmp.eq.s32.totalorder %s30, 1
      %p289 = por %p287, %p288
      %p290 = scmp.ne.s32.totalorder %s281, %s282
      %p291 = scmp.eq.s32.totalorder %s30, 0
      %p292 = por %p290, %p291
      %p293 = scmp.ne.s32.totalorder %s281, %s282
      %p294 = scmp.eq.s32.totalorder %s31, 1
      %p295 = por %p293, %p294
      %p297 = scmp.ne.s32.totalorder %s282, %s296
      %p298 = scmp.eq.s32.totalorder %s31, 0
      %p299 = por %p297, %p298
      %s301 = sadd.s32 %s300, 1
      %p304 = scmp.eq.s32.totalorder %s25, 1
      %p305 = scmp.ne.s32.totalorder %s300, %s302
      %p306 = scmp.eq.s32.totalorder %s25, 0
      %p307 = por %p305, %p306
      %p308 = scmp.ne.s32.totalorder %s300, %s302
      %p309 = scmp.eq.s32.totalorder %s30, 1
      %p310 = por %p308, %p309
      %p311 = scmp.ne.s32.totalorder %s302, %s303
      %p312 = scmp.eq.s32.totalorder %s30, 0
      %p313 = por %p311, %p312
      %p314 = scmp.ne.s32.totalorder %s302, %s303
      %p315 = scmp.eq.s32.totalorder %s31, 1
      %p316 = por %p314, %p315
      %p318 = scmp.ne.s32.totalorder %s303, %s317
      %p319 = scmp.eq.s32.totalorder %s31, 0
      %p320 = por %p318, %p319
      %s322 = sadd.s32 %s321, 1
      %p325 = scmp.eq.s32.totalorder %s25, 1
      %p326 = scmp.ne.s32.totalorder %s321, %s323
      %p327 = scmp.eq.s32.totalorder %s25, 0
      %p328 = por %p326, %p327
      %p329 = scmp.ne.s32.totalorder %s321, %s323
      %p330 = scmp.eq.s32.totalorder %s30, 1
      %p331 = por %p329, %p330
      %p332 = scmp.ne.s32.totalorder %s323, %s324
      %p333 = scmp.eq.s32.totalorder %s30, 0
      %p334 = por %p332, %p333
      %p335 = scmp.ne.s32.totalorder %s323, %s324
      %p336 = scmp.eq.s32.totalorder %s31, 1
      %p337 = por %p335, %p336
      %p339 = scmp.ne.s32.totalorder %s324, %s338
      %p340 = scmp.eq.s32.totalorder %s31, 0
      %p341 = por %p339, %p340
      %s343 = sadd.s32 %s342, 1
      %p346 = scmp.eq.s32.totalorder %s25, 1
      %p347 = scmp.ne.s32.totalorder %s342, %s344
      %p348 = scmp.eq.s32.totalorder %s25, 0
      %p349 = por %p347, %p348
      %p350 = scmp.ne.s32.totalorder %s342, %s344
      %p351 = scmp.eq.s32.totalorder %s30, 1
      %p352 = por %p350, %p351
      %p353 = scmp.ne.s32.totalorder %s344, %s345
      %p354 = scmp.eq.s32.totalorder %s30, 0
      %p355 = por %p353, %p354
      %p356 = scmp.ne.s32.totalorder %s344, %s345
      %p357 = scmp.eq.s32.totalorder %s31, 1
      %p358 = por %p356, %p357
      %p360 = scmp.ne.s32.totalorder %s345, %s359
      %p361 = scmp.eq.s32.totalorder %s31, 0
      %p362 = por %p360, %p361
      %s363 = ssub.s32 %s25, %s32
      %p364 = scmp.eq.s32.totalorder %s363, 0
      %s366 = sadd.s32 %s365, 1
      %s367 = scalar_select %p364, %s365, %s366
      %p370 = pneg %p364
      %p371 = scmp.eq.s32.totalorder %s25, 1
      %p372 = por %p370, %p371
      %p373 = scmp.ne.s32.totalorder %s365, %s368
      %p374 = scmp.eq.s32.totalorder %s25, 0
      %p375 = por %p373, %p374
      %p376 = scmp.ne.s32.totalorder %s365, %s368
      %p377 = scmp.eq.s32.totalorder %s30, 1
      %p378 = por %p376, %p377
      %p379 = scmp.ne.s32.totalorder %s368, %s369
      %p380 = scmp.eq.s32.totalorder %s30, 0
      %p381 = por %p379, %p380
      %p382 = scmp.ne.s32.totalorder %s368, %s369
      %p383 = scmp.eq.s32.totalorder %s31, 1
      %p384 = por %p382, %p383
      %p386 = scmp.ne.s32.totalorder %s369, %s385
      %p387 = scmp.eq.s32.totalorder %s31, 0
      %p388 = por %p386, %p387
      %p389 = scmp.le.s32.totalorder 1, %s25
      %p390 = scmp.lt.s32.totalorder %s25, 3
      %p391 = pnand %p389, %p390
      %p392 = pneg %p391
      // Predicated region
      $region9: #{tpu_custom_call.1} parent=5 // pred_check
        _
      $region10: #{tpu_custom_call.1} parent=5 // pred_check_branch
        %394 = sbr.rel (%p391) target = $region12
      $region11: #{tpu_custom_call.1} parent=5 // pred_region
        %s395 = ssub.s32 %s25, 1
        // Predicated region
        $region13: #{tpu_custom_call.1} parent=11 // pred_check
          %p396 = pneg %p124
        $region14: #{tpu_custom_call.1} parent=11 // pred_check_branch
          %398 = sbr.rel (%p396) target = $region16
        $region15: #{tpu_custom_call.1} parent=11 // pred_region
          _
        $region16: #{tpu_custom_call.1} parent=11 // pred_fallthru
          _
        // Predicated region
        $region17: #{tpu_custom_call.1} parent=11 // pred_check
          %p399 = pneg %p145
        $region18: #{tpu_custom_call.1} parent=11 // pred_check_branch
          %401 = sbr.rel (%p399) target = $region20
        $region19: #{tpu_custom_call.1} parent=11 // pred_region
          _
        $region20: #{tpu_custom_call.1} parent=11 // pred_fallthru
          _
        // Predicated region
        $region21: #{tpu_custom_call.1} parent=11 // pred_check
          %p402 = pneg %p166
        $region22: #{tpu_custom_call.1} parent=11 // pred_check_branch
          %404 = sbr.rel (%p402) target = $region24
        $region23: #{tpu_custom_call.1} parent=11 // pred_region
          _
        $region24: #{tpu_custom_call.1} parent=11 // pred_fallthru
          _
        // Predicated region
        $region25: #{tpu_custom_call.1} parent=11 // pred_check
          %p405 = pneg %p187
        $region26: #{tpu_custom_call.1} parent=11 // pred_check_branch
          %407 = sbr.rel (%p405) target = $region28
        $region27: #{tpu_custom_call.1} parent=11 // pred_region
          _
        $region28: #{tpu_custom_call.1} parent=11 // pred_fallthru
          _
        // Predicated region
        $region29: #{tpu_custom_call.1} parent=11 // pred_check
          %p408 = pneg %p208
        $region30: #{tpu_custom_call.1} parent=11 // pred_check_branch
          %410 = sbr.rel (%p408) target = $region32
        $region31: #{tpu_custom_call.1} parent=11 // pred_region
          %s412 = ssub.s32 512, 512
          %413 = vsyncadd [#allocation3], %s412
          %s414 = sshll.u32 [#allocation2], 4
          %s415 = int_to_ptr.vmem [resolvable:$true] %s414
          %420 = dma.hbm_to_vmem [thread:$0]  %s7, 512, %s415, [#allocation3], 64, 64, 4
        $region32: #{tpu_custom_call.1} parent=11 // pred_fallthru
          _
        // Predicated region
        $region33: #{tpu_custom_call.1} parent=11 // pred_check
          %p421 = pneg %p229
        $region34: #{tpu_custom_call.1} parent=11 // pred_check_branch
          %423 = sbr.rel (%p421) target = $region36
        $region35: #{tpu_custom_call.1} parent=11 // pred_region
          _
        $region36: #{tpu_custom_call.1} parent=11 // pred_fallthru
          _
        // Predicated region
        $region37: #{tpu_custom_call.1} parent=11 // pred_check
          %p424 = pneg %p250
        $region38: #{tpu_custom_call.1} parent=11 // pred_check_branch
          %426 = sbr.rel (%p424) target = $region40
        $region39: #{tpu_custom_call.1} parent=11 // pred_region
          _
        $region40: #{tpu_custom_call.1} parent=11 // pred_fallthru
          _
        // Predicated region
        $region41: #{tpu_custom_call.1} parent=11 // pred_check
          %p427 = pneg %p271
        $region42: #{tpu_custom_call.1} parent=11 // pred_check_branch
          %429 = sbr.rel (%p427) target = $region44
        $region43: #{tpu_custom_call.1} parent=11 // pred_region
          _
        $region44: #{tpu_custom_call.1} parent=11 // pred_fallthru
          _
        // Predicated region
        $region45: #{tpu_custom_call.1} parent=11 // pred_check
          %p430 = pneg %p292
        $region46: #{tpu_custom_call.1} parent=11 // pred_check_branch
          %432 = sbr.rel (%p430) target = $region48
        $region47: #{tpu_custom_call.1} parent=11 // pred_region
          _
        $region48: #{tpu_custom_call.1} parent=11 // pred_fallthru
          _
        // Predicated region
        $region49: #{tpu_custom_call.1} parent=11 // pred_check
          %p433 = pneg %p313
        $region50: #{tpu_custom_call.1} parent=11 // pred_check_branch
          %435 = sbr.rel (%p433) target = $region52
        $region51: #{tpu_custom_call.1} parent=11 // pred_region
          _
        $region52: #{tpu_custom_call.1} parent=11 // pred_fallthru
          _
        // Predicated region
        $region53: #{tpu_custom_call.1} parent=11 // pred_check
          %p436 = pneg %p334
        $region54: #{tpu_custom_call.1} parent=11 // pred_check_branch
          %438 = sbr.rel (%p436) target = $region56
        $region55: #{tpu_custom_call.1} parent=11 // pred_region
          _
        $region56: #{tpu_custom_call.1} parent=11 // pred_fallthru
          _
        // Predicated region
        $region57: #{tpu_custom_call.1} parent=11 // pred_check
          %p439 = pneg %p355
        $region58: #{tpu_custom_call.1} parent=11 // pred_check_branch
          %441 = sbr.rel (%p439) target = $region60
        $region59: #{tpu_custom_call.1} parent=11 // pred_region
          _
        $region60: #{tpu_custom_call.1} parent=11 // pred_fallthru
          _
      $region12: #{tpu_custom_call.1} parent=5 // pred_fallthru
        _
      %p442 = scmp.lt.s32.totalorder %s25, 2
      // Predicated region
      $region61: #{tpu_custom_call.1} parent=5 // pred_check
        %p443 = pneg %p442
      $region62: #{tpu_custom_call.1} parent=5 // pred_check_branch
        %445 = sbr.rel (%p443) target = $region64
      $region63: #{tpu_custom_call.1} parent=5 // pred_region
        // Predicated region
        $region65: #{tpu_custom_call.1} parent=63 // pred_check
          %p446 = pneg %p45
        $region66: #{tpu_custom_call.1} parent=63 // pred_check_branch
          %448 = sbr.rel (%p446) target = $region68
        $region67: #{tpu_custom_call.1} parent=63 // pred_region
          %p449 = scmp.lt.s32.totalorder %s25, 1
          %s450 = scalar_select %p449, %s25, 1
          %s451 = smul.addr %s450, 4
          %s452 = smul.addr %s451, 8
          %s453 = scalar_lea.vmem %s0, %s452
        $region68: #{tpu_custom_call.1} parent=63 // pred_fallthru
          _
        // Predicated region
        $region69: #{tpu_custom_call.1} parent=63 // pred_check
          %p454 = pneg %p71
        $region70: #{tpu_custom_call.1} parent=63 // pred_check_branch
          %456 = sbr.rel (%p454) target = $region72
        $region71: #{tpu_custom_call.1} parent=63 // pred_region
          %p457 = scmp.lt.s32.totalorder %s25, 1
          %s458 = scalar_select %p457, %s25, 1
          %s459 = scalar_lea.vmem %s1, %s458
        $region72: #{tpu_custom_call.1} parent=63 // pred_fallthru
          _
        // Predicated region
        $region73: #{tpu_custom_call.1} parent=63 // pred_check
          %p460 = pneg %p97
        $region74: #{tpu_custom_call.1} parent=63 // pred_check_branch
          %462 = sbr.rel (%p460) target = $region76
        $region75: #{tpu_custom_call.1} parent=63 // pred_region
          %p463 = scmp.lt.s32.totalorder %s25, 1
          %s464 = scalar_select %p463, %s25, 1
          %s465 = smul.addr %s464, 4
          %s466 = smul.addr %s465, 8
          %s467 = scalar_lea.vmem %s2, %s466
        $region76: #{tpu_custom_call.1} parent=63 // pred_fallthru
          _
      $region64: #{tpu_custom_call.1} parent=5 // pred_fallthru
        _
      %p468 = scmp.le.s32.totalorder 1, %s25
      %p469 = scmp.lt.s32.totalorder %s25, 3
      %p470 = pnand %p468, %p469
      %p471 = pneg %p470
      // Predicated region
      $region77: #{tpu_custom_call.1} parent=5 // pred_check
        _
      $region78: #{tpu_custom_call.1} parent=5 // pred_check_branch
        %473 = sbr.rel (%p470) target = $region80
      $region79: #{tpu_custom_call.1} parent=5 // pred_region
        %s474 = ssub.s32 %s25, 1
        // Predicated region
        $region81: #{tpu_custom_call.1} parent=79 // pred_check
          %p475 = pneg %p208
        $region82: #{tpu_custom_call.1} parent=79 // pred_check_branch
          %477 = sbr.rel (%p475) target = $region84
        $region83: #{tpu_custom_call.1} parent=79 // pred_region
          %478 = dma.done [#allocation3], 512
        $region84: #{tpu_custom_call.1} parent=79 // pred_fallthru
          _
        %p479 = scmp.lt.s32.totalorder %s30, 1
        %s480 = scalar_select %p479, %s30, 1
        %s481 = smul.addr %s480, 4
        %s482 = smul.addr %s481, 8
        %s483 = scalar_lea.vmem %s0, %s482
        %p484 = pneg %p51
        %p485 = pneg %p48
        %p486 = scmp.lt.s32.totalorder %s30, 1
        %s487 = scalar_select %p486, %s30, 1
        %s488 = scalar_lea.vmem %s1, %s487
        %p489 = pneg %p77
        %p490 = pneg %p74
        %p491 = scmp.lt.s32.totalorder %s30, 1
        %s492 = scalar_select %p491, %s30, 1
        %s493 = smul.addr %s492, 4
        %s494 = smul.addr %s493, 8
        %s495 = scalar_lea.vmem %s2, %s494
        %p496 = pneg %p103
        %p497 = pneg %p100
        %p498 = pneg %p124
        %p499 = pneg %p121
        %p500 = pneg %p145
        %p501 = pneg %p142
        %p502 = pneg %p166
        %p503 = pneg %p163
        %p504 = pneg %p187
        %p505 = pneg %p184
        %p506 = pneg %p208
        %p507 = pneg %p205
        %p508 = pneg %p229
        %p509 = pneg %p226
        %p510 = pneg %p250
        %p511 = pneg %p247
        %p512 = pneg %p271
        %p513 = pneg %p268
        %p514 = pneg %p292
        %p515 = pneg %p289
        %p516 = pneg %p313
        %p517 = pneg %p310
        %p518 = pneg %p334
        %p519 = pneg %p331
        %p520 = pneg %p355
        %p521 = pneg %p352
        %p522 = pneg %p381
        %p523 = pneg %p378
        %s524 = sand.u32 %s368, 1
        %s525 = scalar_lea.sflag [#allocation4], %s524
        %s526 = sand.u32 %s368, 1
        %s527 = smul.addr %s526, 32
        %s528 = scalar_lea.vmem [#allocation5], %s527
        %p529 = scmp.lt.s32.totalorder %s30, 1
        %s530 = scalar_select %p529, %s30, 1
        %s531 = smul.addr %s530, 4
        %s532 = smul.addr %s531, 8
        %s533 = scalar_lea.vmem %s0, %s532
        %p534 = scmp.lt.s32.totalorder %s30, 1
        %s535 = scalar_select %p534, %s30, 1
        %s536 = scalar_lea.vmem %s1, %s535
        %p537 = scmp.lt.s32.totalorder %s30, 1
        %s538 = scalar_select %p537, %s30, 1
        %s539 = smul.addr %s538, 4
        %s540 = smul.addr %s539, 8
        %s541 = scalar_lea.vmem %s2, %s540
        %v543 = vld [vmem:[%s533] sm:$0xff]
        %v544 = vld [vmem:[%s533 + $0x8] sm:$0xff]
        %v545 = vld [vmem:[%s533 + $0x10] sm:$0xff]
        %v546 = vld [vmem:[%s533 + $0x18] sm:$0xff]
        %v547 = vld [vmem:[%s536] sm:$0x1]
        %v548 = vld [vmem:[%s541] sm:$0xff]
        %v549 = vld [vmem:[%s541 + $0x8] sm:$0xff]
        %v550 = vld [vmem:[%s541 + $0x10] sm:$0xff]
        %v551 = vld [vmem:[%s541 + $0x18] sm:$0xff]
        %v553 = vlaneseq
        %v554 = vshrl.u32 %v553, 7
        %v555 = vsub.s32 0, %v554
        %v556 = vrot.slane %v547, %v555
        %v558 = vpack.c.bf16 %v544, %v543
        %v559 = vpack.c.bf16 %v546, %v545
        %v560 = vld [vmem:[%s3] sm:$0xf]
        %v561 = vld [vmem:[%s3 + $0x4] sm:$0xf]
        %v562 = vld [vmem:[%s3 + $0x8] sm:$0xf]
        %v563 = vld [vmem:[%s3 + $0xc] sm:$0xf]
        %v564 = vld [vmem:[%s4] sm:$0x1]
        %v566 = vlaneseq
        %v567 = vshrl.u32 %v566, 7
        %v568 = vsub.s32 0, %v567
        %v569 = vrot.slane %v564, %v568
        %v575 = vunpack.c.l.b16 %v560
        %v576 = vunpack.c.l.b16 %v561
        %v577 = vunpack.c.l.b16 %v562
        %v578 = vunpack.c.l.b16 %v563
        %v579 = vpack.c.b16 %v576, %v575
        %v580 = vpack.c.b16 %v578, %v577
        %vm583 = vcmask 261120
        %v585 = vsel %vm583, %v558, 0
        %v588 = vsel %vm583, %v559, 0
        %590 = vmatprep.subr.bf16.mxu0 0
        %591 = vmatpush1.bf16.msra.mxu0 %v579
        %592 = vmatprep.subr.bf16.mxu0 0
        %593 = vmatpush1.bf16.msra.mxu0 %v580
        %594 = vmatprep.subr.bf16.mxu0 0
        %595 = vmatpush1.bf16.msra.mxu0 0
        %596 = vmatprep.subr.bf16.mxu0 0
        %597 = vmatpush1.bf16.msra.mxu0 0
        %598 = vmatprep.subr.bf16.mxu0 0
        %599 = vmatpush1.bf16.msra.mxu0 0
        %600 = vmatprep.subr.bf16.mxu0 0
        %601 = vmatpush1.bf16.msra.mxu0 0
        %602 = vmatprep.subr.bf16.mxu0 0
        %603 = vmatpush1.bf16.msra.mxu0 0
        %604 = vmatprep.subr.bf16.mxu0 0
        %605 = vmatpush1.bf16.msra.mxu0 0
        %606 = vmatprep.subr.bf16.mxu0 0
        %607 = vmatpush1.bf16.msra.mxu0 0
        %608 = vmatprep.subr.bf16.mxu0 0
        %609 = vmatpush1.bf16.msra.mxu0 0
        %610 = vmatprep.subr.bf16.mxu0 0
        %611 = vmatpush1.bf16.msra.mxu0 0
        %612 = vmatprep.subr.bf16.mxu0 0
        %613 = vmatpush1.bf16.msra.mxu0 0
        %614 = vmatprep.subr.bf16.mxu0 0
        %615 = vmatpush1.bf16.msra.mxu0 0
        %616 = vmatprep.subr.bf16.mxu0 0
        %617 = vmatpush1.bf16.msra.mxu0 0
        %618 = vmatprep.subr.bf16.mxu0 0
        %619 = vmatpush1.bf16.msra.mxu0 0
        %620 = vmatprep.subr.bf16.mxu0 0
        %621 = vmatpush1.bf16.msra.mxu0 0
        %622 = vmatprep.mubr.bf16.mxu0 0
        %623 = vmatmul.mubr.bf16.gmra.mrb[0].mxu0 %v585
        %v624 = vpop.f32.mrb[0].mxu0
        %v625 = vadd.f32 %v569, %v624
        %v626 = vpop.f32.mrb[0].mxu0
        %v627 = vpop.f32.mrb[0].mxu0
        %v628 = vadd.f32 %v569, %v627
        %v629 = vpop.f32.mrb[0].mxu0
        %630 = vmatprep.mubr.bf16.mxu0 0
        %631 = vmatmul.mubr.bf16.gmra.mrb[0].mxu0 %v588
        %v632 = vpop.f32.mrb[0].mxu0
        %v633 = vadd.f32 %v569, %v632
        %v634 = vpop.f32.mrb[0].mxu0
        %v635 = vpop.f32.mrb[0].mxu0
        %v636 = vadd.f32 %v569, %v635
        %v637 = vpop.f32.mrb[0].mxu0
        %638 = vdwg.mxu0
        %v639 = vpack.c.bf16 %v628, %v625
        %v640 = vpack.c.bf16 %v636, %v633
        %v641 = vld [vmem:[%s5] sm:$0xf]
        %v642 = vld [vmem:[%s5 + $0x4] sm:$0xf]
        %v643 = vld [vmem:[%s5 + $0x8] sm:$0xf]
        %v644 = vld [vmem:[%s5 + $0xc] sm:$0xf]
        %647 = vrot.lane.b32.xlu0 %v639, 96
        %v648 = vpop.permute.xlu0 %647
        %649 = vrot.lane.b32.xlu0 %v640, 96
        %v650 = vpop.permute.xlu0 %649
        %vm651 = vcmask 64512
        %v653 = vsel %vm651, %v639, 0
        %v656 = vsel %vm651, %v640, 0
        %v659 = vsel %vm651, %v648, 0
        %v662 = vsel %vm651, %v650, 0
        %664 = vmatprep.subr.bf16.mxu0 0
        %665 = vmatpush1.bf16.xpose.msra.mxu0 %v659
        %666 = vmatprep.subr.bf16.mxu0 0
        %667 = vmatpush1.bf16.xpose.msra.mxu0 %v662
        %668 = vmatprep.subr.bf16.mxu0 0
        %669 = vmatpush1.bf16.xpose.msra.mxu0 0
        %670 = vmatprep.subr.bf16.mxu0 0
        %671 = vmatpush1.bf16.xpose.msra.mxu0 0
        %672 = vmatprep.subr.bf16.mxu0 0
        %673 = vmatpush1.bf16.xpose.msra.mxu0 0
        %674 = vmatprep.subr.bf16.mxu0 0
        %675 = vmatpush1.bf16.xpose.msra.mxu0 0
        %676 = vmatprep.subr.bf16.mxu0 0
        %677 = vmatpush1.bf16.xpose.msra.mxu0 0
        %678 = vmatprep.subr.bf16.mxu0 0
        %679 = vmatpush1.bf16.xpose.msra.mxu0 0
        %680 = vmatprep.subr.bf16.mxu0 0
        %681 = vmatpush1.bf16.xpose.msra.mxu0 0
        %682 = vmatprep.subr.bf16.mxu0 0
        %683 = vmatpush1.bf16.xpose.msra.mxu0 0
        %684 = vmatprep.subr.bf16.mxu0 0
        %685 = vmatpush1.bf16.xpose.msra.mxu0 0
        %686 = vmatprep.subr.bf16.mxu0 0
        %687 = vmatpush1.bf16.xpose.msra.mxu0 0
        %688 = vmatprep.subr.bf16.mxu0 0
        %689 = vmatpush1.bf16.xpose.msra.mxu0 0
        %690 = vmatprep.subr.bf16.mxu0 0
        %691 = vmatpush1.bf16.xpose.msra.mxu0 0
        %692 = vmatprep.subr.bf16.mxu0 0
        %693 = vmatpush1.bf16.xpose.msra.mxu0 0
        %694 = vmatprep.subr.bf16.mxu0 0
        %695 = vmatpush1.bf16.xpose.msra.mxu0 0
        %696 = vmatprep.mubr.bf16.mxu0 0
        %697 = vmatmul.mubr.bf16.gmra.mrb[0].mxu0 %v653
        %v698 = vpop.f32.mrb[0].mxu0
        %v699 = vadd.f32 %v556, %v698
        %v700 = vpop.f32.mrb[0].mxu0
        %v701 = vpop.f32.mrb[0].mxu0
        %v702 = vadd.f32 %v556, %v701
        %v703 = vpop.f32.mrb[0].mxu0
        %704 = vmatprep.mubr.bf16.mxu0 0
        %705 = vmatmul.mubr.bf16.gmra.mrb[0].mxu0 %v656
        %v706 = vpop.f32.mrb[0].mxu0
        %v707 = vadd.f32 %v556, %v706
        %v708 = vpop.f32.mrb[0].mxu0
        %v709 = vpop.f32.mrb[0].mxu0
        %v710 = vadd.f32 %v556, %v709
        %v711 = vpop.f32.mrb[0].mxu0
        %712 = vdwg.mxu0
        %v713 = vsel %vm583, %v699, -inf
        %714 = vmax.xlane.f32.xlu0 %v713
        %v715 = vpop.xlane.xlu0 %714
        %v716 = vsel %vm583, %v702, -inf
        %717 = vmax.xlane.f32.xlu0 %v716
        %v718 = vpop.xlane.xlu0 %717
        %v719 = vsel %vm583, %v707, -inf
        %720 = vmax.xlane.f32.xlu0 %v719
        %v721 = vpop.xlane.xlu0 %720
        %v722 = vsel %vm583, %v710, -inf
        %723 = vmax.xlane.f32.xlu0 %v722
        %v724 = vpop.xlane.xlu0 %723
        %v725 = vsub.f32 %v699, %v715
        %v726 = vsub.f32 %v702, %v718
        %v727 = vsub.f32 %v707, %v721
        %v728 = vsub.f32 %v710, %v724
        %v729 = vmul.f32 %v725, 1.442695
        %v730 = vpow.pop %v729
        %v731 = vmul.f32 %v726, 1.442695
        %v732 = vpow.pop %v731
        %v733 = vmul.f32 %v727, 1.442695
        %v734 = vpow.pop %v733
        %v735 = vmul.f32 %v728, 1.442695
        %v736 = vpow.pop %v735
        %v737 = vsel %vm583, %v730, 0.0
        %738 = vadd.xlane.f32.xlu0 %v737
        %v739 = vpop.xlane.xlu0 %738
        %v740 = vsel %vm583, %v732, 0.0
        %741 = vadd.xlane.f32.xlu0 %v740
        %v742 = vpop.xlane.xlu0 %741
        %v743 = vsel %vm583, %v734, 0.0
        %744 = vadd.xlane.f32.xlu0 %v743
        %v745 = vpop.xlane.xlu0 %744
        %v746 = vsel %vm583, %v736, 0.0
        %747 = vadd.xlane.f32.xlu0 %v746
        %v748 = vpop.xlane.xlu0 %747
        %v749 = vrcp.pop %v739
        %v750 = vrcp.pop %v742
        %v751 = vrcp.pop %v745
        %v752 = vrcp.pop %v748
        %v753 = vmul.f32 %v730, %v749
        %v754 = vmul.f32 %v732, %v750
        %v755 = vmul.f32 %v734, %v751
        %v756 = vmul.f32 %v736, %v752
        %v757 = vpack.c.bf16 %v754, %v753
        %v758 = vpack.c.bf16 %v756, %v755
        %759 = vrot.lane.b32.xlu0 %v639, 64
        %v760 = vpop.permute.xlu0 %759
        %761 = vrot.lane.b32.xlu0 %v640, 64
        %v762 = vpop.permute.xlu0 %761
        %v766 = vsel %vm583, %v757, 0
        %v769 = vsel %vm583, %v758, 0
        %771 = vmatprep.subr.bf16.mxu0 0
        %772 = vmatpush1.bf16.msra.mxu0 %v760
        %773 = vmatprep.subr.bf16.mxu0 0
        %774 = vmatpush1.bf16.msra.mxu0 %v762
        %775 = vmatprep.subr.bf16.mxu0 0
        %776 = vmatpush1.bf16.msra.mxu0 0
        %777 = vmatprep.subr.bf16.mxu0 0
        %778 = vmatpush1.bf16.msra.mxu0 0
        %779 = vmatprep.subr.bf16.mxu0 0
        %780 = vmatpush1.bf16.msra.mxu0 0
        %781 = vmatprep.subr.bf16.mxu0 0
        %782 = vmatpush1.bf16.msra.mxu0 0
        %783 = vmatprep.subr.bf16.mxu0 0
        %784 = vmatpush1.bf16.msra.mxu0 0
        %785 = vmatprep.subr.bf16.mxu0 0
        %786 = vmatpush1.bf16.msra.mxu0 0
        %787 = vmatprep.subr.bf16.mxu0 0
        %788 = vmatpush1.bf16.msra.mxu0 0
        %789 = vmatprep.subr.bf16.mxu0 0
        %790 = vmatpush1.bf16.msra.mxu0 0
        %791 = vmatprep.subr.bf16.mxu0 0
        %792 = vmatpush1.bf16.msra.mxu0 0
        %793 = vmatprep.subr.bf16.mxu0 0
        %794 = vmatpush1.bf16.msra.mxu0 0
        %795 = vmatprep.subr.bf16.mxu0 0
        %796 = vmatpush1.bf16.msra.mxu0 0
        %797 = vmatprep.subr.bf16.mxu0 0
        %798 = vmatpush1.bf16.msra.mxu0 0
        %799 = vmatprep.subr.bf16.mxu0 0
        %800 = vmatpush1.bf16.msra.mxu0 0
        %801 = vmatprep.subr.bf16.mxu0 0
        %802 = vmatpush1.bf16.msra.mxu0 0
        %803 = vmatprep.mubr.bf16.mxu0 0
        %804 = vmatmul.mubr.bf16.gmra.mrb[0].mxu0 %v766
        %v805 = vpop.f32.mrb[0].mxu0
        %v806 = vadd.f32 0.0, %v805
        %v807 = vpop.f32.mrb[0].mxu0
        %v808 = vpop.f32.mrb[0].mxu0
        %v809 = vadd.f32 0.0, %v808
        %v810 = vpop.f32.mrb[0].mxu0
        %811 = vmatprep.mubr.bf16.mxu0 0
        %812 = vmatmul.mubr.bf16.gmra.mrb[0].mxu0 %v769
        %v813 = vpop.f32.mrb[0].mxu0
        %v814 = vadd.f32 0.0, %v813
        %v815 = vpop.f32.mrb[0].mxu0
        %v816 = vpop.f32.mrb[0].mxu0
        %v817 = vadd.f32 0.0, %v816
        %v818 = vpop.f32.mrb[0].mxu0
        %819 = vdwg.mxu0
        %v820 = vpack.c.bf16 %v809, %v806
        %v821 = vpack.c.bf16 %v817, %v814
        %822 = vrot.lane.b32.xlu0 %v639, 120
        %v823 = vpop.permute.xlu0 %822
        %824 = vrot.lane.b32.xlu0 %v640, 120
        %v825 = vpop.permute.xlu0 %824
        %826 = vrot.lane.b32.xlu0 %v639, 88
        %v827 = vpop.permute.xlu0 %826
        %828 = vrot.lane.b32.xlu0 %v640, 88
        %v829 = vpop.permute.xlu0 %828
        %v831 = vsel %vm651, %v823, 0
        %v834 = vsel %vm651, %v825, 0
        %v837 = vsel %vm651, %v827, 0
        %v840 = vsel %vm651, %v829, 0
        %842 = vmatprep.subr.bf16.mxu0 0
        %843 = vmatpush1.bf16.xpose.msra.mxu0 %v837
        %844 = vmatprep.subr.bf16.mxu0 0
        %845 = vmatpush1.bf16.xpose.msra.mxu0 %v840
        %846 = vmatprep.subr.bf16.mxu0 0
        %847 = vmatpush1.bf16.xpose.msra.mxu0 0
        %848 = vmatprep.subr.bf16.mxu0 0
        %849 = vmatpush1.bf16.xpose.msra.mxu0 0
        %850 = vmatprep.subr.bf16.mxu0 0
        %851 = vmatpush1.bf16.xpose.msra.mxu0 0
        %852 = vmatprep.subr.bf16.mxu0 0
        %853 = vmatpush1.bf16.xpose.msra.mxu0 0
        %854 = vmatprep.subr.bf16.mxu0 0
        %855 = vmatpush1.bf16.xpose.msra.mxu0 0
        %856 = vmatprep.subr.bf16.mxu0 0
        %857 = vmatpush1.bf16.xpose.msra.mxu0 0
        %858 = vmatprep.subr.bf16.mxu0 0
        %859 = vmatpush1.bf16.xpose.msra.mxu0 0
        %860 = vmatprep.subr.bf16.mxu0 0
        %861 = vmatpush1.bf16.xpose.msra.mxu0 0
        %862 = vmatprep.subr.bf16.mxu0 0
        %863 = vmatpush1.bf16.xpose.msra.mxu0 0
        %864 = vmatprep.subr.bf16.mxu0 0
        %865 = vmatpush1.bf16.xpose.msra.mxu0 0
        %866 = vmatprep.subr.bf16.mxu0 0
        %867 = vmatpush1.bf16.xpose.msra.mxu0 0
        %868 = vmatprep.subr.bf16.mxu0 0
        %869 = vmatpush1.bf16.xpose.msra.mxu0 0
        %870 = vmatprep.subr.bf16.mxu0 0
        %871 = vmatpush1.bf16.xpose.msra.mxu0 0
        %872 = vmatprep.subr.bf16.mxu0 0
        %873 = vmatpush1.bf16.xpose.msra.mxu0 0
        %874 = vmatprep.mubr.bf16.mxu0 0
        %875 = vmatmul.mubr.bf16.gmra.mrb[0].mxu0 %v831
        %v876 = vpop.f32.mrb[0].mxu0
        %v877 = vadd.f32 %v556, %v876
        %v878 = vpop.f32.mrb[0].mxu0
        %v879 = vpop.f32.mrb[0].mxu0
        %v880 = vadd.f32 %v556, %v879
        %v881 = vpop.f32.mrb[0].mxu0
        %882 = vmatprep.mubr.bf16.mxu0 0
        %883 = vmatmul.mubr.bf16.gmra.mrb[0].mxu0 %v834
        %v884 = vpop.f32.mrb[0].mxu0
        %v885 = vadd.f32 %v556, %v884
        %v886 = vpop.f32.mrb[0].mxu0
        %v887 = vpop.f32.mrb[0].mxu0
        %v888 = vadd.f32 %v556, %v887
        %v889 = vpop.f32.mrb[0].mxu0
        %890 = vdwg.mxu0
        %v891 = vsel %vm583, %v877, -inf
        %892 = vmax.xlane.f32.xlu0 %v891
        %v893 = vpop.xlane.xlu0 %892
        %v894 = vsel %vm583, %v880, -inf
        %895 = vmax.xlane.f32.xlu0 %v894
        %v896 = vpop.xlane.xlu0 %895
        %v897 = vsel %vm583, %v885, -inf
        %898 = vmax.xlane.f32.xlu0 %v897
        %v899 = vpop.xlane.xlu0 %898
        %v900 = vsel %vm583, %v888, -inf
        %901 = vmax.xlane.f32.xlu0 %v900
        %v902 = vpop.xlane.xlu0 %901
        %v903 = vsub.f32 %v877, %v893
        %v904 = vsub.f32 %v880, %v896
        %v905 = vsub.f32 %v885, %v899
        %v906 = vsub.f32 %v888, %v902
        %v907 = vmul.f32 %v903, 1.442695
        %v908 = vpow.pop %v907
        %v909 = vmul.f32 %v904, 1.442695
        %v910 = vpow.pop %v909
        %v911 = vmul.f32 %v905, 1.442695
        %v912 = vpow.pop %v911
        %v913 = vmul.f32 %v906, 1.442695
        %v914 = vpow.pop %v913
        %v915 = vsel %vm583, %v908, 0.0
        %916 = vadd.xlane.f32.xlu0 %v915
        %v917 = vpop.xlane.xlu0 %916
        %v918 = vsel %vm583, %v910, 0.0
        %919 = vadd.xlane.f32.xlu0 %v918
        %v920 = vpop.xlane.xlu0 %919
        %v921 = vsel %vm583, %v912, 0.0
        %922 = vadd.xlane.f32.xlu0 %v921
        %v923 = vpop.xlane.xlu0 %922
        %v924 = vsel %vm583, %v914, 0.0
        %925 = vadd.xlane.f32.xlu0 %v924
        %v926 = vpop.xlane.xlu0 %925
        %v927 = vrcp.pop %v917
        %v928 = vrcp.pop %v920
        %v929 = vrcp.pop %v923
        %v930 = vrcp.pop %v926
        %v931 = vmul.f32 %v908, %v927
        %v932 = vmul.f32 %v910, %v928
        %v933 = vmul.f32 %v912, %v929
        %v934 = vmul.f32 %v914, %v930
        %v935 = vpack.c.bf16 %v932, %v931
        %v936 = vpack.c.bf16 %v934, %v933
        %937 = vrot.lane.b32.xlu0 %v639, 56
        %v938 = vpop.permute.xlu0 %937
        %939 = vrot.lane.b32.xlu0 %v640, 56
        %v940 = vpop.permute.xlu0 %939
        %v944 = vsel %vm583, %v935, 0
        %v947 = vsel %vm583, %v936, 0
        %949 = vmatprep.subr.bf16.mxu0 0
        %950 = vmatpush1.bf16.msra.mxu0 %v938
        %951 = vmatprep.subr.bf16.mxu0 0
        %952 = vmatpush1.bf16.msra.mxu0 %v940
        %953 = vmatprep.subr.bf16.mxu0 0
        %954 = vmatpush1.bf16.msra.mxu0 0
        %955 = vmatprep.subr.bf16.mxu0 0
        %956 = vmatpush1.bf16.msra.mxu0 0
        %957 = vmatprep.subr.bf16.mxu0 0
        %958 = vmatpush1.bf16.msra.mxu0 0
        %959 = vmatprep.subr.bf16.mxu0 0
        %960 = vmatpush1.bf16.msra.mxu0 0
        %961 = vmatprep.subr.bf16.mxu0 0
        %962 = vmatpush1.bf16.msra.mxu0 0
        %963 = vmatprep.subr.bf16.mxu0 0
        %964 = vmatpush1.bf16.msra.mxu0 0
        %965 = vmatprep.subr.bf16.mxu0 0
        %966 = vmatpush1.bf16.msra.mxu0 0
        %967 = vmatprep.subr.bf16.mxu0 0
        %968 = vmatpush1.bf16.msra.mxu0 0
        %969 = vmatprep.subr.bf16.mxu0 0
        %970 = vmatpush1.bf16.msra.mxu0 0
        %971 = vmatprep.subr.bf16.mxu0 0
        %972 = vmatpush1.bf16.msra.mxu0 0
        %973 = vmatprep.subr.bf16.mxu0 0
        %974 = vmatpush1.bf16.msra.mxu0 0
        %975 = vmatprep.subr.bf16.mxu0 0
        %976 = vmatpush1.bf16.msra.mxu0 0
        %977 = vmatprep.subr.bf16.mxu0 0
        %978 = vmatpush1.bf16.msra.mxu0 0
        %979 = vmatprep.subr.bf16.mxu0 0
        %980 = vmatpush1.bf16.msra.mxu0 0
        %981 = vmatprep.mubr.bf16.mxu0 0
        %982 = vmatmul.mubr.bf16.gmra.mrb[0].mxu0 %v944
        %v983 = vpop.f32.mrb[0].mxu0
        %v984 = vadd.f32 0.0, %v983
        %v985 = vpop.f32.mrb[0].mxu0
        %v986 = vpop.f32.mrb[0].mxu0
        %v987 = vadd.f32 0.0, %v986
        %v988 = vpop.f32.mrb[0].mxu0
        %989 = vmatprep.mubr.bf16.mxu0 0
        %990 = vmatmul.mubr.bf16.gmra.mrb[0].mxu0 %v947
        %v991 = vpop.f32.mrb[0].mxu0
        %v992 = vadd.f32 0.0, %v991
        %v993 = vpop.f32.mrb[0].mxu0
        %v994 = vpop.f32.mrb[0].mxu0
        %v995 = vadd.f32 0.0, %v994
        %v996 = vpop.f32.mrb[0].mxu0
        %997 = vdwg.mxu0
        %v998 = vpack.c.bf16 %v987, %v984
        %v999 = vpack.c.bf16 %v995, %v992
        %v1001 = vsel %vm651, %v998, 0
        %v1004 = vsel %vm651, %v999, 0
        %vm1006 = vcmask 1043456
        %v1008 = vsel %vm1006, %v642, 0
        %1010 = vmatprep.subr.bf16.mxu0 0
        %1011 = vmatpush1.bf16.msra.mxu0 %v1008
        %1012 = vmatprep.subr.bf16.mxu0 0
        %1013 = vmatpush1.bf16.msra.mxu0 0
        %1014 = vmatprep.subr.bf16.mxu0 0
        %1015 = vmatpush1.bf16.msra.mxu0 0
        %1016 = vmatprep.subr.bf16.mxu0 0
        %1017 = vmatpush1.bf16.msra.mxu0 0
        %1018 = vmatprep.subr.bf16.mxu0 0
        %1019 = vmatpush1.bf16.msra.mxu0 0
        %1020 = vmatprep.subr.bf16.mxu0 0
        %1021 = vmatpush1.bf16.msra.mxu0 0
        %1022 = vmatprep.subr.bf16.mxu0 0
        %1023 = vmatpush1.bf16.msra.mxu0 0
        %1024 = vmatprep.subr.bf16.mxu0 0
        %1025 = vmatpush1.bf16.msra.mxu0 0
        %1026 = vmatprep.subr.bf16.mxu0 0
        %1027 = vmatpush1.bf16.msra.mxu0 0
        %1028 = vmatprep.subr.bf16.mxu0 0
        %1029 = vmatpush1.bf16.msra.mxu0 0
        %1030 = vmatprep.subr.bf16.mxu0 0
        %1031 = vmatpush1.bf16.msra.mxu0 0
        %1032 = vmatprep.subr.bf16.mxu0 0
        %1033 = vmatpush1.bf16.msra.mxu0 0
        %1034 = vmatprep.subr.bf16.mxu0 0
        %1035 = vmatpush1.bf16.msra.mxu0 0
        %1036 = vmatprep.subr.bf16.mxu0 0
        %1037 = vmatpush1.bf16.msra.mxu0 0
        %1038 = vmatprep.subr.bf16.mxu0 0
        %1039 = vmatpush1.bf16.msra.mxu0 0
        %1040 = vmatprep.subr.bf16.mxu0 0
        %1041 = vmatpush1.bf16.msra.mxu0 0
        %1042 = vmatprep.mubr.bf16.mxu0 0
        %1043 = vmatmul.mubr.bf16.gmra.mrb[0].mxu0 %v1001
        %v1044 = vpop.f32.mrb[0].mxu0
        %v1045 = vadd.f32 0.0, %v1044
        %v1046 = vpop.f32.mrb[0].mxu0
        %v1047 = vpop.f32.mrb[0].mxu0
        %v1048 = vadd.f32 0.0, %v1047
        %v1049 = vpop.f32.mrb[0].mxu0
        %1050 = vmatprep.mubr.bf16.mxu0 0
        %1051 = vmatmul.mubr.bf16.gmra.mrb[0].mxu0 %v1004
        %v1052 = vpop.f32.mrb[0].mxu0
        %v1053 = vadd.f32 0.0, %v1052
        %v1054 = vpop.f32.mrb[0].mxu0
        %v1055 = vpop.f32.mrb[0].mxu0
        %v1056 = vadd.f32 0.0, %v1055
        %v1057 = vpop.f32.mrb[0].mxu0
        %1058 = vdwg.mxu0
        %v1060 = vsel %vm651, %v820, 0
        %v1063 = vsel %vm651, %v821, 0
        %v1066 = vsel %vm1006, %v641, 0
        %1068 = vmatprep.subr.bf16.mxu0 0
        %1069 = vmatpush1.bf16.msra.mxu0 %v1066
        %1070 = vmatprep.subr.bf16.mxu0 0
        %1071 = vmatpush1.bf16.msra.mxu0 0
        %1072 = vmatprep.subr.bf16.mxu0 0
        %1073 = vmatpush1.bf16.msra.mxu0 0
        %1074 = vmatprep.subr.bf16.mxu0 0
        %1075 = vmatpush1.bf16.msra.mxu0 0
        %1076 = vmatprep.subr.bf16.mxu0 0
        %1077 = vmatpush1.bf16.msra.mxu0 0
        %1078 = vmatprep.subr.bf16.mxu0 0
        %1079 = vmatpush1.bf16.msra.mxu0 0
        %1080 = vmatprep.subr.bf16.mxu0 0
        %1081 = vmatpush1.bf16.msra.mxu0 0
        %1082 = vmatprep.subr.bf16.mxu0 0
        %1083 = vmatpush1.bf16.msra.mxu0 0
        %1084 = vmatprep.subr.bf16.mxu0 0
        %1085 = vmatpush1.bf16.msra.mxu0 0
        %1086 = vmatprep.subr.bf16.mxu0 0
        %1087 = vmatpush1.bf16.msra.mxu0 0
        %1088 = vmatprep.subr.bf16.mxu0 0
        %1089 = vmatpush1.bf16.msra.mxu0 0
        %1090 = vmatprep.subr.bf16.mxu0 0
        %1091 = vmatpush1.bf16.msra.mxu0 0
        %1092 = vmatprep.subr.bf16.mxu0 0
        %1093 = vmatpush1.bf16.msra.mxu0 0
        %1094 = vmatprep.subr.bf16.mxu0 0
        %1095 = vmatpush1.bf16.msra.mxu0 0
        %1096 = vmatprep.subr.bf16.mxu0 0
        %1097 = vmatpush1.bf16.msra.mxu0 0
        %1098 = vmatprep.subr.bf16.mxu0 0
        %1099 = vmatpush1.bf16.msra.mxu0 0
        %1100 = vmatprep.mubr.bf16.mxu0 0
        %1101 = vmatmul.mubr.bf16.gmra.mrb[0].mxu0 %v1060
        %v1102 = vpop.f32.mrb[0].mxu0
        %v1103 = vadd.f32 %v1045, %v1102
        %v1104 = vpop.f32.mrb[0].mxu0
        %v1105 = vpop.f32.mrb[0].mxu0
        %v1106 = vadd.f32 %v1048, %v1105
        %v1107 = vpop.f32.mrb[0].mxu0
        %1108 = vmatprep.mubr.bf16.mxu0 0
        %1109 = vmatmul.mubr.bf16.gmra.mrb[0].mxu0 %v1063
        %v1110 = vpop.f32.mrb[0].mxu0
        %v1111 = vadd.f32 %v1053, %v1110
        %v1112 = vpop.f32.mrb[0].mxu0
        %v1113 = vpop.f32.mrb[0].mxu0
        %v1114 = vadd.f32 %v1056, %v1113
        %v1115 = vpop.f32.mrb[0].mxu0
        %1116 = vdwg.mxu0
        %1117 = vrot.lane.b32.xlu0 %v639, 112
        %v1118 = vpop.permute.xlu0 %1117
        %1119 = vrot.lane.b32.xlu0 %v640, 112
        %v1120 = vpop.permute.xlu0 %1119
        %1121 = vrot.lane.b32.xlu0 %v639, 80
        %v1122 = vpop.permute.xlu0 %1121
        %1123 = vrot.lane.b32.xlu0 %v640, 80
        %v1124 = vpop.permute.xlu0 %1123
        %v1126 = vsel %vm651, %v1118, 0
        %v1129 = vsel %vm651, %v1120, 0
        %v1132 = vsel %vm651, %v1122, 0
        %v1135 = vsel %vm651, %v1124, 0
        %1137 = vmatprep.subr.bf16.mxu0 0
        %1138 = vmatpush1.bf16.xpose.msra.mxu0 %v1132
        %1139 = vmatprep.subr.bf16.mxu0 0
        %1140 = vmatpush1.bf16.xpose.msra.mxu0 %v1135
        %1141 = vmatprep.subr.bf16.mxu0 0
        %1142 = vmatpush1.bf16.xpose.msra.mxu0 0
        %1143 = vmatprep.subr.bf16.mxu0 0
        %1144 = vmatpush1.bf16.xpose.msra.mxu0 0
        %1145 = vmatprep.subr.bf16.mxu0 0
        %1146 = vmatpush1.bf16.xpose.msra.mxu0 0
        %1147 = vmatprep.subr.bf16.mxu0 0
        %1148 = vmatpush1.bf16.xpose.msra.mxu0 0
        %1149 = vmatprep.subr.bf16.mxu0 0
        %1150 = vmatpush1.bf16.xpose.msra.mxu0 0
        %1151 = vmatprep.subr.bf16.mxu0 0
        %1152 = vmatpush1.bf16.xpose.msra.mxu0 0
        %1153 = vmatprep.subr.bf16.mxu0 0
        %1154 = vmatpush1.bf16.xpose.msra.mxu0 0
        %1155 = vmatprep.subr.bf16.mxu0 0
        %1156 = vmatpush1.bf16.xpose.msra.mxu0 0
        %1157 = vmatprep.subr.bf16.mxu0 0
        %1158 = vmatpush1.bf16.xpose.msra.mxu0 0
        %1159 = vmatprep.subr.bf16.mxu0 0
        %1160 = vmatpush1.bf16.xpose.msra.mxu0 0
        %1161 = vmatprep.subr.bf16.mxu0 0
        %1162 = vmatpush1.bf16.xpose.msra.mxu0 0
        %1163 = vmatprep.subr.bf16.mxu0 0
        %1164 = vmatpush1.bf16.xpose.msra.mxu0 0
        %1165 = vmatprep.subr.bf16.mxu0 0
        %1166 = vmatpush1.bf16.xpose.msra.mxu0 0
        %1167 = vmatprep.subr.bf16.mxu0 0
        %1168 = vmatpush1.bf16.xpose.msra.mxu0 0
        %1169 = vmatprep.mubr.bf16.mxu0 0
        %1170 = vmatmul.mubr.bf16.gmra.mrb[0].mxu0 %v1126
        %v1171 = vpop.f32.mrb[0].mxu0
        %v1172 = vadd.f32 %v556, %v1171
        %v1173 = vpop.f32.mrb[0].mxu0
        %v1174 = vpop.f32.mrb[0].mxu0
        %v1175 = vadd.f32 %v556, %v1174
        %v1176 = vpop.f32.mrb[0].mxu0
        %1177 = vmatprep.mubr.bf16.mxu0 0
        %1178 = vmatmul.mubr.bf16.gmra.mrb[0].mxu0 %v1129
        %v1179 = vpop.f32.mrb[0].mxu0
        %v1180 = vadd.f32 %v556, %v1179
        %v1181 = vpop.f32.mrb[0].mxu0
        %v1182 = vpop.f32.mrb[0].mxu0
        %v1183 = vadd.f32 %v556, %v1182
        %v1184 = vpop.f32.mrb[0].mxu0
        %1185 = vdwg.mxu0
        %v1186 = vsel %vm583, %v1172, -inf
        %1187 = vmax.xlane.f32.xlu0 %v1186
        %v1188 = vpop.xlane.xlu0 %1187
        %v1189 = vsel %vm583, %v1175, -inf
        %1190 = vmax.xlane.f32.xlu0 %v1189
        %v1191 = vpop.xlane.xlu0 %1190
        %v1192 = vsel %vm583, %v1180, -inf
        %1193 = vmax.xlane.f32.xlu0 %v1192
        %v1194 = vpop.xlane.xlu0 %1193
        %v1195 = vsel %vm583, %v1183, -inf
        %1196 = vmax.xlane.f32.xlu0 %v1195
        %v1197 = vpop.xlane.xlu0 %1196
        %v1198 = vsub.f32 %v1172, %v1188
        %v1199 = vsub.f32 %v1175, %v1191
        %v1200 = vsub.f32 %v1180, %v1194
        %v1201 = vsub.f32 %v1183, %v1197
        %v1202 = vmul.f32 %v1198, 1.442695
        %v1203 = vpow.pop %v1202
        %v1204 = vmul.f32 %v1199, 1.442695
        %v1205 = vpow.pop %v1204
        %v1206 = vmul.f32 %v1200, 1.442695
        %v1207 = vpow.pop %v1206
        %v1208 = vmul.f32 %v1201, 1.442695
        %v1209 = vpow.pop %v1208
        %v1210 = vsel %vm583, %v1203, 0.0
        %1211 = vadd.xlane.f32.xlu0 %v1210
        %v1212 = vpop.xlane.xlu0 %1211
        %v1213 = vsel %vm583, %v1205, 0.0
        %1214 = vadd.xlane.f32.xlu0 %v1213
        %v1215 = vpop.xlane.xlu0 %1214
        %v1216 = vsel %vm583, %v1207, 0.0
        %1217 = vadd.xlane.f32.xlu0 %v1216
        %v1218 = vpop.xlane.xlu0 %1217
        %v1219 = vsel %vm583, %v1209, 0.0
        %1220 = vadd.xlane.f32.xlu0 %v1219
        %v1221 = vpop.xlane.xlu0 %1220
        %v1222 = vrcp.pop %v1212
        %v1223 = vrcp.pop %v1215
        %v1224 = vrcp.pop %v1218
        %v1225 = vrcp.pop %v1221
        %v1226 = vmul.f32 %v1203, %v1222
        %v1227 = vmul.f32 %v1205, %v1223
        %v1228 = vmul.f32 %v1207, %v1224
        %v1229 = vmul.f32 %v1209, %v1225
        %v1230 = vpack.c.bf16 %v1227, %v1226
        %v1231 = vpack.c.bf16 %v1229, %v1228
        %1232 = vrot.lane.b32.xlu0 %v639, 48
        %v1233 = vpop.permute.xlu0 %1232
        %1234 = vrot.lane.b32.xlu0 %v640, 48
        %v1235 = vpop.permute.xlu0 %1234
        %v1239 = vsel %vm583, %v1230, 0
        %v1242 = vsel %vm583, %v1231, 0
        %1244 = vmatprep.subr.bf16.mxu0 0
        %1245 = vmatpush1.bf16.msra.mxu0 %v1233
        %1246 = vmatprep.subr.bf16.mxu0 0
        %1247 = vmatpush1.bf16.msra.mxu0 %v1235
        %1248 = vmatprep.subr.bf16.mxu0 0
        %1249 = vmatpush1.bf16.msra.mxu0 0
        %1250 = vmatprep.subr.bf16.mxu0 0
        %1251 = vmatpush1.bf16.msra.mxu0 0
        %1252 = vmatprep.subr.bf16.mxu0 0
        %1253 = vmatpush1.bf16.msra.mxu0 0
        %1254 = vmatprep.subr.bf16.mxu0 0
        %1255 = vmatpush1.bf16.msra.mxu0 0
        %1256 = vmatprep.subr.bf16.mxu0 0
        %1257 = vmatpush1.bf16.msra.mxu0 0
        %1258 = vmatprep.subr.bf16.mxu0 0
        %1259 = vmatpush1.bf16.msra.mxu0 0
        %1260 = vmatprep.subr.bf16.mxu0 0
        %1261 = vmatpush1.bf16.msra.mxu0 0
        %1262 = vmatprep.subr.bf16.mxu0 0
        %1263 = vmatpush1.bf16.msra.mxu0 0
        %1264 = vmatprep.subr.bf16.mxu0 0
        %1265 = vmatpush1.bf16.msra.mxu0 0
        %1266 = vmatprep.subr.bf16.mxu0 0
        %1267 = vmatpush1.bf16.msra.mxu0 0
        %1268 = vmatprep.subr.bf16.mxu0 0
        %1269 = vmatpush1.bf16.msra.mxu0 0
        %1270 = vmatprep.subr.bf16.mxu0 0
        %1271 = vmatpush1.bf16.msra.mxu0 0
        %1272 = vmatprep.subr.bf16.mxu0 0
        %1273 = vmatpush1.bf16.msra.mxu0 0
        %1274 = vmatprep.subr.bf16.mxu0 0
        %1275 = vmatpush1.bf16.msra.mxu0 0
        %1276 = vmatprep.mubr.bf16.mxu0 0
        %1277 = vmatmul.mubr.bf16.gmra.mrb[0].mxu0 %v1239
        %v1278 = vpop.f32.mrb[0].mxu0
        %v1279 = vadd.f32 0.0, %v1278
        %v1280 = vpop.f32.mrb[0].mxu0
        %v1281 = vpop.f32.mrb[0].mxu0
        %v1282 = vadd.f32 0.0, %v1281
        %v1283 = vpop.f32.mrb[0].mxu0
        %1284 = vmatprep.mubr.bf16.mxu0 0
        %1285 = vmatmul.mubr.bf16.gmra.mrb[0].mxu0 %v1242
        %v1286 = vpop.f32.mrb[0].mxu0
        %v1287 = vadd.f32 0.0, %v1286
        %v1288 = vpop.f32.mrb[0].mxu0
        %v1289 = vpop.f32.mrb[0].mxu0
        %v1290 = vadd.f32 0.0, %v1289
        %v1291 = vpop.f32.mrb[0].mxu0
        %1292 = vdwg.mxu0
        %v1293 = vpack.c.bf16 %v1282, %v1279
        %v1294 = vpack.c.bf16 %v1290, %v1287
        %v1296 = vsel %vm651, %v1293, 0
        %v1299 = vsel %vm651, %v1294, 0
        %v1302 = vsel %vm1006, %v643, 0
        %1304 = vmatprep.subr.bf16.mxu0 0
        %1305 = vmatpush1.bf16.msra.mxu0 %v1302
        %1306 = vmatprep.subr.bf16.mxu0 0
        %1307 = vmatpush1.bf16.msra.mxu0 0
        %1308 = vmatprep.subr.bf16.mxu0 0
        %1309 = vmatpush1.bf16.msra.mxu0 0
        %1310 = vmatprep.subr.bf16.mxu0 0
        %1311 = vmatpush1.bf16.msra.mxu0 0
        %1312 = vmatprep.subr.bf16.mxu0 0
        %1313 = vmatpush1.bf16.msra.mxu0 0
        %1314 = vmatprep.subr.bf16.mxu0 0
        %1315 = vmatpush1.bf16.msra.mxu0 0
        %1316 = vmatprep.subr.bf16.mxu0 0
        %1317 = vmatpush1.bf16.msra.mxu0 0
        %1318 = vmatprep.subr.bf16.mxu0 0
        %1319 = vmatpush1.bf16.msra.mxu0 0
        %1320 = vmatprep.subr.bf16.mxu0 0
        %1321 = vmatpush1.bf16.msra.mxu0 0
        %1322 = vmatprep.subr.bf16.mxu0 0
        %1323 = vmatpush1.bf16.msra.mxu0 0
        %1324 = vmatprep.subr.bf16.mxu0 0
        %1325 = vmatpush1.bf16.msra.mxu0 0
        %1326 = vmatprep.subr.bf16.mxu0 0
        %1327 = vmatpush1.bf16.msra.mxu0 0
        %1328 = vmatprep.subr.bf16.mxu0 0
        %1329 = vmatpush1.bf16.msra.mxu0 0
        %1330 = vmatprep.subr.bf16.mxu0 0
        %1331 = vmatpush1.bf16.msra.mxu0 0
        %1332 = vmatprep.subr.bf16.mxu0 0
        %1333 = vmatpush1.bf16.msra.mxu0 0
        %1334 = vmatprep.subr.bf16.mxu0 0
        %1335 = vmatpush1.bf16.msra.mxu0 0
        %1336 = vmatprep.mubr.bf16.mxu0 0
        %1337 = vmatmul.mubr.bf16.gmra.mrb[0].mxu0 %v1296
        %v1338 = vpop.f32.mrb[0].mxu0
        %v1339 = vadd.f32 0.0, %v1338
        %v1340 = vpop.f32.mrb[0].mxu0
        %v1341 = vpop.f32.mrb[0].mxu0
        %v1342 = vadd.f32 0.0, %v1341
        %v1343 = vpop.f32.mrb[0].mxu0
        %1344 = vmatprep.mubr.bf16.mxu0 0
        %1345 = vmatmul.mubr.bf16.gmra.mrb[0].mxu0 %v1299
        %v1346 = vpop.f32.mrb[0].mxu0
        %v1347 = vadd.f32 0.0, %v1346
        %v1348 = vpop.f32.mrb[0].mxu0
        %v1349 = vpop.f32.mrb[0].mxu0
        %v1350 = vadd.f32 0.0, %v1349
        %v1351 = vpop.f32.mrb[0].mxu0
        %1352 = vdwg.mxu0
        %v1353 = vadd.f32 %v1103, %v1339
        %v1354 = vadd.f32 %v1106, %v1342
        %v1355 = vadd.f32 %v1111, %v1347
        %v1356 = vadd.f32 %v1114, %v1350
        %1357 = vrot.lane.b32.xlu0 %v639, 104
        %v1358 = vpop.permute.xlu0 %1357
        %1359 = vrot.lane.b32.xlu0 %v640, 104
        %v1360 = vpop.permute.xlu0 %1359
        %1361 = vrot.lane.b32.xlu0 %v639, 72
        %v1362 = vpop.permute.xlu0 %1361
        %1363 = vrot.lane.b32.xlu0 %v640, 72
        %v1364 = vpop.permute.xlu0 %1363
        %v1366 = vsel %vm651, %v1358, 0
        %v1369 = vsel %vm651, %v1360, 0
        %v1372 = vsel %vm651, %v1362, 0
        %v1375 = vsel %vm651, %v1364, 0
        %1377 = vmatprep.subr.bf16.mxu0 0
        %1378 = vmatpush1.bf16.xpose.msra.mxu0 %v1372
        %1379 = vmatprep.subr.bf16.mxu0 0
        %1380 = vmatpush1.bf16.xpose.msra.mxu0 %v1375
        %1381 = vmatprep.subr.bf16.mxu0 0
        %1382 = vmatpush1.bf16.xpose.msra.mxu0 0
        %1383 = vmatprep.subr.bf16.mxu0 0
        %1384 = vmatpush1.bf16.xpose.msra.mxu0 0
        %1385 = vmatprep.subr.bf16.mxu0 0
        %1386 = vmatpush1.bf16.xpose.msra.mxu0 0
        %1387 = vmatprep.subr.bf16.mxu0 0
        %1388 = vmatpush1.bf16.xpose.msra.mxu0 0
        %1389 = vmatprep.subr.bf16.mxu0 0
        %1390 = vmatpush1.bf16.xpose.msra.mxu0 0
        %1391 = vmatprep.subr.bf16.mxu0 0
        %1392 = vmatpush1.bf16.xpose.msra.mxu0 0
        %1393 = vmatprep.subr.bf16.mxu0 0
        %1394 = vmatpush1.bf16.xpose.msra.mxu0 0
        %1395 = vmatprep.subr.bf16.mxu0 0
        %1396 = vmatpush1.bf16.xpose.msra.mxu0 0
        %1397 = vmatprep.subr.bf16.mxu0 0
        %1398 = vmatpush1.bf16.xpose.msra.mxu0 0
        %1399 = vmatprep.subr.bf16.mxu0 0
        %1400 = vmatpush1.bf16.xpose.msra.mxu0 0
        %1401 = vmatprep.subr.bf16.mxu0 0
        %1402 = vmatpush1.bf16.xpose.msra.mxu0 0
        %1403 = vmatprep.subr.bf16.mxu0 0
        %1404 = vmatpush1.bf16.xpose.msra.mxu0 0
        %1405 = vmatprep.subr.bf16.mxu0 0
        %1406 = vmatpush1.bf16.xpose.msra.mxu0 0
        %1407 = vmatprep.subr.bf16.mxu0 0
        %1408 = vmatpush1.bf16.xpose.msra.mxu0 0
        %1409 = vmatprep.mubr.bf16.mxu0 0
        %1410 = vmatmul.mubr.bf16.gmra.mrb[0].mxu0 %v1366
        %v1411 = vpop.f32.mrb[0].mxu0
        %v1412 = vadd.f32 %v556, %v1411
        %v1413 = vpop.f32.mrb[0].mxu0
        %v1414 = vpop.f32.mrb[0].mxu0
        %v1415 = vadd.f32 %v556, %v1414
        %v1416 = vpop.f32.mrb[0].mxu0
        %1417 = vmatprep.mubr.bf16.mxu0 0
        %1418 = vmatmul.mubr.bf16.gmra.mrb[0].mxu0 %v1369
        %v1419 = vpop.f32.mrb[0].mxu0
        %v1420 = vadd.f32 %v556, %v1419
        %v1421 = vpop.f32.mrb[0].mxu0
        %v1422 = vpop.f32.mrb[0].mxu0
        %v1423 = vadd.f32 %v556, %v1422
        %v1424 = vpop.f32.mrb[0].mxu0
        %1425 = vdwg.mxu0
        %v1426 = vsel %vm583, %v1412, -inf
        %1427 = vmax.xlane.f32.xlu0 %v1426
        %v1428 = vpop.xlane.xlu0 %1427
        %v1429 = vsel %vm583, %v1415, -inf
        %1430 = vmax.xlane.f32.xlu0 %v1429
        %v1431 = vpop.xlane.xlu0 %1430
        %v1432 = vsel %vm583, %v1420, -inf
        %1433 = vmax.xlane.f32.xlu0 %v1432
        %v1434 = vpop.xlane.xlu0 %1433
        %v1435 = vsel %vm583, %v1423, -inf
        %1436 = vmax.xlane.f32.xlu0 %v1435
        %v1437 = vpop.xlane.xlu0 %1436
        %v1438 = vsub.f32 %v1412, %v1428
        %v1439 = vsub.f32 %v1415, %v1431
        %v1440 = vsub.f32 %v1420, %v1434
        %v1441 = vsub.f32 %v1423, %v1437
        %v1442 = vmul.f32 %v1438, 1.442695
        %v1443 = vpow.pop %v1442
        %v1444 = vmul.f32 %v1439, 1.442695
        %v1445 = vpow.pop %v1444
        %v1446 = vmul.f32 %v1440, 1.442695
        %v1447 = vpow.pop %v1446
        %v1448 = vmul.f32 %v1441, 1.442695
        %v1449 = vpow.pop %v1448
        %v1450 = vsel %vm583, %v1443, 0.0
        %1451 = vadd.xlane.f32.xlu0 %v1450
        %v1452 = vpop.xlane.xlu0 %1451
        %v1453 = vsel %vm583, %v1445, 0.0
        %1454 = vadd.xlane.f32.xlu0 %v1453
        %v1455 = vpop.xlane.xlu0 %1454
        %v1456 = vsel %vm583, %v1447, 0.0
        %1457 = vadd.xlane.f32.xlu0 %v1456
        %v1458 = vpop.xlane.xlu0 %1457
        %v1459 = vsel %vm583, %v1449, 0.0
        %1460 = vadd.xlane.f32.xlu0 %v1459
        %v1461 = vpop.xlane.xlu0 %1460
        %v1462 = vrcp.pop %v1452
        %v1463 = vrcp.pop %v1455
        %v1464 = vrcp.pop %v1458
        %v1465 = vrcp.pop %v1461
        %v1466 = vmul.f32 %v1443, %v1462
        %v1467 = vmul.f32 %v1445, %v1463
        %v1468 = vmul.f32 %v1447, %v1464
        %v1469 = vmul.f32 %v1449, %v1465
        %v1470 = vpack.c.bf16 %v1467, %v1466
        %v1471 = vpack.c.bf16 %v1469, %v1468
        %1472 = vrot.lane.b32.xlu0 %v639, 40
        %v1473 = vpop.permute.xlu0 %1472
        %1474 = vrot.lane.b32.xlu0 %v640, 40
        %v1475 = vpop.permute.xlu0 %1474
        %v1479 = vsel %vm583, %v1470, 0
        %v1482 = vsel %vm583, %v1471, 0
        %1484 = vmatprep.subr.bf16.mxu0 0
        %1485 = vmatpush1.bf16.msra.mxu0 %v1473
        %1486 = vmatprep.subr.bf16.mxu0 0
        %1487 = vmatpush1.bf16.msra.mxu0 %v1475
        %1488 = vmatprep.subr.bf16.mxu0 0
        %1489 = vmatpush1.bf16.msra.mxu0 0
        %1490 = vmatprep.subr.bf16.mxu0 0
        %1491 = vmatpush1.bf16.msra.mxu0 0
        %1492 = vmatprep.subr.bf16.mxu0 0
        %1493 = vmatpush1.bf16.msra.mxu0 0
        %1494 = vmatprep.subr.bf16.mxu0 0
        %1495 = vmatpush1.bf16.msra.mxu0 0
        %1496 = vmatprep.subr.bf16.mxu0 0
        %1497 = vmatpush1.bf16.msra.mxu0 0
        %1498 = vmatprep.subr.bf16.mxu0 0
        %1499 = vmatpush1.bf16.msra.mxu0 0
        %1500 = vmatprep.subr.bf16.mxu0 0
        %1501 = vmatpush1.bf16.msra.mxu0 0
        %1502 = vmatprep.subr.bf16.mxu0 0
        %1503 = vmatpush1.bf16.msra.mxu0 0
        %1504 = vmatprep.subr.bf16.mxu0 0
        %1505 = vmatpush1.bf16.msra.mxu0 0
        %1506 = vmatprep.subr.bf16.mxu0 0
        %1507 = vmatpush1.bf16.msra.mxu0 0
        %1508 = vmatprep.subr.bf16.mxu0 0
        %1509 = vmatpush1.bf16.msra.mxu0 0
        %1510 = vmatprep.subr.bf16.mxu0 0
        %1511 = vmatpush1.bf16.msra.mxu0 0
        %1512 = vmatprep.subr.bf16.mxu0 0
        %1513 = vmatpush1.bf16.msra.mxu0 0
        %1514 = vmatprep.subr.bf16.mxu0 0
        %1515 = vmatpush1.bf16.msra.mxu0 0
        %1516 = vmatprep.mubr.bf16.mxu0 0
        %1517 = vmatmul.mubr.bf16.gmra.mrb[0].mxu0 %v1479
        %v1518 = vpop.f32.mrb[0].mxu0
        %v1519 = vadd.f32 0.0, %v1518
        %v1520 = vpop.f32.mrb[0].mxu0
        %v1521 = vpop.f32.mrb[0].mxu0
        %v1522 = vadd.f32 0.0, %v1521
        %v1523 = vpop.f32.mrb[0].mxu0
        %1524 = vmatprep.mubr.bf16.mxu0 0
        %1525 = vmatmul.mubr.bf16.gmra.mrb[0].mxu0 %v1482
        %v1526 = vpop.f32.mrb[0].mxu0
        %v1527 = vadd.f32 0.0, %v1526
        %v1528 = vpop.f32.mrb[0].mxu0
        %v1529 = vpop.f32.mrb[0].mxu0
        %v1530 = vadd.f32 0.0, %v1529
        %v1531 = vpop.f32.mrb[0].mxu0
        %1532 = vdwg.mxu0
        %v1533 = vpack.c.bf16 %v1522, %v1519
        %v1534 = vpack.c.bf16 %v1530, %v1527
        %v1536 = vsel %vm651, %v1533, 0
        %v1539 = vsel %vm651, %v1534, 0
        %v1542 = vsel %vm1006, %v644, 0
        %1544 = vmatprep.subr.bf16.mxu0 0
        %1545 = vmatpush1.bf16.msra.mxu0 %v1542
        %1546 = vmatprep.subr.bf16.mxu0 0
        %1547 = vmatpush1.bf16.msra.mxu0 0
        %1548 = vmatprep.subr.bf16.mxu0 0
        %1549 = vmatpush1.bf16.msra.mxu0 0
        %1550 = vmatprep.subr.bf16.mxu0 0
        %1551 = vmatpush1.bf16.msra.mxu0 0
        %1552 = vmatprep.subr.bf16.mxu0 0
        %1553 = vmatpush1.bf16.msra.mxu0 0
        %1554 = vmatprep.subr.bf16.mxu0 0
        %1555 = vmatpush1.bf16.msra.mxu0 0
        %1556 = vmatprep.subr.bf16.mxu0 0
        %1557 = vmatpush1.bf16.msra.mxu0 0
        %1558 = vmatprep.subr.bf16.mxu0 0
        %1559 = vmatpush1.bf16.msra.mxu0 0
        %1560 = vmatprep.subr.bf16.mxu0 0
        %1561 = vmatpush1.bf16.msra.mxu0 0
        %1562 = vmatprep.subr.bf16.mxu0 0
        %1563 = vmatpush1.bf16.msra.mxu0 0
        %1564 = vmatprep.subr.bf16.mxu0 0
        %1565 = vmatpush1.bf16.msra.mxu0 0
        %1566 = vmatprep.subr.bf16.mxu0 0
        %1567 = vmatpush1.bf16.msra.mxu0 0
        %1568 = vmatprep.subr.bf16.mxu0 0
        %1569 = vmatpush1.bf16.msra.mxu0 0
        %1570 = vmatprep.subr.bf16.mxu0 0
        %1571 = vmatpush1.bf16.msra.mxu0 0
        %1572 = vmatprep.subr.bf16.mxu0 0
        %1573 = vmatpush1.bf16.msra.mxu0 0
        %1574 = vmatprep.subr.bf16.mxu0 0
        %1575 = vmatpush1.bf16.msra.mxu0 0
        %1576 = vmatprep.mubr.bf16.mxu0 0
        %1577 = vmatmul.mubr.bf16.gmra.mrb[0].mxu0 %v1536
        %v1578 = vpop.f32.mrb[0].mxu0
        %v1579 = vadd.f32 0.0, %v1578
        %v1580 = vpop.f32.mrb[0].mxu0
        %v1581 = vpop.f32.mrb[0].mxu0
        %v1582 = vadd.f32 0.0, %v1581
        %v1583 = vpop.f32.mrb[0].mxu0
        %1584 = vmatprep.mubr.bf16.mxu0 0
        %1585 = vmatmul.mubr.bf16.gmra.mrb[0].mxu0 %v1539
        %v1586 = vpop.f32.mrb[0].mxu0
        %v1587 = vadd.f32 0.0, %v1586
        %v1588 = vpop.f32.mrb[0].mxu0
        %v1589 = vpop.f32.mrb[0].mxu0
        %v1590 = vadd.f32 0.0, %v1589
        %v1591 = vpop.f32.mrb[0].mxu0
        %1592 = vdwg.mxu0
        %v1593 = vadd.f32 %v1353, %v1579
        %v1594 = vadd.f32 %v1354, %v1582
        %v1595 = vadd.f32 %v1355, %v1587
        %v1596 = vadd.f32 %v1356, %v1590
        %v1597 = vld [vmem:[%s6] sm:$0x1]
        %v1599 = vlaneseq
        %v1600 = vshrl.u32 %v1599, 7
        %v1601 = vsub.s32 0, %v1600
        %v1602 = vrot.slane %v1597, %v1601
        %v1604 = vadd.f32 %v1593, %v1602
        %v1605 = vadd.f32 %v1594, %v1602
        %v1606 = vadd.f32 %v1595, %v1602
        %v1607 = vadd.f32 %v1596, %v1602
        %v1608 = vadd.f32 %v543, %v1604
        %v1609 = vadd.f32 %v544, %v1605
        %v1610 = vadd.f32 %v545, %v1606
        %v1611 = vadd.f32 %v546, %v1607
        %v1612 = vld [vmem:[%s11] sm:$0x1]
        %v1613 = vld [vmem:[%s12] sm:$0x1]
        %v1614 = vsel %vm583, %v1608, 0.0
        %1615 = vadd.xlane.f32.xlu0 %v1614
        %v1616 = vpop.xlane.xlu0 %1615
        %v1617 = vsel %vm583, %v1609, 0.0
        %1618 = vadd.xlane.f32.xlu0 %v1617
        %v1619 = vpop.xlane.xlu0 %1618
        %v1620 = vsel %vm583, %v1610, 0.0
        %1621 = vadd.xlane.f32.xlu0 %v1620
        %v1622 = vpop.xlane.xlu0 %1621
        %v1623 = vsel %vm583, %v1611, 0.0
        %1624 = vadd.xlane.f32.xlu0 %v1623
        %v1625 = vpop.xlane.xlu0 %1624
        %v1626 = vrcp.pop 32.0
        %v1627 = vmul.f32 %v1616, %v1626
        %v1628 = vmul.f32 %v1619, %v1626
        %v1629 = vmul.f32 %v1622, %v1626
        %v1630 = vmul.f32 %v1625, %v1626
        %v1631 = vmul.f32 %v1608, %v1608
        %v1632 = vmul.f32 %v1609, %v1609
        %v1633 = vmul.f32 %v1610, %v1610
        %v1634 = vmul.f32 %v1611, %v1611
        %v1635 = vsel %vm583, %v1631, 0.0
        %1636 = vadd.xlane.f32.xlu0 %v1635
        %v1637 = vpop.xlane.xlu0 %1636
        %v1638 = vsel %vm583, %v1632, 0.0
        %1639 = vadd.xlane.f32.xlu0 %v1638
        %v1640 = vpop.xlane.xlu0 %1639
        %v1641 = vsel %vm583, %v1633, 0.0
        %1642 = vadd.xlane.f32.xlu0 %v1641
        %v1643 = vpop.xlane.xlu0 %1642
        %v1644 = vsel %vm583, %v1634, 0.0
        %1645 = vadd.xlane.f32.xlu0 %v1644
        %v1646 = vpop.xlane.xlu0 %1645
        %v1647 = vmul.f32 %v1637, %v1626
        %v1648 = vmul.f32 %v1640, %v1626
        %v1649 = vmul.f32 %v1643, %v1626
        %v1650 = vmul.f32 %v1646, %v1626
        %v1651 = vmul.f32 %v1627, %v1627
        %v1652 = vmul.f32 %v1628, %v1628
        %v1653 = vmul.f32 %v1629, %v1629
        %v1654 = vmul.f32 %v1630, %v1630
        %v1655 = vsub.f32 %v1647, %v1651
        %v1656 = vsub.f32 %v1648, %v1652
        %v1657 = vsub.f32 %v1649, %v1653
        %v1658 = vsub.f32 %v1650, %v1654
        %v1659 = vmax.f32 %v1655, 0.0
        %v1660 = vmax.f32 %v1656, 0.0
        %v1661 = vmax.f32 %v1657, 0.0
        %v1662 = vmax.f32 %v1658, 0.0
        %v1663 = vsub.f32 %v1608, %v1627
        %v1664 = vsub.f32 %v1609, %v1628
        %v1665 = vsub.f32 %v1610, %v1629
        %v1666 = vsub.f32 %v1611, %v1630
        %v1667 = vadd.f32 %v1659, 1e-05
        %v1668 = vadd.f32 %v1660, 1e-05
        %v1669 = vadd.f32 %v1661, 1e-05
        %v1670 = vadd.f32 %v1662, 1e-05
        %v1671 = vrsqrt.pop %v1667
        %v1672 = vrsqrt.pop %v1668
        %v1673 = vrsqrt.pop %v1669
        %v1674 = vrsqrt.pop %v1670
        %v1675 = vmul.f32 %v1663, %v1671
        %v1676 = vmul.f32 %v1664, %v1672
        %v1677 = vmul.f32 %v1665, %v1673
        %v1678 = vmul.f32 %v1666, %v1674
        %v1680 = vlaneseq
        %v1681 = vshrl.u32 %v1680, 7
        %v1682 = vsub.s32 0, %v1681
        %v1683 = vrot.slane %v1612, %v1682
        %v1685 = vmul.f32 %v1675, %v1683
        %v1686 = vmul.f32 %v1676, %v1683
        %v1687 = vmul.f32 %v1677, %v1683
        %v1688 = vmul.f32 %v1678, %v1683
        %v1690 = vlaneseq
        %v1691 = vshrl.u32 %v1690, 7
        %v1692 = vsub.s32 0, %v1691
        %v1693 = vrot.slane %v1613, %v1692
        %v1695 = vadd.f32 %v1685, %v1693
        %v1696 = vadd.f32 %v1686, %v1693
        %v1697 = vadd.f32 %v1687, %v1693
        %v1698 = vadd.f32 %v1688, %v1693
        %v1699 = vpack.c.bf16 %v1696, %v1695
        %v1700 = vpack.c.bf16 %v1698, %v1697
        %v1701 = vld [vmem:[#allocation2] sm:$0xf]
        %v1702 = vld [vmem:[#allocation2 + $0x4] sm:$0xf]
        %v1703 = vld [vmem:[#allocation2 + $0x8] sm:$0xf]
        %v1704 = vld [vmem:[#allocation2 + $0xc] sm:$0xf]
        %v1705 = vld [vmem:[%s8] sm:$0x1]
        %v1707 = vlaneseq
        %v1708 = vshrl.u32 %v1707, 7
        %v1709 = vsub.s32 0, %v1708
        %v1710 = vrot.slane %v1705, %v1709
        %v1716 = vunpack.c.l.b16 %v1701
        %v1717 = vunpack.c.l.b16 %v1702
        %v1718 = vunpack.c.l.b16 %v1703
        %v1719 = vunpack.c.l.b16 %v1704
        %v1720 = vpack.c.b16 %v1717, %v1716
        %v1721 = vpack.c.b16 %v1719, %v1718
        %v1725 = vsel %vm583, %v1699, 0
        %v1728 = vsel %vm583, %v1700, 0
        %1730 = vmatprep.subr.bf16.mxu0 0
        %1731 = vmatpush1.bf16.msra.mxu0 %v1720
        %1732 = vmatprep.subr.bf16.mxu0 0
        %1733 = vmatpush1.bf16.msra.mxu0 %v1721
        %1734 = vmatprep.subr.bf16.mxu0 0
        %1735 = vmatpush1.bf16.msra.mxu0 0
        %1736 = vmatprep.subr.bf16.mxu0 0
        %1737 = vmatpush1.bf16.msra.mxu0 0
        %1738 = vmatprep.subr.bf16.mxu0 0
        %1739 = vmatpush1.bf16.msra.mxu0 0
        %1740 = vmatprep.subr.bf16.mxu0 0
        %1741 = vmatpush1.bf16.msra.mxu0 0
        %1742 = vmatprep.subr.bf16.mxu0 0
        %1743 = vmatpush1.bf16.msra.mxu0 0
        %1744 = vmatprep.subr.bf16.mxu0 0
        %1745 = vmatpush1.bf16.msra.mxu0 0
        %1746 = vmatprep.subr.bf16.mxu0 0
        %1747 = vmatpush1.bf16.msra.mxu0 0
        %1748 = vmatprep.subr.bf16.mxu0 0
        %1749 = vmatpush1.bf16.msra.mxu0 0
        %1750 = vmatprep.subr.bf16.mxu0 0
        %1751 = vmatpush1.bf16.msra.mxu0 0
        %1752 = vmatprep.subr.bf16.mxu0 0
        %1753 = vmatpush1.bf16.msra.mxu0 0
        %1754 = vmatprep.subr.bf16.mxu0 0
        %1755 = vmatpush1.bf16.msra.mxu0 0
        %1756 = vmatprep.subr.bf16.mxu0 0
        %1757 = vmatpush1.bf16.msra.mxu0 0
        %1758 = vmatprep.subr.bf16.mxu0 0
        %1759 = vmatpush1.bf16.msra.mxu0 0
        %1760 = vmatprep.subr.bf16.mxu0 0
        %1761 = vmatpush1.bf16.msra.mxu0 0
        %1762 = vmatprep.mubr.bf16.mxu0 0
        %1763 = vmatmul.mubr.bf16.gmra.mrb[0].mxu0 %v1725
        %v1764 = vpop.f32.mrb[0].mxu0
        %v1765 = vadd.f32 %v1710, %v1764
        %v1766 = vpop.f32.mrb[0].mxu0
        %v1767 = vpop.f32.mrb[0].mxu0
        %v1768 = vadd.f32 %v1710, %v1767
        %v1769 = vpop.f32.mrb[0].mxu0
        %1770 = vmatprep.mubr.bf16.mxu0 0
        %1771 = vmatmul.mubr.bf16.gmra.mrb[0].mxu0 %v1728
        %v1772 = vpop.f32.mrb[0].mxu0
        %v1773 = vadd.f32 %v1710, %v1772
        %v1774 = vpop.f32.mrb[0].mxu0
        %v1775 = vpop.f32.mrb[0].mxu0
        %v1776 = vadd.f32 %v1710, %v1775
        %v1777 = vpop.f32.mrb[0].mxu0
        %1778 = vdwg.mxu0
        %v1779 = vmax.f32 %v1765, 0.0
        %v1780 = vmax.f32 %v1768, 0.0
        %v1781 = vmax.f32 %v1773, 0.0
        %v1782 = vmax.f32 %v1776, 0.0
        %v1783 = vpack.c.bf16 %v1780, %v1779
        %v1784 = vpack.c.bf16 %v1782, %v1781
        %v1785 = vld [vmem:[%s9] sm:$0xf]
        %v1786 = vld [vmem:[%s9 + $0x4] sm:$0xf]
        %v1787 = vld [vmem:[%s9 + $0x8] sm:$0xf]
        %v1788 = vld [vmem:[%s9 + $0xc] sm:$0xf]
        %v1789 = vld [vmem:[%s9 + $0x10] sm:$0xf]
        %v1790 = vld [vmem:[%s9 + $0x14] sm:$0xf]
        %v1791 = vld [vmem:[%s9 + $0x18] sm:$0xf]
        %v1792 = vld [vmem:[%s9 + $0x1c] sm:$0xf]
        %v1793 = vld [vmem:[%s10] sm:$0x1]
        %v1795 = vlaneseq
        %v1796 = vshrl.u32 %v1795, 7
        %v1797 = vsub.s32 0, %v1796
        %v1798 = vrot.slane %v1793, %v1797
        %v1808 = vunpack.c.l.b16 %v1785
        %v1809 = vunpack.c.l.b16 %v1786
        %v1810 = vunpack.c.l.b16 %v1787
        %v1811 = vunpack.c.l.b16 %v1788
        %v1812 = vunpack.c.l.b16 %v1789
        %v1813 = vunpack.c.l.b16 %v1790
        %v1814 = vunpack.c.l.b16 %v1791
        %v1815 = vunpack.c.l.b16 %v1792
        %v1816 = vpack.c.b16 %v1809, %v1808
        %v1817 = vpack.c.b16 %v1811, %v1810
        %v1818 = vpack.c.b16 %v1813, %v1812
        %v1819 = vpack.c.b16 %v1815, %v1814
        %vm1824 = vcmask 523264
        %v1826 = vsel %vm1824, %v1783, 0
        %v1829 = vsel %vm1824, %v1784, 0
        %1831 = vmatprep.subr.bf16.mxu0 0
        %1832 = vmatpush1.bf16.msra.mxu0 %v1816
        %1833 = vmatprep.subr.bf16.mxu0 0
        %1834 = vmatpush1.bf16.msra.mxu0 %v1817
        %1835 = vmatprep.subr.bf16.mxu0 0
        %1836 = vmatpush1.bf16.msra.mxu0 %v1818
        %1837 = vmatprep.subr.bf16.mxu0 0
        %1838 = vmatpush1.bf16.msra.mxu0 %v1819
        %1839 = vmatprep.subr.bf16.mxu0 0
        %1840 = vmatpush1.bf16.msra.mxu0 0
        %1841 = vmatprep.subr.bf16.mxu0 0
        %1842 = vmatpush1.bf16.msra.mxu0 0
        %1843 = vmatprep.subr.bf16.mxu0 0
        %1844 = vmatpush1.bf16.msra.mxu0 0
        %1845 = vmatprep.subr.bf16.mxu0 0
        %1846 = vmatpush1.bf16.msra.mxu0 0
        %1847 = vmatprep.subr.bf16.mxu0 0
        %1848 = vmatpush1.bf16.msra.mxu0 0
        %1849 = vmatprep.subr.bf16.mxu0 0
        %1850 = vmatpush1.bf16.msra.mxu0 0
        %1851 = vmatprep.subr.bf16.mxu0 0
        %1852 = vmatpush1.bf16.msra.mxu0 0
        %1853 = vmatprep.subr.bf16.mxu0 0
        %1854 = vmatpush1.bf16.msra.mxu0 0
        %1855 = vmatprep.subr.bf16.mxu0 0
        %1856 = vmatpush1.bf16.msra.mxu0 0
        %1857 = vmatprep.subr.bf16.mxu0 0
        %1858 = vmatpush1.bf16.msra.mxu0 0
        %1859 = vmatprep.subr.bf16.mxu0 0
        %1860 = vmatpush1.bf16.msra.mxu0 0
        %1861 = vmatprep.subr.bf16.mxu0 0
        %1862 = vmatpush1.bf16.msra.mxu0 0
        %1863 = vmatprep.mubr.bf16.mxu0 0
        %1864 = vmatmul.mubr.bf16.gmra.mrb[0].mxu0 %v1826
        %v1865 = vpop.f32.mrb[0].mxu0
        %v1866 = vadd.f32 %v1798, %v1865
        %v1867 = vpop.f32.mrb[0].mxu0
        %v1868 = vpop.f32.mrb[0].mxu0
        %v1869 = vadd.f32 %v1798, %v1868
        %v1870 = vpop.f32.mrb[0].mxu0
        %1871 = vmatprep.mubr.bf16.mxu0 0
        %1872 = vmatmul.mubr.bf16.gmra.mrb[0].mxu0 %v1829
        %v1873 = vpop.f32.mrb[0].mxu0
        %v1874 = vadd.f32 %v1798, %v1873
        %v1875 = vpop.f32.mrb[0].mxu0
        %v1876 = vpop.f32.mrb[0].mxu0
        %v1877 = vadd.f32 %v1798, %v1876
        %v1878 = vpop.f32.mrb[0].mxu0
        %1879 = vdwg.mxu0
        %v1880 = vadd.f32 %v1695, %v1866
        %v1881 = vadd.f32 %v1696, %v1869
        %v1882 = vadd.f32 %v1697, %v1874
        %v1883 = vadd.f32 %v1698, %v1877
        %v1884 = vld [vmem:[%s13] sm:$0x1]
        %v1885 = vld [vmem:[%s14] sm:$0x1]
        %v1886 = vsel %vm583, %v1880, 0.0
        %1887 = vadd.xlane.f32.xlu0 %v1886
        %v1888 = vpop.xlane.xlu0 %1887
        %v1889 = vsel %vm583, %v1881, 0.0
        %1890 = vadd.xlane.f32.xlu0 %v1889
        %v1891 = vpop.xlane.xlu0 %1890
        %v1892 = vsel %vm583, %v1882, 0.0
        %1893 = vadd.xlane.f32.xlu0 %v1892
        %v1894 = vpop.xlane.xlu0 %1893
        %v1895 = vsel %vm583, %v1883, 0.0
        %1896 = vadd.xlane.f32.xlu0 %v1895
        %v1897 = vpop.xlane.xlu0 %1896
        %v1898 = vmul.f32 %v1888, %v1626
        %v1899 = vmul.f32 %v1891, %v1626
        %v1900 = vmul.f32 %v1894, %v1626
        %v1901 = vmul.f32 %v1897, %v1626
        %v1902 = vmul.f32 %v1880, %v1880
        %v1903 = vmul.f32 %v1881, %v1881
        %v1904 = vmul.f32 %v1882, %v1882
        %v1905 = vmul.f32 %v1883, %v1883
        %v1906 = vsel %vm583, %v1902, 0.0
        %1907 = vadd.xlane.f32.xlu0 %v1906
        %v1908 = vpop.xlane.xlu0 %1907
        %v1909 = vsel %vm583, %v1903, 0.0
        %1910 = vadd.xlane.f32.xlu0 %v1909
        %v1911 = vpop.xlane.xlu0 %1910
        %v1912 = vsel %vm583, %v1904, 0.0
        %1913 = vadd.xlane.f32.xlu0 %v1912
        %v1914 = vpop.xlane.xlu0 %1913
        %v1915 = vsel %vm583, %v1905, 0.0
        %1916 = vadd.xlane.f32.xlu0 %v1915
        %v1917 = vpop.xlane.xlu0 %1916
        %v1918 = vmul.f32 %v1908, %v1626
        %v1919 = vmul.f32 %v1911, %v1626
        %v1920 = vmul.f32 %v1914, %v1626
        %v1921 = vmul.f32 %v1917, %v1626
        %v1922 = vmul.f32 %v1898, %v1898
        %v1923 = vmul.f32 %v1899, %v1899
        %v1924 = vmul.f32 %v1900, %v1900
        %v1925 = vmul.f32 %v1901, %v1901
        %v1926 = vsub.f32 %v1918, %v1922
        %v1927 = vsub.f32 %v1919, %v1923
        %v1928 = vsub.f32 %v1920, %v1924
        %v1929 = vsub.f32 %v1921, %v1925
        %v1930 = vmax.f32 %v1926, 0.0
        %v1931 = vmax.f32 %v1927, 0.0
        %v1932 = vmax.f32 %v1928, 0.0
        %v1933 = vmax.f32 %v1929, 0.0
        %v1934 = vsub.f32 %v1880, %v1898
        %v1935 = vsub.f32 %v1881, %v1899
        %v1936 = vsub.f32 %v1882, %v1900
        %v1937 = vsub.f32 %v1883, %v1901
        %v1938 = vadd.f32 %v1930, 1e-05
        %v1939 = vadd.f32 %v1931, 1e-05
        %v1940 = vadd.f32 %v1932, 1e-05
        %v1941 = vadd.f32 %v1933, 1e-05
        %v1942 = vrsqrt.pop %v1938
        %v1943 = vrsqrt.pop %v1939
        %v1944 = vrsqrt.pop %v1940
        %v1945 = vrsqrt.pop %v1941
        %v1946 = vmul.f32 %v1934, %v1942
        %v1947 = vmul.f32 %v1935, %v1943
        %v1948 = vmul.f32 %v1936, %v1944
        %v1949 = vmul.f32 %v1937, %v1945
        %v1951 = vlaneseq
        %v1952 = vshrl.u32 %v1951, 7
        %v1953 = vsub.s32 0, %v1952
        %v1954 = vrot.slane %v1884, %v1953
        %v1956 = vmul.f32 %v1946, %v1954
        %v1957 = vmul.f32 %v1947, %v1954
        %v1958 = vmul.f32 %v1948, %v1954
        %v1959 = vmul.f32 %v1949, %v1954
        %v1961 = vlaneseq
        %v1962 = vshrl.u32 %v1961, 7
        %v1963 = vsub.s32 0, %v1962
        %v1964 = vrot.slane %v1885, %v1963
        %v1966 = vadd.f32 %v1956, %v1964
        %v1967 = vadd.f32 %v1957, %v1964
        %v1968 = vadd.f32 %v1958, %v1964
        %v1969 = vadd.f32 %v1959, %v1964
        %v1970 = vpack.c.bf16 %v1967, %v1966
        %v1971 = vpack.c.bf16 %v1969, %v1968
        %s1972 = scalar_lea.vmem %s3, 16
        %v1973 = vld [vmem:[%s1972] sm:$0xf]
        %v1974 = vld [vmem:[%s1972 + $0x4] sm:$0xf]
        %v1975 = vld [vmem:[%s1972 + $0x8] sm:$0xf]
        %v1976 = vld [vmem:[%s1972 + $0xc] sm:$0xf]
        %s1977 = scalar_lea.vmem %s4, 1
        %v1978 = vld [vmem:[%s1977] sm:$0x1]
        %v1980 = vlaneseq
        %v1981 = vshrl.u32 %v1980, 7
        %v1982 = vsub.s32 0, %v1981
        %v1983 = vrot.slane %v1978, %v1982
        %v1989 = vunpack.c.l.b16 %v1973
        %v1990 = vunpack.c.l.b16 %v1974
        %v1991 = vunpack.c.l.b16 %v1975
        %v1992 = vunpack.c.l.b16 %v1976
        %v1993 = vpack.c.b16 %v1990, %v1989
        %v1994 = vpack.c.b16 %v1992, %v1991
        %v1998 = vsel %vm583, %v1970, 0
        %v2001 = vsel %vm583, %v1971, 0
        %2003 = vmatprep.subr.bf16.mxu0 0
        %2004 = vmatpush1.bf16.msra.mxu0 %v1993
        %2005 = vmatprep.subr.bf16.mxu0 0
        %2006 = vmatpush1.bf16.msra.mxu0 %v1994
        %2007 = vmatprep.subr.bf16.mxu0 0
        %2008 = vmatpush1.bf16.msra.mxu0 0
        %2009 = vmatprep.subr.bf16.mxu0 0
        %2010 = vmatpush1.bf16.msra.mxu0 0
        %2011 = vmatprep.subr.bf16.mxu0 0
        %2012 = vmatpush1.bf16.msra.mxu0 0
        %2013 = vmatprep.subr.bf16.mxu0 0
        %2014 = vmatpush1.bf16.msra.mxu0 0
        %2015 = vmatprep.subr.bf16.mxu0 0
        %2016 = vmatpush1.bf16.msra.mxu0 0
        %2017 = vmatprep.subr.bf16.mxu0 0
        %2018 = vmatpush1.bf16.msra.mxu0 0
        %2019 = vmatprep.subr.bf16.mxu0 0
        %2020 = vmatpush1.bf16.msra.mxu0 0
        %2021 = vmatprep.subr.bf16.mxu0 0
        %2022 = vmatpush1.bf16.msra.mxu0 0
        %2023 = vmatprep.subr.bf16.mxu0 0
        %2024 = vmatpush1.bf16.msra.mxu0 0
        %2025 = vmatprep.subr.bf16.mxu0 0
        %2026 = vmatpush1.bf16.msra.mxu0 0
        %2027 = vmatprep.subr.bf16.mxu0 0
        %2028 = vmatpush1.bf16.msra.mxu0 0
        %2029 = vmatprep.subr.bf16.mxu0 0
        %2030 = vmatpush1.bf16.msra.mxu0 0
        %2031 = vmatprep.subr.bf16.mxu0 0
        %2032 = vmatpush1.bf16.msra.mxu0 0
        %2033 = vmatprep.subr.bf16.mxu0 0
        %2034 = vmatpush1.bf16.msra.mxu0 0
        %2035 = vmatprep.mubr.bf16.mxu0 0
        %2036 = vmatmul.mubr.bf16.gmra.mrb[0].mxu0 %v1998
        %v2037 = vpop.f32.mrb[0].mxu0
        %v2038 = vadd.f32 %v1983, %v2037
        %v2039 = vpop.f32.mrb[0].mxu0
        %v2040 = vpop.f32.mrb[0].mxu0
        %v2041 = vadd.f32 %v1983, %v2040
        %v2042 = vpop.f32.mrb[0].mxu0
        %2043 = vmatprep.mubr.bf16.mxu0 0
        %2044 = vmatmul.mubr.bf16.gmra.mrb[0].mxu0 %v2001
        %v2045 = vpop.f32.mrb[0].mxu0
        %v2046 = vadd.f32 %v1983, %v2045
        %v2047 = vpop.f32.mrb[0].mxu0
        %v2048 = vpop.f32.mrb[0].mxu0
        %v2049 = vadd.f32 %v1983, %v2048
        %v2050 = vpop.f32.mrb[0].mxu0
        %2051 = vdwg.mxu0
        %v2052 = vpack.c.bf16 %v2041, %v2038
        %v2053 = vpack.c.bf16 %v2049, %v2046
        %s2054 = scalar_lea.vmem %s5, 16
        %v2055 = vld [vmem:[%s2054] sm:$0xf]
        %v2056 = vld [vmem:[%s2054 + $0x4] sm:$0xf]
        %v2057 = vld [vmem:[%s2054 + $0x8] sm:$0xf]
        %v2058 = vld [vmem:[%s2054 + $0xc] sm:$0xf]
        %2061 = vrot.lane.b32.xlu0 %v2052, 96
        %v2062 = vpop.permute.xlu0 %2061
        %2063 = vrot.lane.b32.xlu0 %v2053, 96
        %v2064 = vpop.permute.xlu0 %2063
        %v2066 = vsel %vm651, %v2052, 0
        %v2069 = vsel %vm651, %v2053, 0
        %v2072 = vsel %vm651, %v2062, 0
        %v2075 = vsel %vm651, %v2064, 0
        %2077 = vmatprep.subr.bf16.mxu0 0
        %2078 = vmatpush1.bf16.xpose.msra.mxu0 %v2072
        %2079 = vmatprep.subr.bf16.mxu0 0
        %2080 = vmatpush1.bf16.xpose.msra.mxu0 %v2075
        %2081 = vmatprep.subr.bf16.mxu0 0
        %2082 = vmatpush1.bf16.xpose.msra.mxu0 0
        %2083 = vmatprep.subr.bf16.mxu0 0
        %2084 = vmatpush1.bf16.xpose.msra.mxu0 0
        %2085 = vmatprep.subr.bf16.mxu0 0
        %2086 = vmatpush1.bf16.xpose.msra.mxu0 0
        %2087 = vmatprep.subr.bf16.mxu0 0
        %2088 = vmatpush1.bf16.xpose.msra.mxu0 0
        %2089 = vmatprep.subr.bf16.mxu0 0
        %2090 = vmatpush1.bf16.xpose.msra.mxu0 0
        %2091 = vmatprep.subr.bf16.mxu0 0
        %2092 = vmatpush1.bf16.xpose.msra.mxu0 0
        %2093 = vmatprep.subr.bf16.mxu0 0
        %2094 = vmatpush1.bf16.xpose.msra.mxu0 0
        %2095 = vmatprep.subr.bf16.mxu0 0
        %2096 = vmatpush1.bf16.xpose.msra.mxu0 0
        %2097 = vmatprep.subr.bf16.mxu0 0
        %2098 = vmatpush1.bf16.xpose.msra.mxu0 0
        %2099 = vmatprep.subr.bf16.mxu0 0
        %2100 = vmatpush1.bf16.xpose.msra.mxu0 0
        %2101 = vmatprep.subr.bf16.mxu0 0
        %2102 = vmatpush1.bf16.xpose.msra.mxu0 0
        %2103 = vmatprep.subr.bf16.mxu0 0
        %2104 = vmatpush1.bf16.xpose.msra.mxu0 0
        %2105 = vmatprep.subr.bf16.mxu0 0
        %2106 = vmatpush1.bf16.xpose.msra.mxu0 0
        %2107 = vmatprep.subr.bf16.mxu0 0
        %2108 = vmatpush1.bf16.xpose.msra.mxu0 0
        %2109 = vmatprep.mubr.bf16.mxu0 0
        %2110 = vmatmul.mubr.bf16.gmra.mrb[0].mxu0 %v2066
        %v2111 = vpop.f32.mrb[0].mxu0
        %v2112 = vadd.f32 %v556, %v2111
        %v2113 = vpop.f32.mrb[0].mxu0
        %v2114 = vpop.f32.mrb[0].mxu0
        %v2115 = vadd.f32 %v556, %v2114
        %v2116 = vpop.f32.mrb[0].mxu0
        %2117 = vmatprep.mubr.bf16.mxu0 0
        %2118 = vmatmul.mubr.bf16.gmra.mrb[0].mxu0 %v2069
        %v2119 = vpop.f32.mrb[0].mxu0
        %v2120 = vadd.f32 %v556, %v2119
        %v2121 = vpop.f32.mrb[0].mxu0
        %v2122 = vpop.f32.mrb[0].mxu0
        %v2123 = vadd.f32 %v556, %v2122
        %v2124 = vpop.f32.mrb[0].mxu0
        %2125 = vdwg.mxu0
        %v2126 = vsel %vm583, %v2112, -inf
        %2127 = vmax.xlane.f32.xlu0 %v2126
        %v2128 = vpop.xlane.xlu0 %2127
        %v2129 = vsel %vm583, %v2115, -inf
        %2130 = vmax.xlane.f32.xlu0 %v2129
        %v2131 = vpop.xlane.xlu0 %2130
        %v2132 = vsel %vm583, %v2120, -inf
        %2133 = vmax.xlane.f32.xlu0 %v2132
        %v2134 = vpop.xlane.xlu0 %2133
        %v2135 = vsel %vm583, %v2123, -inf
        %2136 = vmax.xlane.f32.xlu0 %v2135
        %v2137 = vpop.xlane.xlu0 %2136
        %v2138 = vsub.f32 %v2112, %v2128
        %v2139 = vsub.f32 %v2115, %v2131
        %v2140 = vsub.f32 %v2120, %v2134
        %v2141 = vsub.f32 %v2123, %v2137
        %v2142 = vmul.f32 %v2138, 1.442695
        %v2143 = vpow.pop %v2142
        %v2144 = vmul.f32 %v2139, 1.442695
        %v2145 = vpow.pop %v2144
        %v2146 = vmul.f32 %v2140, 1.442695
        %v2147 = vpow.pop %v2146
        %v2148 = vmul.f32 %v2141, 1.442695
        %v2149 = vpow.pop %v2148
        %v2150 = vsel %vm583, %v2143, 0.0
        %2151 = vadd.xlane.f32.xlu0 %v2150
        %v2152 = vpop.xlane.xlu0 %2151
        %v2153 = vsel %vm583, %v2145, 0.0
        %2154 = vadd.xlane.f32.xlu0 %v2153
        %v2155 = vpop.xlane.xlu0 %2154
        %v2156 = vsel %vm583, %v2147, 0.0
        %2157 = vadd.xlane.f32.xlu0 %v2156
        %v2158 = vpop.xlane.xlu0 %2157
        %v2159 = vsel %vm583, %v2149, 0.0
        %2160 = vadd.xlane.f32.xlu0 %v2159
        %v2161 = vpop.xlane.xlu0 %2160
        %v2162 = vrcp.pop %v2152
        %v2163 = vrcp.pop %v2155
        %v2164 = vrcp.pop %v2158
        %v2165 = vrcp.pop %v2161
        %v2166 = vmul.f32 %v2143, %v2162
        %v2167 = vmul.f32 %v2145, %v2163
        %v2168 = vmul.f32 %v2147, %v2164
        %v2169 = vmul.f32 %v2149, %v2165
        %v2170 = vpack.c.bf16 %v2167, %v2166
        %v2171 = vpack.c.bf16 %v2169, %v2168
        %2172 = vrot.lane.b32.xlu0 %v2052, 64
        %v2173 = vpop.permute.xlu0 %2172
        %2174 = vrot.lane.b32.xlu0 %v2053, 64
        %v2175 = vpop.permute.xlu0 %2174
        %v2179 = vsel %vm583, %v2170, 0
        %v2182 = vsel %vm583, %v2171, 0
        %2184 = vmatprep.subr.bf16.mxu0 0
        %2185 = vmatpush1.bf16.msra.mxu0 %v2173
        %2186 = vmatprep.subr.bf16.mxu0 0
        %2187 = vmatpush1.bf16.msra.mxu0 %v2175
        %2188 = vmatprep.subr.bf16.mxu0 0
        %2189 = vmatpush1.bf16.msra.mxu0 0
        %2190 = vmatprep.subr.bf16.mxu0 0
        %2191 = vmatpush1.bf16.msra.mxu0 0
        %2192 = vmatprep.subr.bf16.mxu0 0
        %2193 = vmatpush1.bf16.msra.mxu0 0
        %2194 = vmatprep.subr.bf16.mxu0 0
        %2195 = vmatpush1.bf16.msra.mxu0 0
        %2196 = vmatprep.subr.bf16.mxu0 0
        %2197 = vmatpush1.bf16.msra.mxu0 0
        %2198 = vmatprep.subr.bf16.mxu0 0
        %2199 = vmatpush1.bf16.msra.mxu0 0
        %2200 = vmatprep.subr.bf16.mxu0 0
        %2201 = vmatpush1.bf16.msra.mxu0 0
        %2202 = vmatprep.subr.bf16.mxu0 0
        %2203 = vmatpush1.bf16.msra.mxu0 0
        %2204 = vmatprep.subr.bf16.mxu0 0
        %2205 = vmatpush1.bf16.msra.mxu0 0
        %2206 = vmatprep.subr.bf16.mxu0 0
        %2207 = vmatpush1.bf16.msra.mxu0 0
        %2208 = vmatprep.subr.bf16.mxu0 0
        %2209 = vmatpush1.bf16.msra.mxu0 0
        %2210 = vmatprep.subr.bf16.mxu0 0
        %2211 = vmatpush1.bf16.msra.mxu0 0
        %2212 = vmatprep.subr.bf16.mxu0 0
        %2213 = vmatpush1.bf16.msra.mxu0 0
        %2214 = vmatprep.subr.bf16.mxu0 0
        %2215 = vmatpush1.bf16.msra.mxu0 0
        %2216 = vmatprep.mubr.bf16.mxu0 0
        %2217 = vmatmul.mubr.bf16.gmra.mrb[0].mxu0 %v2179
        %v2218 = vpop.f32.mrb[0].mxu0
        %v2219 = vadd.f32 0.0, %v2218
        %v2220 = vpop.f32.mrb[0].mxu0
        %v2221 = vpop.f32.mrb[0].mxu0
        %v2222 = vadd.f32 0.0, %v2221
        %v2223 = vpop.f32.mrb[0].mxu0
        %2224 = vmatprep.mubr.bf16.mxu0 0
        %2225 = vmatmul.mubr.bf16.gmra.mrb[0].mxu0 %v2182
        %v2226 = vpop.f32.mrb[0].mxu0
        %v2227 = vadd.f32 0.0, %v2226
        %v2228 = vpop.f32.mrb[0].mxu0
        %v2229 = vpop.f32.mrb[0].mxu0
        %v2230 = vadd.f32 0.0, %v2229
        %v2231 = vpop.f32.mrb[0].mxu0
        %2232 = vdwg.mxu0
        %v2233 = vpack.c.bf16 %v2222, %v2219
        %v2234 = vpack.c.bf16 %v2230, %v2227
        %2235 = vrot.lane.b32.xlu0 %v2052, 120
        %v2236 = vpop.permute.xlu0 %2235
        %2237 = vrot.lane.b32.xlu0 %v2053, 120
        %v2238 = vpop.permute.xlu0 %2237
        %2239 = vrot.lane.b32.xlu0 %v2052, 88
        %v2240 = vpop.permute.xlu0 %2239
        %2241 = vrot.lane.b32.xlu0 %v2053, 88
        %v2242 = vpop.permute.xlu0 %2241
        %v2244 = vsel %vm651, %v2236, 0
        %v2247 = vsel %vm651, %v2238, 0
        %v2250 = vsel %vm651, %v2240, 0
        %v2253 = vsel %vm651, %v2242, 0
        %2255 = vmatprep.subr.bf16.mxu0 0
        %2256 = vmatpush1.bf16.xpose.msra.mxu0 %v2250
        %2257 = vmatprep.subr.bf16.mxu0 0
        %2258 = vmatpush1.bf16.xpose.msra.mxu0 %v2253
        %2259 = vmatprep.subr.bf16.mxu0 0
        %2260 = vmatpush1.bf16.xpose.msra.mxu0 0
        %2261 = vmatprep.subr.bf16.mxu0 0
        %2262 = vmatpush1.bf16.xpose.msra.mxu0 0
        %2263 = vmatprep.subr.bf16.mxu0 0
        %2264 = vmatpush1.bf16.xpose.msra.mxu0 0
        %2265 = vmatprep.subr.bf16.mxu0 0
        %2266 = vmatpush1.bf16.xpose.msra.mxu0 0
        %2267 = vmatprep.subr.bf16.mxu0 0
        %2268 = vmatpush1.bf16.xpose.msra.mxu0 0
        %2269 = vmatprep.subr.bf16.mxu0 0
        %2270 = vmatpush1.bf16.xpose.msra.mxu0 0
        %2271 = vmatprep.subr.bf16.mxu0 0
        %2272 = vmatpush1.bf16.xpose.msra.mxu0 0
        %2273 = vmatprep.subr.bf16.mxu0 0
        %2274 = vmatpush1.bf16.xpose.msra.mxu0 0
        %2275 = vmatprep.subr.bf16.mxu0 0
        %2276 = vmatpush1.bf16.xpose.msra.mxu0 0
        %2277 = vmatprep.subr.bf16.mxu0 0
        %2278 = vmatpush1.bf16.xpose.msra.mxu0 0
        %2279 = vmatprep.subr.bf16.mxu0 0
        %2280 = vmatpush1.bf16.xpose.msra.mxu0 0
        %2281 = vmatprep.subr.bf16.mxu0 0
        %2282 = vmatpush1.bf16.xpose.msra.mxu0 0
        %2283 = vmatprep.subr.bf16.mxu0 0
        %2284 = vmatpush1.bf16.xpose.msra.mxu0 0
        %2285 = vmatprep.subr.bf16.mxu0 0
        %2286 = vmatpush1.bf16.xpose.msra.mxu0 0
        %2287 = vmatprep.mubr.bf16.mxu0 0
        %2288 = vmatmul.mubr.bf16.gmra.mrb[0].mxu0 %v2244
        %v2289 = vpop.f32.mrb[0].mxu0
        %v2290 = vadd.f32 %v556, %v2289
        %v2291 = vpop.f32.mrb[0].mxu0
        %v2292 = vpop.f32.mrb[0].mxu0
        %v2293 = vadd.f32 %v556, %v2292
        %v2294 = vpop.f32.mrb[0].mxu0
        %2295 = vmatprep.mubr.bf16.mxu0 0
        %2296 = vmatmul.mubr.bf16.gmra.mrb[0].mxu0 %v2247
        %v2297 = vpop.f32.mrb[0].mxu0
        %v2298 = vadd.f32 %v556, %v2297
        %v2299 = vpop.f32.mrb[0].mxu0
        %v2300 = vpop.f32.mrb[0].mxu0
        %v2301 = vadd.f32 %v556, %v2300
        %v2302 = vpop.f32.mrb[0].mxu0
        %2303 = vdwg.mxu0
        %v2304 = vsel %vm583, %v2290, -inf
        %2305 = vmax.xlane.f32.xlu0 %v2304
        %v2306 = vpop.xlane.xlu0 %2305
        %v2307 = vsel %vm583, %v2293, -inf
        %2308 = vmax.xlane.f32.xlu0 %v2307
        %v2309 = vpop.xlane.xlu0 %2308
        %v2310 = vsel %vm583, %v2298, -inf
        %2311 = vmax.xlane.f32.xlu0 %v2310
        %v2312 = vpop.xlane.xlu0 %2311
        %v2313 = vsel %vm583, %v2301, -inf
        %2314 = vmax.xlane.f32.xlu0 %v2313
        %v2315 = vpop.xlane.xlu0 %2314
        %v2316 = vsub.f32 %v2290, %v2306
        %v2317 = vsub.f32 %v2293, %v2309
        %v2318 = vsub.f32 %v2298, %v2312
        %v2319 = vsub.f32 %v2301, %v2315
        %v2320 = vmul.f32 %v2316, 1.442695
        %v2321 = vpow.pop %v2320
        %v2322 = vmul.f32 %v2317, 1.442695
        %v2323 = vpow.pop %v2322
        %v2324 = vmul.f32 %v2318, 1.442695
        %v2325 = vpow.pop %v2324
        %v2326 = vmul.f32 %v2319, 1.442695
        %v2327 = vpow.pop %v2326
        %v2328 = vsel %vm583, %v2321, 0.0
        %2329 = vadd.xlane.f32.xlu0 %v2328
        %v2330 = vpop.xlane.xlu0 %2329
        %v2331 = vsel %vm583, %v2323, 0.0
        %2332 = vadd.xlane.f32.xlu0 %v2331
        %v2333 = vpop.xlane.xlu0 %2332
        %v2334 = vsel %vm583, %v2325, 0.0
        %2335 = vadd.xlane.f32.xlu0 %v2334
        %v2336 = vpop.xlane.xlu0 %2335
        %v2337 = vsel %vm583, %v2327, 0.0
        %2338 = vadd.xlane.f32.xlu0 %v2337
        %v2339 = vpop.xlane.xlu0 %2338
        %v2340 = vrcp.pop %v2330
        %v2341 = vrcp.pop %v2333
        %v2342 = vrcp.pop %v2336
        %v2343 = vrcp.pop %v2339
        %v2344 = vmul.f32 %v2321, %v2340
        %v2345 = vmul.f32 %v2323, %v2341
        %v2346 = vmul.f32 %v2325, %v2342
        %v2347 = vmul.f32 %v2327, %v2343
        %v2348 = vpack.c.bf16 %v2345, %v2344
        %v2349 = vpack.c.bf16 %v2347, %v2346
        %2350 = vrot.lane.b32.xlu0 %v2052, 56
        %v2351 = vpop.permute.xlu0 %2350
        %2352 = vrot.lane.b32.xlu0 %v2053, 56
        %v2353 = vpop.permute.xlu0 %2352
        %v2357 = vsel %vm583, %v2348, 0
        %v2360 = vsel %vm583, %v2349, 0
        %2362 = vmatprep.subr.bf16.mxu0 0
        %2363 = vmatpush1.bf16.msra.mxu0 %v2351
        %2364 = vmatprep.subr.bf16.mxu0 0
        %2365 = vmatpush1.bf16.msra.mxu0 %v2353
        %2366 = vmatprep.subr.bf16.mxu0 0
        %2367 = vmatpush1.bf16.msra.mxu0 0
        %2368 = vmatprep.subr.bf16.mxu0 0
        %2369 = vmatpush1.bf16.msra.mxu0 0
        %2370 = vmatprep.subr.bf16.mxu0 0
        %2371 = vmatpush1.bf16.msra.mxu0 0
        %2372 = vmatprep.subr.bf16.mxu0 0
        %2373 = vmatpush1.bf16.msra.mxu0 0
        %2374 = vmatprep.subr.bf16.mxu0 0
        %2375 = vmatpush1.bf16.msra.mxu0 0
        %2376 = vmatprep.subr.bf16.mxu0 0
        %2377 = vmatpush1.bf16.msra.mxu0 0
        %2378 = vmatprep.subr.bf16.mxu0 0
        %2379 = vmatpush1.bf16.msra.mxu0 0
        %2380 = vmatprep.subr.bf16.mxu0 0
        %2381 = vmatpush1.bf16.msra.mxu0 0
        %2382 = vmatprep.subr.bf16.mxu0 0
        %2383 = vmatpush1.bf16.msra.mxu0 0
        %2384 = vmatprep.subr.bf16.mxu0 0
        %2385 = vmatpush1.bf16.msra.mxu0 0
        %2386 = vmatprep.subr.bf16.mxu0 0
        %2387 = vmatpush1.bf16.msra.mxu0 0
        %2388 = vmatprep.subr.bf16.mxu0 0
        %2389 = vmatpush1.bf16.msra.mxu0 0
        %2390 = vmatprep.subr.bf16.mxu0 0
        %2391 = vmatpush1.bf16.msra.mxu0 0
        %2392 = vmatprep.subr.bf16.mxu0 0
        %2393 = vmatpush1.bf16.msra.mxu0 0
        %2394 = vmatprep.mubr.bf16.mxu0 0
        %2395 = vmatmul.mubr.bf16.gmra.mrb[0].mxu0 %v2357
        %v2396 = vpop.f32.mrb[0].mxu0
        %v2397 = vadd.f32 0.0, %v2396
        %v2398 = vpop.f32.mrb[0].mxu0
        %v2399 = vpop.f32.mrb[0].mxu0
        %v2400 = vadd.f32 0.0, %v2399
        %v2401 = vpop.f32.mrb[0].mxu0
        %2402 = vmatprep.mubr.bf16.mxu0 0
        %2403 = vmatmul.mubr.bf16.gmra.mrb[0].mxu0 %v2360
        %v2404 = vpop.f32.mrb[0].mxu0
        %v2405 = vadd.f32 0.0, %v2404
        %v2406 = vpop.f32.mrb[0].mxu0
        %v2407 = vpop.f32.mrb[0].mxu0
        %v2408 = vadd.f32 0.0, %v2407
        %v2409 = vpop.f32.mrb[0].mxu0
        %2410 = vdwg.mxu0
        %v2411 = vpack.c.bf16 %v2400, %v2397
        %v2412 = vpack.c.bf16 %v2408, %v2405
        %v2414 = vsel %vm651, %v2411, 0
        %v2417 = vsel %vm651, %v2412, 0
        %v2420 = vsel %vm1006, %v2056, 0
        %2422 = vmatprep.subr.bf16.mxu0 0
        %2423 = vmatpush1.bf16.msra.mxu0 %v2420
        %2424 = vmatprep.subr.bf16.mxu0 0
        %2425 = vmatpush1.bf16.msra.mxu0 0
        %2426 = vmatprep.subr.bf16.mxu0 0
        %2427 = vmatpush1.bf16.msra.mxu0 0
        %2428 = vmatprep.subr.bf16.mxu0 0
        %2429 = vmatpush1.bf16.msra.mxu0 0
        %2430 = vmatprep.subr.bf16.mxu0 0
        %2431 = vmatpush1.bf16.msra.mxu0 0
        %2432 = vmatprep.subr.bf16.mxu0 0
        %2433 = vmatpush1.bf16.msra.mxu0 0
        %2434 = vmatprep.subr.bf16.mxu0 0
        %2435 = vmatpush1.bf16.msra.mxu0 0
        %2436 = vmatprep.subr.bf16.mxu0 0
        %2437 = vmatpush1.bf16.msra.mxu0 0
        %2438 = vmatprep.subr.bf16.mxu0 0
        %2439 = vmatpush1.bf16.msra.mxu0 0
        %2440 = vmatprep.subr.bf16.mxu0 0
        %2441 = vmatpush1.bf16.msra.mxu0 0
        %2442 = vmatprep.subr.bf16.mxu0 0
        %2443 = vmatpush1.bf16.msra.mxu0 0
        %2444 = vmatprep.subr.bf16.mxu0 0
        %2445 = vmatpush1.bf16.msra.mxu0 0
        %2446 = vmatprep.subr.bf16.mxu0 0
        %2447 = vmatpush1.bf16.msra.mxu0 0
        %2448 = vmatprep.subr.bf16.mxu0 0
        %2449 = vmatpush1.bf16.msra.mxu0 0
        %2450 = vmatprep.subr.bf16.mxu0 0
        %2451 = vmatpush1.bf16.msra.mxu0 0
        %2452 = vmatprep.subr.bf16.mxu0 0
        %2453 = vmatpush1.bf16.msra.mxu0 0
        %2454 = vmatprep.mubr.bf16.mxu0 0
        %2455 = vmatmul.mubr.bf16.gmra.mrb[0].mxu0 %v2414
        %v2456 = vpop.f32.mrb[0].mxu0
        %v2457 = vadd.f32 0.0, %v2456
        %v2458 = vpop.f32.mrb[0].mxu0
        %v2459 = vpop.f32.mrb[0].mxu0
        %v2460 = vadd.f32 0.0, %v2459
        %v2461 = vpop.f32.mrb[0].mxu0
        %2462 = vmatprep.mubr.bf16.mxu0 0
        %2463 = vmatmul.mubr.bf16.gmra.mrb[0].mxu0 %v2417
        %v2464 = vpop.f32.mrb[0].mxu0
        %v2465 = vadd.f32 0.0, %v2464
        %v2466 = vpop.f32.mrb[0].mxu0
        %v2467 = vpop.f32.mrb[0].mxu0
        %v2468 = vadd.f32 0.0, %v2467
        %v2469 = vpop.f32.mrb[0].mxu0
        %2470 = vdwg.mxu0
        %v2472 = vsel %vm651, %v2233, 0
        %v2475 = vsel %vm651, %v2234, 0
        %v2478 = vsel %vm1006, %v2055, 0
        %2480 = vmatprep.subr.bf16.mxu0 0
        %2481 = vmatpush1.bf16.msra.mxu0 %v2478
        %2482 = vmatprep.subr.bf16.mxu0 0
        %2483 = vmatpush1.bf16.msra.mxu0 0
        %2484 = vmatprep.subr.bf16.mxu0 0
        %2485 = vmatpush1.bf16.msra.mxu0 0
        %2486 = vmatprep.subr.bf16.mxu0 0
        %2487 = vmatpush1.bf16.msra.mxu0 0
        %2488 = vmatprep.subr.bf16.mxu0 0
        %2489 = vmatpush1.bf16.msra.mxu0 0
        %2490 = vmatprep.subr.bf16.mxu0 0
        %2491 = vmatpush1.bf16.msra.mxu0 0
        %2492 = vmatprep.subr.bf16.mxu0 0
        %2493 = vmatpush1.bf16.msra.mxu0 0
        %2494 = vmatprep.subr.bf16.mxu0 0
        %2495 = vmatpush1.bf16.msra.mxu0 0
        %2496 = vmatprep.subr.bf16.mxu0 0
        %2497 = vmatpush1.bf16.msra.mxu0 0
        %2498 = vmatprep.subr.bf16.mxu0 0
        %2499 = vmatpush1.bf16.msra.mxu0 0
        %2500 = vmatprep.subr.bf16.mxu0 0
        %2501 = vmatpush1.bf16.msra.mxu0 0
        %2502 = vmatprep.subr.bf16.mxu0 0
        %2503 = vmatpush1.bf16.msra.mxu0 0
        %2504 = vmatprep.subr.bf16.mxu0 0
        %2505 = vmatpush1.bf16.msra.mxu0 0
        %2506 = vmatprep.subr.bf16.mxu0 0
        %2507 = vmatpush1.bf16.msra.mxu0 0
        %2508 = vmatprep.subr.bf16.mxu0 0
        %2509 = vmatpush1.bf16.msra.mxu0 0
        %2510 = vmatprep.subr.bf16.mxu0 0
        %2511 = vmatpush1.bf16.msra.mxu0 0
        %2512 = vmatprep.mubr.bf16.mxu0 0
        %2513 = vmatmul.mubr.bf16.gmra.mrb[0].mxu0 %v2472
        %v2514 = vpop.f32.mrb[0].mxu0
        %v2515 = vadd.f32 %v2457, %v2514
        %v2516 = vpop.f32.mrb[0].mxu0
        %v2517 = vpop.f32.mrb[0].mxu0
        %v2518 = vadd.f32 %v2460, %v2517
        %v2519 = vpop.f32.mrb[0].mxu0
        %2520 = vmatprep.mubr.bf16.mxu0 0
        %2521 = vmatmul.mubr.bf16.gmra.mrb[0].mxu0 %v2475
        %v2522 = vpop.f32.mrb[0].mxu0
        %v2523 = vadd.f32 %v2465, %v2522
        %v2524 = vpop.f32.mrb[0].mxu0
        %v2525 = vpop.f32.mrb[0].mxu0
        %v2526 = vadd.f32 %v2468, %v2525
        %v2527 = vpop.f32.mrb[0].mxu0
        %2528 = vdwg.mxu0
        %2529 = vrot.lane.b32.xlu0 %v2052, 112
        %v2530 = vpop.permute.xlu0 %2529
        %2531 = vrot.lane.b32.xlu0 %v2053, 112
        %v2532 = vpop.permute.xlu0 %2531
        %2533 = vrot.lane.b32.xlu0 %v2052, 80
        %v2534 = vpop.permute.xlu0 %2533
        %2535 = vrot.lane.b32.xlu0 %v2053, 80
        %v2536 = vpop.permute.xlu0 %2535
        %v2538 = vsel %vm651, %v2530, 0
        %v2541 = vsel %vm651, %v2532, 0
        %v2544 = vsel %vm651, %v2534, 0
        %v2547 = vsel %vm651, %v2536, 0
        %2549 = vmatprep.subr.bf16.mxu0 0
        %2550 = vmatpush1.bf16.xpose.msra.mxu0 %v2544
        %2551 = vmatprep.subr.bf16.mxu0 0
        %2552 = vmatpush1.bf16.xpose.msra.mxu0 %v2547
        %2553 = vmatprep.subr.bf16.mxu0 0
        %2554 = vmatpush1.bf16.xpose.msra.mxu0 0
        %2555 = vmatprep.subr.bf16.mxu0 0
        %2556 = vmatpush1.bf16.xpose.msra.mxu0 0
        %2557 = vmatprep.subr.bf16.mxu0 0
        %2558 = vmatpush1.bf16.xpose.msra.mxu0 0
        %2559 = vmatprep.subr.bf16.mxu0 0
        %2560 = vmatpush1.bf16.xpose.msra.mxu0 0
        %2561 = vmatprep.subr.bf16.mxu0 0
        %2562 = vmatpush1.bf16.xpose.msra.mxu0 0
        %2563 = vmatprep.subr.bf16.mxu0 0
        %2564 = vmatpush1.bf16.xpose.msra.mxu0 0
        %2565 = vmatprep.subr.bf16.mxu0 0
        %2566 = vmatpush1.bf16.xpose.msra.mxu0 0
        %2567 = vmatprep.subr.bf16.mxu0 0
        %2568 = vmatpush1.bf16.xpose.msra.mxu0 0
        %2569 = vmatprep.subr.bf16.mxu0 0
        %2570 = vmatpush1.bf16.xpose.msra.mxu0 0
        %2571 = vmatprep.subr.bf16.mxu0 0
        %2572 = vmatpush1.bf16.xpose.msra.mxu0 0
        %2573 = vmatprep.subr.bf16.mxu0 0
        %2574 = vmatpush1.bf16.xpose.msra.mxu0 0
        %2575 = vmatprep.subr.bf16.mxu0 0
        %2576 = vmatpush1.bf16.xpose.msra.mxu0 0
        %2577 = vmatprep.subr.bf16.mxu0 0
        %2578 = vmatpush1.bf16.xpose.msra.mxu0 0
        %2579 = vmatprep.subr.bf16.mxu0 0
        %2580 = vmatpush1.bf16.xpose.msra.mxu0 0
        %2581 = vmatprep.mubr.bf16.mxu0 0
        %2582 = vmatmul.mubr.bf16.gmra.mrb[0].mxu0 %v2538
        %v2583 = vpop.f32.mrb[0].mxu0
        %v2584 = vadd.f32 %v556, %v2583
        %v2585 = vpop.f32.mrb[0].mxu0
        %v2586 = vpop.f32.mrb[0].mxu0
        %v2587 = vadd.f32 %v556, %v2586
        %v2588 = vpop.f32.mrb[0].mxu0
        %2589 = vmatprep.mubr.bf16.mxu0 0
        %2590 = vmatmul.mubr.bf16.gmra.mrb[0].mxu0 %v2541
        %v2591 = vpop.f32.mrb[0].mxu0
        %v2592 = vadd.f32 %v556, %v2591
        %v2593 = vpop.f32.mrb[0].mxu0
        %v2594 = vpop.f32.mrb[0].mxu0
        %v2595 = vadd.f32 %v556, %v2594
        %v2596 = vpop.f32.mrb[0].mxu0
        %2597 = vdwg.mxu0
        %v2598 = vsel %vm583, %v2584, -inf
        %2599 = vmax.xlane.f32.xlu0 %v2598
        %v2600 = vpop.xlane.xlu0 %2599
        %v2601 = vsel %vm583, %v2587, -inf
        %2602 = vmax.xlane.f32.xlu0 %v2601
        %v2603 = vpop.xlane.xlu0 %2602
        %v2604 = vsel %vm583, %v2592, -inf
        %2605 = vmax.xlane.f32.xlu0 %v2604
        %v2606 = vpop.xlane.xlu0 %2605
        %v2607 = vsel %vm583, %v2595, -inf
        %2608 = vmax.xlane.f32.xlu0 %v2607
        %v2609 = vpop.xlane.xlu0 %2608
        %v2610 = vsub.f32 %v2584, %v2600
        %v2611 = vsub.f32 %v2587, %v2603
        %v2612 = vsub.f32 %v2592, %v2606
        %v2613 = vsub.f32 %v2595, %v2609
        %v2614 = vmul.f32 %v2610, 1.442695
        %v2615 = vpow.pop %v2614
        %v2616 = vmul.f32 %v2611, 1.442695
        %v2617 = vpow.pop %v2616
        %v2618 = vmul.f32 %v2612, 1.442695
        %v2619 = vpow.pop %v2618
        %v2620 = vmul.f32 %v2613, 1.442695
        %v2621 = vpow.pop %v2620
        %v2622 = vsel %vm583, %v2615, 0.0
        %2623 = vadd.xlane.f32.xlu0 %v2622
        %v2624 = vpop.xlane.xlu0 %2623
        %v2625 = vsel %vm583, %v2617, 0.0
        %2626 = vadd.xlane.f32.xlu0 %v2625
        %v2627 = vpop.xlane.xlu0 %2626
        %v2628 = vsel %vm583, %v2619, 0.0
        %2629 = vadd.xlane.f32.xlu0 %v2628
        %v2630 = vpop.xlane.xlu0 %2629
        %v2631 = vsel %vm583, %v2621, 0.0
        %2632 = vadd.xlane.f32.xlu0 %v2631
        %v2633 = vpop.xlane.xlu0 %2632
        %v2634 = vrcp.pop %v2624
        %v2635 = vrcp.pop %v2627
        %v2636 = vrcp.pop %v2630
        %v2637 = vrcp.pop %v2633
        %v2638 = vmul.f32 %v2615, %v2634
        %v2639 = vmul.f32 %v2617, %v2635
        %v2640 = vmul.f32 %v2619, %v2636
        %v2641 = vmul.f32 %v2621, %v2637
        %v2642 = vpack.c.bf16 %v2639, %v2638
        %v2643 = vpack.c.bf16 %v2641, %v2640
        %2644 = vrot.lane.b32.xlu0 %v2052, 48
        %v2645 = vpop.permute.xlu0 %2644
        %2646 = vrot.lane.b32.xlu0 %v2053, 48
        %v2647 = vpop.permute.xlu0 %2646
        %v2651 = vsel %vm583, %v2642, 0
        %v2654 = vsel %vm583, %v2643, 0
        %2656 = vmatprep.subr.bf16.mxu0 0
        %2657 = vmatpush1.bf16.msra.mxu0 %v2645
        %2658 = vmatprep.subr.bf16.mxu0 0
        %2659 = vmatpush1.bf16.msra.mxu0 %v2647
        %2660 = vmatprep.subr.bf16.mxu0 0
        %2661 = vmatpush1.bf16.msra.mxu0 0
        %2662 = vmatprep.subr.bf16.mxu0 0
        %2663 = vmatpush1.bf16.msra.mxu0 0
        %2664 = vmatprep.subr.bf16.mxu0 0
        %2665 = vmatpush1.bf16.msra.mxu0 0
        %2666 = vmatprep.subr.bf16.mxu0 0
        %2667 = vmatpush1.bf16.msra.mxu0 0
        %2668 = vmatprep.subr.bf16.mxu0 0
        %2669 = vmatpush1.bf16.msra.mxu0 0
        %2670 = vmatprep.subr.bf16.mxu0 0
        %2671 = vmatpush1.bf16.msra.mxu0 0
        %2672 = vmatprep.subr.bf16.mxu0 0
        %2673 = vmatpush1.bf16.msra.mxu0 0
        %2674 = vmatprep.subr.bf16.mxu0 0
        %2675 = vmatpush1.bf16.msra.mxu0 0
        %2676 = vmatprep.subr.bf16.mxu0 0
        %2677 = vmatpush1.bf16.msra.mxu0 0
        %2678 = vmatprep.subr.bf16.mxu0 0
        %2679 = vmatpush1.bf16.msra.mxu0 0
        %2680 = vmatprep.subr.bf16.mxu0 0
        %2681 = vmatpush1.bf16.msra.mxu0 0
        %2682 = vmatprep.subr.bf16.mxu0 0
        %2683 = vmatpush1.bf16.msra.mxu0 0
        %2684 = vmatprep.subr.bf16.mxu0 0
        %2685 = vmatpush1.bf16.msra.mxu0 0
        %2686 = vmatprep.subr.bf16.mxu0 0
        %2687 = vmatpush1.bf16.msra.mxu0 0
        %2688 = vmatprep.mubr.bf16.mxu0 0
        %2689 = vmatmul.mubr.bf16.gmra.mrb[0].mxu0 %v2651
        %v2690 = vpop.f32.mrb[0].mxu0
        %v2691 = vadd.f32 0.0, %v2690
        %v2692 = vpop.f32.mrb[0].mxu0
        %v2693 = vpop.f32.mrb[0].mxu0
        %v2694 = vadd.f32 0.0, %v2693
        %v2695 = vpop.f32.mrb[0].mxu0
        %2696 = vmatprep.mubr.bf16.mxu0 0
        %2697 = vmatmul.mubr.bf16.gmra.mrb[0].mxu0 %v2654
        %v2698 = vpop.f32.mrb[0].mxu0
        %v2699 = vadd.f32 0.0, %v2698
        %v2700 = vpop.f32.mrb[0].mxu0
        %v2701 = vpop.f32.mrb[0].mxu0
        %v2702 = vadd.f32 0.0, %v2701
        %v2703 = vpop.f32.mrb[0].mxu0
        %2704 = vdwg.mxu0
        %v2705 = vpack.c.bf16 %v2694, %v2691
        %v2706 = vpack.c.bf16 %v2702, %v2699
        %v2708 = vsel %vm651, %v2705, 0
        %v2711 = vsel %vm651, %v2706, 0
        %v2714 = vsel %vm1006, %v2057, 0
        %2716 = vmatprep.subr.bf16.mxu0 0
        %2717 = vmatpush1.bf16.msra.mxu0 %v2714
        %2718 = vmatprep.subr.bf16.mxu0 0
        %2719 = vmatpush1.bf16.msra.mxu0 0
        %2720 = vmatprep.subr.bf16.mxu0 0
        %2721 = vmatpush1.bf16.msra.mxu0 0
        %2722 = vmatprep.subr.bf16.mxu0 0
        %2723 = vmatpush1.bf16.msra.mxu0 0
        %2724 = vmatprep.subr.bf16.mxu0 0
        %2725 = vmatpush1.bf16.msra.mxu0 0
        %2726 = vmatprep.subr.bf16.mxu0 0
        %2727 = vmatpush1.bf16.msra.mxu0 0
        %2728 = vmatprep.subr.bf16.mxu0 0
        %2729 = vmatpush1.bf16.msra.mxu0 0
        %2730 = vmatprep.subr.bf16.mxu0 0
        %2731 = vmatpush1.bf16.msra.mxu0 0
        %2732 = vmatprep.subr.bf16.mxu0 0
        %2733 = vmatpush1.bf16.msra.mxu0 0
        %2734 = vmatprep.subr.bf16.mxu0 0
        %2735 = vmatpush1.bf16.msra.mxu0 0
        %2736 = vmatprep.subr.bf16.mxu0 0
        %2737 = vmatpush1.bf16.msra.mxu0 0
        %2738 = vmatprep.subr.bf16.mxu0 0
        %2739 = vmatpush1.bf16.msra.mxu0 0
        %2740 = vmatprep.subr.bf16.mxu0 0
        %2741 = vmatpush1.bf16.msra.mxu0 0
        %2742 = vmatprep.subr.bf16.mxu0 0
        %2743 = vmatpush1.bf16.msra.mxu0 0
        %2744 = vmatprep.subr.bf16.mxu0 0
        %2745 = vmatpush1.bf16.msra.mxu0 0
        %2746 = vmatprep.subr.bf16.mxu0 0
        %2747 = vmatpush1.bf16.msra.mxu0 0
        %2748 = vmatprep.mubr.bf16.mxu0 0
        %2749 = vmatmul.mubr.bf16.gmra.mrb[0].mxu0 %v2708
        %v2750 = vpop.f32.mrb[0].mxu0
        %v2751 = vadd.f32 0.0, %v2750
        %v2752 = vpop.f32.mrb[0].mxu0
        %v2753 = vpop.f32.mrb[0].mxu0
        %v2754 = vadd.f32 0.0, %v2753
        %v2755 = vpop.f32.mrb[0].mxu0
        %2756 = vmatprep.mubr.bf16.mxu0 0
        %2757 = vmatmul.mubr.bf16.gmra.mrb[0].mxu0 %v2711
        %v2758 = vpop.f32.mrb[0].mxu0
        %v2759 = vadd.f32 0.0, %v2758
        %v2760 = vpop.f32.mrb[0].mxu0
        %v2761 = vpop.f32.mrb[0].mxu0
        %v2762 = vadd.f32 0.0, %v2761
        %v2763 = vpop.f32.mrb[0].mxu0
        %2764 = vdwg.mxu0
        %v2765 = vadd.f32 %v2515, %v2751
        %v2766 = vadd.f32 %v2518, %v2754
        %v2767 = vadd.f32 %v2523, %v2759
        %v2768 = vadd.f32 %v2526, %v2762
        %2769 = vrot.lane.b32.xlu0 %v2052, 104
        %v2770 = vpop.permute.xlu0 %2769
        %2771 = vrot.lane.b32.xlu0 %v2053, 104
        %v2772 = vpop.permute.xlu0 %2771
        %2773 = vrot.lane.b32.xlu0 %v2052, 72
        %v2774 = vpop.permute.xlu0 %2773
        %2775 = vrot.lane.b32.xlu0 %v2053, 72
        %v2776 = vpop.permute.xlu0 %2775
        %v2778 = vsel %vm651, %v2770, 0
        %v2781 = vsel %vm651, %v2772, 0
        %v2784 = vsel %vm651, %v2774, 0
        %v2787 = vsel %vm651, %v2776, 0
        %2789 = vmatprep.subr.bf16.mxu0 0
        %2790 = vmatpush1.bf16.xpose.msra.mxu0 %v2784
        %2791 = vmatprep.subr.bf16.mxu0 0
        %2792 = vmatpush1.bf16.xpose.msra.mxu0 %v2787
        %2793 = vmatprep.subr.bf16.mxu0 0
        %2794 = vmatpush1.bf16.xpose.msra.mxu0 0
        %2795 = vmatprep.subr.bf16.mxu0 0
        %2796 = vmatpush1.bf16.xpose.msra.mxu0 0
        %2797 = vmatprep.subr.bf16.mxu0 0
        %2798 = vmatpush1.bf16.xpose.msra.mxu0 0
        %2799 = vmatprep.subr.bf16.mxu0 0
        %2800 = vmatpush1.bf16.xpose.msra.mxu0 0
        %2801 = vmatprep.subr.bf16.mxu0 0
        %2802 = vmatpush1.bf16.xpose.msra.mxu0 0
        %2803 = vmatprep.subr.bf16.mxu0 0
        %2804 = vmatpush1.bf16.xpose.msra.mxu0 0
        %2805 = vmatprep.subr.bf16.mxu0 0
        %2806 = vmatpush1.bf16.xpose.msra.mxu0 0
        %2807 = vmatprep.subr.bf16.mxu0 0
        %2808 = vmatpush1.bf16.xpose.msra.mxu0 0
        %2809 = vmatprep.subr.bf16.mxu0 0
        %2810 = vmatpush1.bf16.xpose.msra.mxu0 0
        %2811 = vmatprep.subr.bf16.mxu0 0
        %2812 = vmatpush1.bf16.xpose.msra.mxu0 0
        %2813 = vmatprep.subr.bf16.mxu0 0
        %2814 = vmatpush1.bf16.xpose.msra.mxu0 0
        %2815 = vmatprep.subr.bf16.mxu0 0
        %2816 = vmatpush1.bf16.xpose.msra.mxu0 0
        %2817 = vmatprep.subr.bf16.mxu0 0
        %2818 = vmatpush1.bf16.xpose.msra.mxu0 0
        %2819 = vmatprep.subr.bf16.mxu0 0
        %2820 = vmatpush1.bf16.xpose.msra.mxu0 0
        %2821 = vmatprep.mubr.bf16.mxu0 0
        %2822 = vmatmul.mubr.bf16.gmra.mrb[0].mxu0 %v2778
        %v2823 = vpop.f32.mrb[0].mxu0
        %v2824 = vadd.f32 %v556, %v2823
        %v2825 = vpop.f32.mrb[0].mxu0
        %v2826 = vpop.f32.mrb[0].mxu0
        %v2827 = vadd.f32 %v556, %v2826
        %v2828 = vpop.f32.mrb[0].mxu0
        %2829 = vmatprep.mubr.bf16.mxu0 0
        %2830 = vmatmul.mubr.bf16.gmra.mrb[0].mxu0 %v2781
        %v2831 = vpop.f32.mrb[0].mxu0
        %v2832 = vadd.f32 %v556, %v2831
        %v2833 = vpop.f32.mrb[0].mxu0
        %v2834 = vpop.f32.mrb[0].mxu0
        %v2835 = vadd.f32 %v556, %v2834
        %v2836 = vpop.f32.mrb[0].mxu0
        %2837 = vdwg.mxu0
        %v2838 = vsel %vm583, %v2824, -inf
        %2839 = vmax.xlane.f32.xlu0 %v2838
        %v2840 = vpop.xlane.xlu0 %2839
        %v2841 = vsel %vm583, %v2827, -inf
        %2842 = vmax.xlane.f32.xlu0 %v2841
        %v2843 = vpop.xlane.xlu0 %2842
        %v2844 = vsel %vm583, %v2832, -inf
        %2845 = vmax.xlane.f32.xlu0 %v2844
        %v2846 = vpop.xlane.xlu0 %2845
        %v2847 = vsel %vm583, %v2835, -inf
        %2848 = vmax.xlane.f32.xlu0 %v2847
        %v2849 = vpop.xlane.xlu0 %2848
        %v2850 = vsub.f32 %v2824, %v2840
        %v2851 = vsub.f32 %v2827, %v2843
        %v2852 = vsub.f32 %v2832, %v2846
        %v2853 = vsub.f32 %v2835, %v2849
        %v2854 = vmul.f32 %v2850, 1.442695
        %v2855 = vpow.pop %v2854
        %v2856 = vmul.f32 %v2851, 1.442695
        %v2857 = vpow.pop %v2856
        %v2858 = vmul.f32 %v2852, 1.442695
        %v2859 = vpow.pop %v2858
        %v2860 = vmul.f32 %v2853, 1.442695
        %v2861 = vpow.pop %v2860
        %v2862 = vsel %vm583, %v2855, 0.0
        %2863 = vadd.xlane.f32.xlu0 %v2862
        %v2864 = vpop.xlane.xlu0 %2863
        %v2865 = vsel %vm583, %v2857, 0.0
        %2866 = vadd.xlane.f32.xlu0 %v2865
        %v2867 = vpop.xlane.xlu0 %2866
        %v2868 = vsel %vm583, %v2859, 0.0
        %2869 = vadd.xlane.f32.xlu0 %v2868
        %v2870 = vpop.xlane.xlu0 %2869
        %v2871 = vsel %vm583, %v2861, 0.0
        %2872 = vadd.xlane.f32.xlu0 %v2871
        %v2873 = vpop.xlane.xlu0 %2872
        %v2874 = vrcp.pop %v2864
        %v2875 = vrcp.pop %v2867
        %v2876 = vrcp.pop %v2870
        %v2877 = vrcp.pop %v2873
        %v2878 = vmul.f32 %v2855, %v2874
        %v2879 = vmul.f32 %v2857, %v2875
        %v2880 = vmul.f32 %v2859, %v2876
        %v2881 = vmul.f32 %v2861, %v2877
        %v2882 = vpack.c.bf16 %v2879, %v2878
        %v2883 = vpack.c.bf16 %v2881, %v2880
        %2884 = vrot.lane.b32.xlu0 %v2052, 40
        %v2885 = vpop.permute.xlu0 %2884
        %2886 = vrot.lane.b32.xlu0 %v2053, 40
        %v2887 = vpop.permute.xlu0 %2886
        %v2891 = vsel %vm583, %v2882, 0
        %v2894 = vsel %vm583, %v2883, 0
        %2896 = vmatprep.subr.bf16.mxu0 0
        %2897 = vmatpush1.bf16.msra.mxu0 %v2885
        %2898 = vmatprep.subr.bf16.mxu0 0
        %2899 = vmatpush1.bf16.msra.mxu0 %v2887
        %2900 = vmatprep.subr.bf16.mxu0 0
        %2901 = vmatpush1.bf16.msra.mxu0 0
        %2902 = vmatprep.subr.bf16.mxu0 0
        %2903 = vmatpush1.bf16.msra.mxu0 0
        %2904 = vmatprep.subr.bf16.mxu0 0
        %2905 = vmatpush1.bf16.msra.mxu0 0
        %2906 = vmatprep.subr.bf16.mxu0 0
        %2907 = vmatpush1.bf16.msra.mxu0 0
        %2908 = vmatprep.subr.bf16.mxu0 0
        %2909 = vmatpush1.bf16.msra.mxu0 0
        %2910 = vmatprep.subr.bf16.mxu0 0
        %2911 = vmatpush1.bf16.msra.mxu0 0
        %2912 = vmatprep.subr.bf16.mxu0 0
        %2913 = vmatpush1.bf16.msra.mxu0 0
        %2914 = vmatprep.subr.bf16.mxu0 0
        %2915 = vmatpush1.bf16.msra.mxu0 0
        %2916 = vmatprep.subr.bf16.mxu0 0
        %2917 = vmatpush1.bf16.msra.mxu0 0
        %2918 = vmatprep.subr.bf16.mxu0 0
        %2919 = vmatpush1.bf16.msra.mxu0 0
        %2920 = vmatprep.subr.bf16.mxu0 0
        %2921 = vmatpush1.bf16.msra.mxu0 0
        %2922 = vmatprep.subr.bf16.mxu0 0
        %2923 = vmatpush1.bf16.msra.mxu0 0
        %2924 = vmatprep.subr.bf16.mxu0 0
        %2925 = vmatpush1.bf16.msra.mxu0 0
        %2926 = vmatprep.subr.bf16.mxu0 0
        %2927 = vmatpush1.bf16.msra.mxu0 0
        %2928 = vmatprep.mubr.bf16.mxu0 0
        %2929 = vmatmul.mubr.bf16.gmra.mrb[0].mxu0 %v2891
        %v2930 = vpop.f32.mrb[0].mxu0
        %v2931 = vadd.f32 0.0, %v2930
        %v2932 = vpop.f32.mrb[0].mxu0
        %v2933 = vpop.f32.mrb[0].mxu0
        %v2934 = vadd.f32 0.0, %v2933
        %v2935 = vpop.f32.mrb[0].mxu0
        %2936 = vmatprep.mubr.bf16.mxu0 0
        %2937 = vmatmul.mubr.bf16.gmra.mrb[0].mxu0 %v2894
        %v2938 = vpop.f32.mrb[0].mxu0
        %v2939 = vadd.f32 0.0, %v2938
        %v2940 = vpop.f32.mrb[0].mxu0
        %v2941 = vpop.f32.mrb[0].mxu0
        %v2942 = vadd.f32 0.0, %v2941
        %v2943 = vpop.f32.mrb[0].mxu0
        %2944 = vdwg.mxu0
        %v2945 = vpack.c.bf16 %v2934, %v2931
        %v2946 = vpack.c.bf16 %v2942, %v2939
        %v2948 = vsel %vm651, %v2945, 0
        %v2951 = vsel %vm651, %v2946, 0
        %v2954 = vsel %vm1006, %v2058, 0
        %2956 = vmatprep.subr.bf16.mxu0 0
        %2957 = vmatpush1.bf16.msra.mxu0 %v2954
        %2958 = vmatprep.subr.bf16.mxu0 0
        %2959 = vmatpush1.bf16.msra.mxu0 0
        %2960 = vmatprep.subr.bf16.mxu0 0
        %2961 = vmatpush1.bf16.msra.mxu0 0
        %2962 = vmatprep.subr.bf16.mxu0 0
        %2963 = vmatpush1.bf16.msra.mxu0 0
        %2964 = vmatprep.subr.bf16.mxu0 0
        %2965 = vmatpush1.bf16.msra.mxu0 0
        %2966 = vmatprep.subr.bf16.mxu0 0
        %2967 = vmatpush1.bf16.msra.mxu0 0
        %2968 = vmatprep.subr.bf16.mxu0 0
        %2969 = vmatpush1.bf16.msra.mxu0 0
        %2970 = vmatprep.subr.bf16.mxu0 0
        %2971 = vmatpush1.bf16.msra.mxu0 0
        %2972 = vmatprep.subr.bf16.mxu0 0
        %2973 = vmatpush1.bf16.msra.mxu0 0
        %2974 = vmatprep.subr.bf16.mxu0 0
        %2975 = vmatpush1.bf16.msra.mxu0 0
        %2976 = vmatprep.subr.bf16.mxu0 0
        %2977 = vmatpush1.bf16.msra.mxu0 0
        %2978 = vmatprep.subr.bf16.mxu0 0
        %2979 = vmatpush1.bf16.msra.mxu0 0
        %2980 = vmatprep.subr.bf16.mxu0 0
        %2981 = vmatpush1.bf16.msra.mxu0 0
        %2982 = vmatprep.subr.bf16.mxu0 0
        %2983 = vmatpush1.bf16.msra.mxu0 0
        %2984 = vmatprep.subr.bf16.mxu0 0
        %2985 = vmatpush1.bf16.msra.mxu0 0
        %2986 = vmatprep.subr.bf16.mxu0 0
        %2987 = vmatpush1.bf16.msra.mxu0 0
        %2988 = vmatprep.mubr.bf16.mxu0 0
        %2989 = vmatmul.mubr.bf16.gmra.mrb[0].mxu0 %v2948
        %v2990 = vpop.f32.mrb[0].mxu0
        %v2991 = vadd.f32 0.0, %v2990
        %v2992 = vpop.f32.mrb[0].mxu0
        %v2993 = vpop.f32.mrb[0].mxu0
        %v2994 = vadd.f32 0.0, %v2993
        %v2995 = vpop.f32.mrb[0].mxu0
        %2996 = vmatprep.mubr.bf16.mxu0 0
        %2997 = vmatmul.mubr.bf16.gmra.mrb[0].mxu0 %v2951
        %v2998 = vpop.f32.mrb[0].mxu0
        %v2999 = vadd.f32 0.0, %v2998
        %v3000 = vpop.f32.mrb[0].mxu0
        %v3001 = vpop.f32.mrb[0].mxu0
        %v3002 = vadd.f32 0.0, %v3001
        %v3003 = vpop.f32.mrb[0].mxu0
        %3004 = vdwg.mxu0
        %v3005 = vadd.f32 %v2765, %v2991
        %v3006 = vadd.f32 %v2766, %v2994
        %v3007 = vadd.f32 %v2767, %v2999
        %v3008 = vadd.f32 %v2768, %v3002
        %s3009 = scalar_lea.vmem %s6, 1
        %v3010 = vld [vmem:[%s3009] sm:$0x1]
        %v3012 = vlaneseq
        %v3013 = vshrl.u32 %v3012, 7
        %v3014 = vsub.s32 0, %v3013
        %v3015 = vrot.slane %v3010, %v3014
        %v3017 = vadd.f32 %v3005, %v3015
        %v3018 = vadd.f32 %v3006, %v3015
        %v3019 = vadd.f32 %v3007, %v3015
        %v3020 = vadd.f32 %v3008, %v3015
        %v3021 = vadd.f32 %v1966, %v3017
        %v3022 = vadd.f32 %v1967, %v3018
        %v3023 = vadd.f32 %v1968, %v3019
        %v3024 = vadd.f32 %v1969, %v3020
        %s3025 = scalar_lea.vmem %s11, 1
        %v3026 = vld [vmem:[%s3025] sm:$0x1]
        %s3027 = scalar_lea.vmem %s12, 1
        %v3028 = vld [vmem:[%s3027] sm:$0x1]
        %v3029 = vsel %vm583, %v3021, 0.0
        %3030 = vadd.xlane.f32.xlu0 %v3029
        %v3031 = vpop.xlane.xlu0 %3030
        %v3032 = vsel %vm583, %v3022, 0.0
        %3033 = vadd.xlane.f32.xlu0 %v3032
        %v3034 = vpop.xlane.xlu0 %3033
        %v3035 = vsel %vm583, %v3023, 0.0
        %3036 = vadd.xlane.f32.xlu0 %v3035
        %v3037 = vpop.xlane.xlu0 %3036
        %v3038 = vsel %vm583, %v3024, 0.0
        %3039 = vadd.xlane.f32.xlu0 %v3038
        %v3040 = vpop.xlane.xlu0 %3039
        %v3041 = vmul.f32 %v3031, %v1626
        %v3042 = vmul.f32 %v3034, %v1626
        %v3043 = vmul.f32 %v3037, %v1626
        %v3044 = vmul.f32 %v3040, %v1626
        %v3045 = vmul.f32 %v3021, %v3021
        %v3046 = vmul.f32 %v3022, %v3022
        %v3047 = vmul.f32 %v3023, %v3023
        %v3048 = vmul.f32 %v3024, %v3024
        %v3049 = vsel %vm583, %v3045, 0.0
        %3050 = vadd.xlane.f32.xlu0 %v3049
        %v3051 = vpop.xlane.xlu0 %3050
        %v3052 = vsel %vm583, %v3046, 0.0
        %3053 = vadd.xlane.f32.xlu0 %v3052
        %v3054 = vpop.xlane.xlu0 %3053
        %v3055 = vsel %vm583, %v3047, 0.0
        %3056 = vadd.xlane.f32.xlu0 %v3055
        %v3057 = vpop.xlane.xlu0 %3056
        %v3058 = vsel %vm583, %v3048, 0.0
        %3059 = vadd.xlane.f32.xlu0 %v3058
        %v3060 = vpop.xlane.xlu0 %3059
        %v3061 = vmul.f32 %v3051, %v1626
        %v3062 = vmul.f32 %v3054, %v1626
        %v3063 = vmul.f32 %v3057, %v1626
        %v3064 = vmul.f32 %v3060, %v1626
        %v3065 = vmul.f32 %v3041, %v3041
        %v3066 = vmul.f32 %v3042, %v3042
        %v3067 = vmul.f32 %v3043, %v3043
        %v3068 = vmul.f32 %v3044, %v3044
        %v3069 = vsub.f32 %v3061, %v3065
        %v3070 = vsub.f32 %v3062, %v3066
        %v3071 = vsub.f32 %v3063, %v3067
        %v3072 = vsub.f32 %v3064, %v3068
        %v3073 = vmax.f32 %v3069, 0.0
        %v3074 = vmax.f32 %v3070, 0.0
        %v3075 = vmax.f32 %v3071, 0.0
        %v3076 = vmax.f32 %v3072, 0.0
        %v3077 = vsub.f32 %v3021, %v3041
        %v3078 = vsub.f32 %v3022, %v3042
        %v3079 = vsub.f32 %v3023, %v3043
        %v3080 = vsub.f32 %v3024, %v3044
        %v3081 = vadd.f32 %v3073, 1e-05
        %v3082 = vadd.f32 %v3074, 1e-05
        %v3083 = vadd.f32 %v3075, 1e-05
        %v3084 = vadd.f32 %v3076, 1e-05
        %v3085 = vrsqrt.pop %v3081
        %v3086 = vrsqrt.pop %v3082
        %v3087 = vrsqrt.pop %v3083
        %v3088 = vrsqrt.pop %v3084
        %v3089 = vmul.f32 %v3077, %v3085
        %v3090 = vmul.f32 %v3078, %v3086
        %v3091 = vmul.f32 %v3079, %v3087
        %v3092 = vmul.f32 %v3080, %v3088
        %v3094 = vlaneseq
        %v3095 = vshrl.u32 %v3094, 7
        %v3096 = vsub.s32 0, %v3095
        %v3097 = vrot.slane %v3026, %v3096
        %v3099 = vmul.f32 %v3089, %v3097
        %v3100 = vmul.f32 %v3090, %v3097
        %v3101 = vmul.f32 %v3091, %v3097
        %v3102 = vmul.f32 %v3092, %v3097
        %v3104 = vlaneseq
        %v3105 = vshrl.u32 %v3104, 7
        %v3106 = vsub.s32 0, %v3105
        %v3107 = vrot.slane %v3028, %v3106
        %v3109 = vadd.f32 %v3099, %v3107
        %v3110 = vadd.f32 %v3100, %v3107
        %v3111 = vadd.f32 %v3101, %v3107
        %v3112 = vadd.f32 %v3102, %v3107
        %v3113 = vpack.c.bf16 %v3110, %v3109
        %v3114 = vpack.c.bf16 %v3112, %v3111
        %s3115 = scalar_lea.vmem [#allocation2], 16
        %v3116 = vld [vmem:[%s3115] sm:$0xf]
        %v3117 = vld [vmem:[%s3115 + $0x4] sm:$0xf]
        %v3118 = vld [vmem:[%s3115 + $0x8] sm:$0xf]
        %v3119 = vld [vmem:[%s3115 + $0xc] sm:$0xf]
        %s3120 = scalar_lea.vmem %s8, 1
        %v3121 = vld [vmem:[%s3120] sm:$0x1]
        %v3123 = vlaneseq
        %v3124 = vshrl.u32 %v3123, 7
        %v3125 = vsub.s32 0, %v3124
        %v3126 = vrot.slane %v3121, %v3125
        %v3132 = vunpack.c.l.b16 %v3116
        %v3133 = vunpack.c.l.b16 %v3117
        %v3134 = vunpack.c.l.b16 %v3118
        %v3135 = vunpack.c.l.b16 %v3119
        %v3136 = vpack.c.b16 %v3133, %v3132
        %v3137 = vpack.c.b16 %v3135, %v3134
        %v3141 = vsel %vm583, %v3113, 0
        %v3144 = vsel %vm583, %v3114, 0
        %3146 = vmatprep.subr.bf16.mxu0 0
        %3147 = vmatpush1.bf16.msra.mxu0 %v3136
        %3148 = vmatprep.subr.bf16.mxu0 0
        %3149 = vmatpush1.bf16.msra.mxu0 %v3137
        %3150 = vmatprep.subr.bf16.mxu0 0
        %3151 = vmatpush1.bf16.msra.mxu0 0
        %3152 = vmatprep.subr.bf16.mxu0 0
        %3153 = vmatpush1.bf16.msra.mxu0 0
        %3154 = vmatprep.subr.bf16.mxu0 0
        %3155 = vmatpush1.bf16.msra.mxu0 0
        %3156 = vmatprep.subr.bf16.mxu0 0
        %3157 = vmatpush1.bf16.msra.mxu0 0
        %3158 = vmatprep.subr.bf16.mxu0 0
        %3159 = vmatpush1.bf16.msra.mxu0 0
        %3160 = vmatprep.subr.bf16.mxu0 0
        %3161 = vmatpush1.bf16.msra.mxu0 0
        %3162 = vmatprep.subr.bf16.mxu0 0
        %3163 = vmatpush1.bf16.msra.mxu0 0
        %3164 = vmatprep.subr.bf16.mxu0 0
        %3165 = vmatpush1.bf16.msra.mxu0 0
        %3166 = vmatprep.subr.bf16.mxu0 0
        %3167 = vmatpush1.bf16.msra.mxu0 0
        %3168 = vmatprep.subr.bf16.mxu0 0
        %3169 = vmatpush1.bf16.msra.mxu0 0
        %3170 = vmatprep.subr.bf16.mxu0 0
        %3171 = vmatpush1.bf16.msra.mxu0 0
        %3172 = vmatprep.subr.bf16.mxu0 0
        %3173 = vmatpush1.bf16.msra.mxu0 0
        %3174 = vmatprep.subr.bf16.mxu0 0
        %3175 = vmatpush1.bf16.msra.mxu0 0
        %3176 = vmatprep.subr.bf16.mxu0 0
        %3177 = vmatpush1.bf16.msra.mxu0 0
        %3178 = vmatprep.mubr.bf16.mxu0 0
        %3179 = vmatmul.mubr.bf16.gmra.mrb[0].mxu0 %v3141
        %v3180 = vpop.f32.mrb[0].mxu0
        %v3181 = vadd.f32 %v3126, %v3180
        %v3182 = vpop.f32.mrb[0].mxu0
        %v3183 = vpop.f32.mrb[0].mxu0
        %v3184 = vadd.f32 %v3126, %v3183
        %v3185 = vpop.f32.mrb[0].mxu0
        %3186 = vmatprep.mubr.bf16.mxu0 0
        %3187 = vmatmul.mubr.bf16.gmra.mrb[0].mxu0 %v3144
        %v3188 = vpop.f32.mrb[0].mxu0
        %v3189 = vadd.f32 %v3126, %v3188
        %v3190 = vpop.f32.mrb[0].mxu0
        %v3191 = vpop.f32.mrb[0].mxu0
        %v3192 = vadd.f32 %v3126, %v3191
        %v3193 = vpop.f32.mrb[0].mxu0
        %3194 = vdwg.mxu0
        %v3195 = vmax.f32 %v3181, 0.0
        %v3196 = vmax.f32 %v3184, 0.0
        %v3197 = vmax.f32 %v3189, 0.0
        %v3198 = vmax.f32 %v3192, 0.0
        %v3199 = vpack.c.bf16 %v3196, %v3195
        %v3200 = vpack.c.bf16 %v3198, %v3197
        %s3201 = scalar_lea.vmem %s9, 32
        %v3202 = vld [vmem:[%s3201] sm:$0xf]
        %v3203 = vld [vmem:[%s3201 + $0x4] sm:$0xf]
        %v3204 = vld [vmem:[%s3201 + $0x8] sm:$0xf]
        %v3205 = vld [vmem:[%s3201 + $0xc] sm:$0xf]
        %v3206 = vld [vmem:[%s3201 + $0x10] sm:$0xf]
        %v3207 = vld [vmem:[%s3201 + $0x14] sm:$0xf]
        %v3208 = vld [vmem:[%s3201 + $0x18] sm:$0xf]
        %v3209 = vld [vmem:[%s3201 + $0x1c] sm:$0xf]
        %s3210 = scalar_lea.vmem %s10, 1
        %v3211 = vld [vmem:[%s3210] sm:$0x1]
        %v3213 = vlaneseq
        %v3214 = vshrl.u32 %v3213, 7
        %v3215 = vsub.s32 0, %v3214
        %v3216 = vrot.slane %v3211, %v3215
        %v3226 = vunpack.c.l.b16 %v3202
        %v3227 = vunpack.c.l.b16 %v3203
        %v3228 = vunpack.c.l.b16 %v3204
        %v3229 = vunpack.c.l.b16 %v3205
        %v3230 = vunpack.c.l.b16 %v3206
        %v3231 = vunpack.c.l.b16 %v3207
        %v3232 = vunpack.c.l.b16 %v3208
        %v3233 = vunpack.c.l.b16 %v3209
        %v3234 = vpack.c.b16 %v3227, %v3226
        %v3235 = vpack.c.b16 %v3229, %v3228
        %v3236 = vpack.c.b16 %v3231, %v3230
        %v3237 = vpack.c.b16 %v3233, %v3232
        %v3243 = vsel %vm1824, %v3199, 0
        %v3246 = vsel %vm1824, %v3200, 0
        %3248 = vmatprep.subr.bf16.mxu0 0
        %3249 = vmatpush1.bf16.msra.mxu0 %v3234
        %3250 = vmatprep.subr.bf16.mxu0 0
        %3251 = vmatpush1.bf16.msra.mxu0 %v3235
        %3252 = vmatprep.subr.bf16.mxu0 0
        %3253 = vmatpush1.bf16.msra.mxu0 %v3236
        %3254 = vmatprep.subr.bf16.mxu0 0
        %3255 = vmatpush1.bf16.msra.mxu0 %v3237
        %3256 = vmatprep.subr.bf16.mxu0 0
        %3257 = vmatpush1.bf16.msra.mxu0 0
        %3258 = vmatprep.subr.bf16.mxu0 0
        %3259 = vmatpush1.bf16.msra.mxu0 0
        %3260 = vmatprep.subr.bf16.mxu0 0
        %3261 = vmatpush1.bf16.msra.mxu0 0
        %3262 = vmatprep.subr.bf16.mxu0 0
        %3263 = vmatpush1.bf16.msra.mxu0 0
        %3264 = vmatprep.subr.bf16.mxu0 0
        %3265 = vmatpush1.bf16.msra.mxu0 0
        %3266 = vmatprep.subr.bf16.mxu0 0
        %3267 = vmatpush1.bf16.msra.mxu0 0
        %3268 = vmatprep.subr.bf16.mxu0 0
        %3269 = vmatpush1.bf16.msra.mxu0 0
        %3270 = vmatprep.subr.bf16.mxu0 0
        %3271 = vmatpush1.bf16.msra.mxu0 0
        %3272 = vmatprep.subr.bf16.mxu0 0
        %3273 = vmatpush1.bf16.msra.mxu0 0
        %3274 = vmatprep.subr.bf16.mxu0 0
        %3275 = vmatpush1.bf16.msra.mxu0 0
        %3276 = vmatprep.subr.bf16.mxu0 0
        %3277 = vmatpush1.bf16.msra.mxu0 0
        %3278 = vmatprep.subr.bf16.mxu0 0
        %3279 = vmatpush1.bf16.msra.mxu0 0
        %3280 = vmatprep.mubr.bf16.mxu0 0
        %3281 = vmatmul.mubr.bf16.gmra.mrb[0].mxu0 %v3243
        %v3282 = vpop.f32.mrb[0].mxu0
        %v3283 = vadd.f32 %v3216, %v3282
        %v3284 = vpop.f32.mrb[0].mxu0
        %v3285 = vpop.f32.mrb[0].mxu0
        %v3286 = vadd.f32 %v3216, %v3285
        %v3287 = vpop.f32.mrb[0].mxu0
        %3288 = vmatprep.mubr.bf16.mxu0 0
        %3289 = vmatmul.mubr.bf16.gmra.mrb[0].mxu0 %v3246
        %v3290 = vpop.f32.mrb[0].mxu0
        %v3291 = vadd.f32 %v3216, %v3290
        %v3292 = vpop.f32.mrb[0].mxu0
        %v3293 = vpop.f32.mrb[0].mxu0
        %v3294 = vadd.f32 %v3216, %v3293
        %v3295 = vpop.f32.mrb[0].mxu0
        %3296 = vdwg.mxu0
        %v3297 = vadd.f32 %v3109, %v3283
        %v3298 = vadd.f32 %v3110, %v3286
        %v3299 = vadd.f32 %v3111, %v3291
        %v3300 = vadd.f32 %v3112, %v3294
        %s3301 = scalar_lea.vmem %s13, 1
        %v3302 = vld [vmem:[%s3301] sm:$0x1]
        %s3303 = scalar_lea.vmem %s14, 1
        %v3304 = vld [vmem:[%s3303] sm:$0x1]
        %v3305 = vsel %vm583, %v3297, 0.0
        %3306 = vadd.xlane.f32.xlu0 %v3305
        %v3307 = vpop.xlane.xlu0 %3306
        %v3308 = vsel %vm583, %v3298, 0.0
        %3309 = vadd.xlane.f32.xlu0 %v3308
        %v3310 = vpop.xlane.xlu0 %3309
        %v3311 = vsel %vm583, %v3299, 0.0
        %3312 = vadd.xlane.f32.xlu0 %v3311
        %v3313 = vpop.xlane.xlu0 %3312
        %v3314 = vsel %vm583, %v3300, 0.0
        %3315 = vadd.xlane.f32.xlu0 %v3314
        %v3316 = vpop.xlane.xlu0 %3315
        %v3317 = vmul.f32 %v3307, %v1626
        %v3318 = vmul.f32 %v3310, %v1626
        %v3319 = vmul.f32 %v3313, %v1626
        %v3320 = vmul.f32 %v3316, %v1626
        %v3321 = vmul.f32 %v3297, %v3297
        %v3322 = vmul.f32 %v3298, %v3298
        %v3323 = vmul.f32 %v3299, %v3299
        %v3324 = vmul.f32 %v3300, %v3300
        %v3325 = vsel %vm583, %v3321, 0.0
        %3326 = vadd.xlane.f32.xlu0 %v3325
        %v3327 = vpop.xlane.xlu0 %3326
        %v3328 = vsel %vm583, %v3322, 0.0
        %3329 = vadd.xlane.f32.xlu0 %v3328
        %v3330 = vpop.xlane.xlu0 %3329
        %v3331 = vsel %vm583, %v3323, 0.0
        %3332 = vadd.xlane.f32.xlu0 %v3331
        %v3333 = vpop.xlane.xlu0 %3332
        %v3334 = vsel %vm583, %v3324, 0.0
        %3335 = vadd.xlane.f32.xlu0 %v3334
        %v3336 = vpop.xlane.xlu0 %3335
        %v3337 = vmul.f32 %v3327, %v1626
        %v3338 = vmul.f32 %v3330, %v1626
        %v3339 = vmul.f32 %v3333, %v1626
        %v3340 = vmul.f32 %v3336, %v1626
        %v3341 = vmul.f32 %v3317, %v3317
        %v3342 = vmul.f32 %v3318, %v3318
        %v3343 = vmul.f32 %v3319, %v3319
        %v3344 = vmul.f32 %v3320, %v3320
        %v3345 = vsub.f32 %v3337, %v3341
        %v3346 = vsub.f32 %v3338, %v3342
        %v3347 = vsub.f32 %v3339, %v3343
        %v3348 = vsub.f32 %v3340, %v3344
        %v3349 = vmax.f32 %v3345, 0.0
        %v3350 = vmax.f32 %v3346, 0.0
        %v3351 = vmax.f32 %v3347, 0.0
        %v3352 = vmax.f32 %v3348, 0.0
        %v3353 = vsub.f32 %v3297, %v3317
        %v3354 = vsub.f32 %v3298, %v3318
        %v3355 = vsub.f32 %v3299, %v3319
        %v3356 = vsub.f32 %v3300, %v3320
        %v3357 = vadd.f32 %v3349, 1e-05
        %v3358 = vadd.f32 %v3350, 1e-05
        %v3359 = vadd.f32 %v3351, 1e-05
        %v3360 = vadd.f32 %v3352, 1e-05
        %v3361 = vrsqrt.pop %v3357
        %v3362 = vrsqrt.pop %v3358
        %v3363 = vrsqrt.pop %v3359
        %v3364 = vrsqrt.pop %v3360
        %v3365 = vmul.f32 %v3353, %v3361
        %v3366 = vmul.f32 %v3354, %v3362
        %v3367 = vmul.f32 %v3355, %v3363
        %v3368 = vmul.f32 %v3356, %v3364
        %v3370 = vlaneseq
        %v3371 = vshrl.u32 %v3370, 7
        %v3372 = vsub.s32 0, %v3371
        %v3373 = vrot.slane %v3302, %v3372
        %v3375 = vmul.f32 %v3365, %v3373
        %v3376 = vmul.f32 %v3366, %v3373
        %v3377 = vmul.f32 %v3367, %v3373
        %v3378 = vmul.f32 %v3368, %v3373
        %v3380 = vlaneseq
        %v3381 = vshrl.u32 %v3380, 7
        %v3382 = vsub.s32 0, %v3381
        %v3383 = vrot.slane %v3304, %v3382
        %v3385 = vadd.f32 %v3375, %v3383
        %v3386 = vadd.f32 %v3376, %v3383
        %v3387 = vadd.f32 %v3377, %v3383
        %v3388 = vadd.f32 %v3378, %v3383
        %3390 = vset.pattern.permute.xlu0 0
        %3391 = vperm.xlu0 %3390, %v548
        %v3392 = vpop.permute.xlu0 %3391
        %3395 = vset.pattern.permute.xlu0 0
        %3396 = vperm.xlu0 %3395, %v549
        %v3397 = vpop.permute.xlu0 %3396
        %3400 = vset.pattern.permute.xlu0 0
        %3401 = vperm.xlu0 %3400, %v550
        %v3402 = vpop.permute.xlu0 %3401
        %3405 = vset.pattern.permute.xlu0 0
        %3406 = vperm.xlu0 %3405, %v551
        %v3407 = vpop.permute.xlu0 %3406
        %v3409 = vmul.f32 %v3385, %v3392
        %v3410 = vmul.f32 %v3386, %v3397
        %v3411 = vmul.f32 %v3387, %v3402
        %v3412 = vmul.f32 %v3388, %v3407
        %3413 = vst.msk [vmem:[%s528] sm:$0xff] %vm583, %v3409
        %3414 = vst.msk [vmem:[%s528 + $0x8] sm:$0xff] %vm583, %v3410
        %3415 = vst.msk [vmem:[%s528 + $0x10] sm:$0xff] %vm583, %v3411
        %3416 = vst.msk [vmem:[%s528 + $0x18] sm:$0xff] %vm583, %v3412
        %s3417 = sand.u32 %s368, 1
        %s3418 = scalar_lea.sflag [#allocation4], %s3417
        %s3419 = sand.u32 %s368, 1
        %s3420 = smul.addr %s3419, 32
        %s3421 = scalar_lea.vmem [#allocation5], %s3420
        // Predicated region
        $region85: #{tpu_custom_call.1} parent=79 // pred_check
          %p3422 = pneg %p378
        $region86: #{tpu_custom_call.1} parent=79 // pred_check_branch
          %3424 = sbr.rel (%p3422) target = $region88
        $region87: #{tpu_custom_call.1} parent=79 // pred_region
          %s3426 = ssub.s32 512, 512
          %3427 = vsyncadd %s3418, %s3426
          %s3428 = smul.addr %s30, 4
          %s3429 = smul.addr %s3428, 128
          %s3430 = scalar_lea.hbm %s15, %s3429
          %s3431 = sshll.u32 %s3421, 4
          %s3432 = int_to_ptr.vmem [resolvable:$true] %s3431
          %3437 = dma.vmem_to_hbm [thread:$0]  %s3432, 512, %s3430, %s3418, 128, 128, 8
        $region88: #{tpu_custom_call.1} parent=79 // pred_fallthru
          _
      $region80: #{tpu_custom_call.1} parent=5 // pred_fallthru
        _
      %p3438 = scmp.le.s32.totalorder 2, %s25
      // Predicated region
      $region89: #{tpu_custom_call.1} parent=5 // pred_check
        %p3439 = pneg %p3438
      $region90: #{tpu_custom_call.1} parent=5 // pred_check_branch
        %3441 = sbr.rel (%p3439) target = $region92
      $region91: #{tpu_custom_call.1} parent=5 // pred_region
        %s3442 = ssub.s32 %s25, 2
        // Predicated region
        $region93: #{tpu_custom_call.1} parent=91 // pred_check
          %p3443 = pneg %p384
        $region94: #{tpu_custom_call.1} parent=91 // pred_check_branch
          %3445 = sbr.rel (%p3443) target = $region96
        $region95: #{tpu_custom_call.1} parent=91 // pred_region
          %s3446 = sand.u32 %s369, 1
          %s3447 = scalar_lea.sflag [#allocation4], %s3446
          %s3448 = sand.u32 %s369, 1
          %s3449 = smul.addr %s3448, 32
          %s3450 = scalar_lea.vmem [#allocation5], %s3449
          %3451 = dma.done %s3447, 512
        $region96: #{tpu_custom_call.1} parent=91 // pred_fallthru
          _
      $region92: #{tpu_custom_call.1} parent=5 // pred_fallthru
        _
    $region6: #{tpu_custom_call.1} parent=1 // loop_footer
      %s29 = sadd.s32 1, %s25
    $region7: #{tpu_custom_call.1} parent=1 // loop_footer_branch
      %24 = sbr.rel target = $region3
    $region8: #{tpu_custom_call.1} parent=1 // loop_exit
      _
    %3452 = vsyncpa [#allocation3], 1
    %s3453 = scalar_lea.sflag [#allocation3], 1
    %3454 = vsyncpa %s3453, 1
    %3455 = vsyncpa [#allocation4], 1
    %s3456 = scalar_lea.sflag [#allocation4], 1
    %3457 = vsyncpa %s3456, 1

</llo_original>
